<compile_context>
chip_gen: v6e
topology: v6e:2x2x1
jax: 0.10.0
libtpu: 0.0.40
codegen_flags: <defaults>
</compile_context>

<pallas_src>
import functools
import math

import jax
import jax.numpy as jnp
import numpy as np
from jax.experimental import pallas as pl
from jax.experimental.pallas import tpu as pltpu


_MASK_BIAS = -1e9            # large *finite* bias: exp underflows to exactly 0,
                             # and the final pi*C never produces 0*inf.
_ROW_TILE = 256              # sublane-aligned row tile (also the row bucket)
_COL_BUCKET = 512            # lane-aligned column bucket
_BF16_BYTES_THRESHOLD = 8 * 1024 * 1024   # store Ce in bf16 above this size


def _round_up(x, m):
    return ((x + m - 1) // m) * m


def _vmem_limit_bytes(tile_rows, mp, ce_elt_bytes):
    """Scoped-VMEM budget: double-buffered Ce tile + f32 exp temporaries."""
    ce_block = tile_rows * mp * ce_elt_bytes
    f32_block = tile_rows * mp * 4
    need = 2 * ce_block + 6 * f32_block + 8 * mp * 4 + (2 << 20)
    # Floor at 32 MiB (so the 16 MiB default on v5e never bites), cap at v7x's
    # 64 MiB physical VMEM.
    return int(max(32 << 20, min(64 << 20, need)))


# ---------------- Pallas kernel 1: pairwise Euclidean cost (row-tiled) --------
def _cost_kernel(sx_ref, sy_ref, tx_ref, ty_ref, o_ref, *, inv_norm):
    dx = sx_ref[...] - tx_ref[...]          # (TR,1) - (1,Mp) -> (TR,Mp)
    dy = sy_ref[...] - ty_ref[...]
    o_ref[...] = jnp.sqrt(dx * dx + dy * dy) * inv_norm


def _cost_matrix(src_pad, tgt_pad, inv_norm, tr):
    np_, mp_ = src_pad.shape[0], tgt_pad.shape[0]
    sx = src_pad[:, 0:1]                    # (Np, 1)
    sy = src_pad[:, 1:2]
    tx = tgt_pad[:, 0:1].T                  # (1, Mp)
    ty = tgt_pad[:, 1:2].T
    return pl.pallas_call(
        functools.partial(_cost_kernel, inv_norm=float(inv_norm)),
        out_shape=jax.ShapeDtypeStruct((np_, mp_), jnp.float32),
        grid_spec=pltpu.PrefetchScalarGridSpec(
            num_scalar_prefetch=0,
            grid=(np_ // tr,),
            in_specs=[pl.BlockSpec((tr, 1), lambda r: (r, 0)),
                      pl.BlockSpec((tr, 1), lambda r: (r, 0)),
                      pl.BlockSpec((1, mp_), lambda r: (0, 0)),
                      pl.BlockSpec((1, mp_), lambda r: (0, 0))],
            out_specs=pl.BlockSpec((tr, mp_), lambda r: (r, 0))),
        compiler_params=pltpu.CompilerParams(
            dimension_semantics=("parallel",),
            vmem_limit_bytes=_vmem_limit_bytes(tr, mp_, 4)),
    )(sx, sy, tx, ty)


# ---------------- Pallas kernel 2: one masked log-domain Sinkhorn iteration ---
def _sinkhorn_iter_kernel(ce_ref, logmu_ref, lognu_ref, u_ref, v_ref,
                          u_out_ref, v_out_ref, err_out_ref,
                          col_acc, err_acc, *, eps):
    r = pl.program_id(0)
    inv_eps = 1.0 / eps

    @pl.when(r == 0)
    def _():
        col_acc[...] = jnp.zeros_like(col_acc)
        err_acc[...] = jnp.zeros_like(err_acc)

    ce = ce_ref[...].astype(jnp.float32)            # (TR, Mp); bf16 storage ok
    u = u_ref[...]                                  # (TR, 1)  f32
    ve = v_ref[...] * inv_eps                       # (1, Mp)

    # u-update for this row tile (mask + 1/eps already folded into ce).
    p = jnp.exp(ce + u * inv_eps + ve)              # the ONLY full-tile exp
    row_sum = jnp.sum(p, axis=1, keepdims=True)     # (TR, 1)
    du = eps * (logmu_ref[...] - jnp.log(1e-8 + row_sum))   # (TR, 1)
    u_new = u + du
    u_out_ref[...] = u_new

    # Column sums with the updated u (second exp pass of the reference):
    #   exp(Ce + u_new/eps + v/eps) == P * exp(du/eps)
    # so we rescale P with a per-row factor ((TR,1) exp + broadcast multiply)
    # instead of re-exponentiating the whole (TR, Mp) tile -- ~2x less EUP work
    # per iteration; masked entries keep P == 0 exactly, so this is exact.
    p2 = p * jnp.exp(du * inv_eps)
    col_acc[...] += jnp.sum(p2, axis=0, keepdims=True)                 # (1,Mp)
    err_acc[...] += jnp.sum(jnp.abs(du), axis=0, keepdims=True)        # (1,1)

    @pl.when(r == pl.num_programs(0) - 1)
    def _():
        v_out_ref[...] = eps * (lognu_ref[...]
                                - jnp.log(1e-8 + col_acc[...])) + v_ref[...]
        err_out_ref[...] = err_acc[...]


# ---------------- Pallas kernel 3: final transport cost sum(pi * C) -----------
def _transport_cost_kernel(ce_ref, u_ref, v_ref, o_ref, acc, *, eps):
    r = pl.program_id(0)

    @pl.when(r == 0)
    def _():
        acc[...] = jnp.zeros_like(acc)

    ce = ce_ref[...].astype(jnp.float32)
    inv_eps = 1.0 / eps
    pi = jnp.exp(ce + u_ref[...] * inv_eps + v_ref[...] * inv_eps)
    # C is recovered as -eps*Ce; at masked entries pi == 0 exactly (finite bias
    # -> exp underflow), so the bias contributes nothing to the sum.
    contrib = jnp.sum(pi * (-eps) * ce, axis=1, keepdims=True)   # (TR, 1)
    acc[...] += jnp.sum(contrib, axis=0, keepdims=True)          # (1, 1)

    @pl.when(r == pl.num_programs(0) - 1)
    def _():
        o_ref[...] = acc[...]


def _sinkhorn_distance(ce, log_mu, log_nu, eps, thresh, max_iter, tr):
    np_, mp_ = ce.shape
    grid = (np_ // tr,)
    vmem_limit = _vmem_limit_bytes(tr, mp_, ce.dtype.itemsize)

    iter_call = pl.pallas_call(
        functools.partial(_sinkhorn_iter_kernel, eps=float(eps)),
        out_shape=(jax.ShapeDtypeStruct((np_, 1), jnp.float32),
                   jax.ShapeDtypeStruct((1, mp_), jnp.float32),
                   jax.ShapeDtypeStruct((1, 1), jnp.float32)),
        grid_spec=pltpu.PrefetchScalarGridSpec(
            num_scalar_prefetch=0,
            grid=grid,
            in_specs=[pl.BlockSpec((tr, mp_), lambda r: (r, 0)),
                      pl.BlockSpec((tr, 1), lambda r: (r, 0)),
                      pl.BlockSpec((1, mp_), lambda r: (0, 0)),
                      pl.BlockSpec((tr, 1), lambda r: (r, 0)),
                      pl.BlockSpec((1, mp_), lambda r: (0, 0))],
            out_specs=[pl.BlockSpec((tr, 1), lambda r: (r, 0)),
                       pl.BlockSpec((1, mp_), lambda r: (0, 0)),
                       pl.BlockSpec((1, 1), lambda r: (0, 0))],
            scratch_shapes=[pltpu.VMEM((1, mp_), jnp.float32),
                            pltpu.VMEM((1, 1), jnp.float32)]),
        compiler_params=pltpu.CompilerParams(
            dimension_semantics=("arbitrary",),
            vmem_limit_bytes=vmem_limit),
    )

    cost_call = pl.pallas_call(
        functools.partial(_transport_cost_kernel, eps=float(eps)),
        out_shape=jax.ShapeDtypeStruct((1, 1), jnp.float32),
        grid_spec=pltpu.PrefetchScalarGridSpec(
            num_scalar_prefetch=0,
            grid=grid,
            in_specs=[pl.BlockSpec((tr, mp_), lambda r: (r, 0)),
                      pl.BlockSpec((tr, 1), lambda r: (r, 0)),
                      pl.BlockSpec((1, mp_), lambda r: (0, 0))],
            out_specs=pl.BlockSpec((1, 1), lambda r: (0, 0)),
            scratch_shapes=[pltpu.VMEM((1, 1), jnp.float32)]),
        compiler_params=pltpu.CompilerParams(
            dimension_semantics=("arbitrary",),
            vmem_limit_bytes=vmem_limit),
    )

    # True early exit: the reference breaks as soon as sum|u - u1| < thresh
    # after an iteration; the while_loop reproduces that exactly.
    def cond(carry):
        it, _, _, err = carry
        return jnp.logical_and(it < max_iter, err[0, 0] >= thresh)

    def body(carry):
        it, u, v, _ = carry
        u_new, v_new, err = iter_call(ce, log_mu, log_nu, u, v)
        return (it + jnp.int32(1), u_new, v_new, err)

    init = (jnp.int32(0),
            jnp.zeros((np_, 1), jnp.float32),
            jnp.zeros((1, mp_), jnp.float32),
            jnp.full((1, 1), jnp.inf, jnp.float32))
    _, u, v, _ = jax.lax.while_loop(cond, body, init)
    return cost_call(ce, u, v)[0, 0]


# -------------------------- JAX glue (mask, marginals) ------------------------
def _knn_mask(cost, valid_row, valid_col, num_neighbors=24):
    """Reference get_mask_matrix on padded shapes: row-wise k smallest OR
    column-wise k largest (as literally written in the PyTorch code), with
    padded rows/cols excluded."""
    np_, mp_ = cost.shape
    k = min(num_neighbors, np_, mp_)
    vr = valid_row[:, None]
    vc = valid_col[None, :]
    big = jnp.float32(1e9)
    c_rows = jnp.where(vc, cost, big)                # pad cols never "smallest"
    _, idx1 = jax.lax.top_k(-c_rows, k)
    m1 = jnp.zeros((np_, mp_), jnp.float32).at[
        jnp.arange(np_)[:, None], idx1].set(1.0)
    c_cols = jnp.where(vr, cost, -big)               # pad rows never "largest"
    _, idx0 = jax.lax.top_k(c_cols.T, k)
    m0 = jnp.zeros((mp_, np_), jnp.float32).at[
        jnp.arange(mp_)[:, None], idx0].set(1.0).T
    return ((m1 + m0) > 0) & vr & vc


@functools.partial(
    jax.jit,
    static_argnames=("eps", "thresh", "max_iter", "inv_norm", "use_bf16"))
def _gwd_item(src_pad, tgt_pad, n, m, *, eps, thresh, max_iter, inv_norm,
              use_bf16):
    np_, mp_ = src_pad.shape[0], tgt_pad.shape[0]
    tr = min(_ROW_TILE, np_)

    cost = _cost_matrix(src_pad, tgt_pad, inv_norm, tr)      # (Np, Mp) f32
    valid_row = jnp.arange(np_, dtype=jnp.int32) < n
    valid_col = jnp.arange(mp_, dtype=jnp.int32) < m
    adj = _knn_mask(cost, valid_row, valid_col)

    # Fold the kNN mask and the 1/eps scaling into the cost once:
    # Ce = -C/eps at kept entries, -1e9 elsewhere (padded rows/cols included).
    mdtype = jnp.bfloat16 if use_bf16 else jnp.float32
    ce = jnp.where(adj, -cost * (1.0 / eps), _MASK_BIAS).astype(mdtype)

    nf = n.astype(jnp.float32)
    mf = m.astype(jnp.float32)
    # Padded rows/cols carry mu=nu=0 -> log(1e-8); combined with a fully-masked
    # row/col (row_sum = 0) the Sinkhorn update is exactly a no-op there, so
    # padding never perturbs u, v, err, or the transport cost.
    log_mu = jnp.log(jnp.where(valid_row, 1.0 / nf, 0.0) + 1e-8)[:, None]
    log_nu = jnp.log(jnp.where(valid_col, 1.0 / mf, 0.0) + 1e-8)[None, :]

    return _sinkhorn_distance(ce,
                              log_mu.astype(jnp.float32),
                              log_nu.astype(jnp.float32),
                              eps, thresh, max_iter, tr)


# -------------------------- host-side node extraction -------------------------
def build_graph_positions(img, is_gt, threshold=0.5, max_num=3000):
    # TODO(synk): skimage.morphology.skeletonize (centerline extraction) has no
    # Pallas/JAX equivalent; nodes are taken directly from thresholded pixels.
    img = np.asarray(img)
    if not is_gt:
        idx = np.argwhere(img >= threshold)
    else:
        idx = np.argwhere(img != 0)
    if len(idx) > max_num:
        vals = img[idx[:, 0], idx[:, 1]]
        order = np.argsort(-vals, kind="stable")[:max_num]
        idx = idx[order]
    if len(idx) == 0:
        idx = np.array([[0, 0]], dtype=np.int64)
    return idx.astype(np.float32)                    # (N, 2) = (row, col)


def graph_wasserstein_distance(pred, target, eps=0.1, thresh=0.1,
                               max_iter=100):
    """Forward pass of GraphWassersteinDistance (reduction='none')."""
    assert pred.shape == target.shape
    b, _, h, w = pred.shape
    inv_norm = 1.0 / math.sqrt((h - 1) ** 2 + (w - 1) ** 2)
    pred_np = np.asarray(pred)
    target_np = np.asarray(target)

    gwd = jnp.float32(0.0)
    for i in range(b):
        src_pos = build_graph_positions(pred_np[i, 0], is_gt=False)
        tgt_pos = build_graph_positions(target_np[i, 0], is_gt=True)
        n, m = src_pos.shape[0], tgt_pos.shape[0]
        # Bucketed padding -> only a handful of compiled shapes per dataset.
        np_pad = max(_ROW_TILE, _round_up(n, _ROW_TILE))
        mp_pad = max(_COL_BUCKET, _round_up(m, _COL_BUCKET))

        src_pad = np.zeros((np_pad, 2), np.float32)
        src_pad[:n] = src_pos
        tgt_pad = np.zeros((mp_pad, 2), np.float32)
        tgt_pad[:m] = tgt_pos

        use_bf16 = (np_pad * mp_pad * 4) > _BF16_BYTES_THRESHOLD
        dist = _gwd_item(jnp.asarray(src_pad), jnp.asarray(tgt_pad),
                         np.int32(n), np.int32(m),
                         eps=float(eps), thresh=float(thresh),
                         max_iter=int(max_iter), inv_norm=float(inv_norm),
                         use_bf16=bool(use_bf16))
        gwd = gwd + dist
    return gwd / b


if __name__ == "__main__":
    key = jax.random.PRNGKey(0)
    k1, k2 = jax.random.split(key)
    # pred: soft predictions in [0,1]; target: binary ground truth (NCHW).
    pred = jax.random.uniform(k1, (2, 1, 16, 16), dtype=jnp.float32)
    target = (jax.random.uniform(k2, (2, 1, 16, 16)) > 0.5).astype(jnp.float32)

    out = graph_wasserstein_distance(pred, target)
    out = jax.block_until_ready(out)
    assert np.isfinite(float(out)), "non-finite GWD"
    print("KERNEL_OK")
</pallas_src>

<mosaic_0001>
module attributes {stable_mosaic.version = 11 : i64} {
  func.func @_cost_kernel(%arg0: i32, %arg1: memref<256x1xf32, #tpu.memory_space<vmem>>, %arg2: memref<256x1xf32, #tpu.memory_space<vmem>>, %arg3: memref<1x512xf32, #tpu.memory_space<vmem>>, %arg4: memref<1x512xf32, #tpu.memory_space<vmem>>, %arg5: memref<256x512xf32, #tpu.memory_space<vmem>>) attributes {dimension_semantics = [#tpu.dimension_semantics<parallel>], iteration_bounds = array<i64: 1>, scalar_prefetch = 0 : i64, scratch_operands = 0 : i64, tpu.core_type = #tpu.core_type<tc>, window_params = [{transform_indices = @transform_0, window_bounds = array<i64: 256, 1>}, {transform_indices = @transform_1, window_bounds = array<i64: 256, 1>}, {pipeline_mode = #tpu.pipeline_mode<synchronous>, transform_indices = @transform_2, window_bounds = array<i64: 1, 512>}, {pipeline_mode = #tpu.pipeline_mode<synchronous>, transform_indices = @transform_3, window_bounds = array<i64: 1, 512>}, {transform_indices = @transform_4, window_bounds = array<i64: 256, 512>}]} {
    %c0 = arith.constant 0 : index
    %c0_0 = arith.constant 0 : index
    %0 = vector.load %arg1[%c0, %c0_0] : memref<256x1xf32, #tpu.memory_space<vmem>>, vector<256x1xf32>
    %c0_1 = arith.constant 0 : index
    %c0_2 = arith.constant 0 : index
    %1 = vector.load %arg3[%c0_1, %c0_2] : memref<1x512xf32, #tpu.memory_space<vmem>>, vector<1x512xf32>
    %2 = vector.broadcast %0 : vector<256x1xf32> to vector<256x512xf32>
    %3 = vector.broadcast %1 : vector<1x512xf32> to vector<256x512xf32>
    %4 = arith.subf %2, %3 : vector<256x512xf32>
    %c0_3 = arith.constant 0 : index
    %c0_4 = arith.constant 0 : index
    %5 = vector.load %arg2[%c0_3, %c0_4] : memref<256x1xf32, #tpu.memory_space<vmem>>, vector<256x1xf32>
    %c0_5 = arith.constant 0 : index
    %c0_6 = arith.constant 0 : index
    %6 = vector.load %arg4[%c0_5, %c0_6] : memref<1x512xf32, #tpu.memory_space<vmem>>, vector<1x512xf32>
    %7 = vector.broadcast %5 : vector<256x1xf32> to vector<256x512xf32>
    %8 = vector.broadcast %6 : vector<1x512xf32> to vector<256x512xf32>
    %9 = arith.subf %7, %8 : vector<256x512xf32>
    %10 = arith.mulf %4, %4 : vector<256x512xf32>
    %11 = arith.mulf %9, %9 : vector<256x512xf32>
    %12 = arith.addf %10, %11 : vector<256x512xf32>
    %13 = math.sqrt %12 : vector<256x512xf32>
    %cst = arith.constant 0.047140453 : f32
    %14 = vector.broadcast %cst : f32 to vector<256x512xf32>
    %15 = arith.mulf %13, %14 : vector<256x512xf32>
    %c0_7 = arith.constant 0 : index
    %c0_8 = arith.constant 0 : index
    %16 = vector.load %arg5[%c0_7, %c0_8] : memref<256x512xf32, #tpu.memory_space<vmem>>, vector<256x512xf32>
    tpu.vector_store %arg5[%c0_7, %c0_8], %15 {strides = array<i32>} : memref<256x512xf32, #tpu.memory_space<vmem>>, vector<256x512xf32>,
    return
  }
  func.func @transform_0(%arg0: i32) -> (i32, i32) {
    %c0_i32 = arith.constant 0 : i32
    %c0_i32_0 = arith.constant 0 : i32
    return %arg0, %c0_i32 : i32, i32
  }
  func.func @transform_1(%arg0: i32) -> (i32, i32) {
    %c0_i32 = arith.constant 0 : i32
    %c0_i32_0 = arith.constant 0 : i32
    return %arg0, %c0_i32 : i32, i32
  }
  func.func @transform_2(%arg0: i32) -> (i32, i32) {
    %c0_i32 = arith.constant 0 : i32
    %c0_i32_0 = arith.constant 0 : i32
    %c0_i32_1 = arith.constant 0 : i32
    return %c0_i32, %c0_i32_0 : i32, i32
  }
  func.func @transform_3(%arg0: i32) -> (i32, i32) {
    %c0_i32 = arith.constant 0 : i32
    %c0_i32_0 = arith.constant 0 : i32
    %c0_i32_1 = arith.constant 0 : i32
    return %c0_i32, %c0_i32_0 : i32, i32
  }
  func.func @transform_4(%arg0: i32) -> (i32, i32) {
    %c0_i32 = arith.constant 0 : i32
    %c0_i32_0 = arith.constant 0 : i32
    return %arg0, %c0_i32 : i32, i32
  }
}

module attributes {stable_mosaic.version = 11 : i64} {
  func.func @_sinkhorn_iter_kernel(%arg0: i32, %arg1: memref<256x512xf32, #tpu.memory_space<vmem>>, %arg2: memref<256x1xf32, #tpu.memory_space<vmem>>, %arg3: memref<1x512xf32, #tpu.memory_space<vmem>>, %arg4: memref<256x1xf32, #tpu.memory_space<vmem>>, %arg5: memref<1x512xf32, #tpu.memory_space<vmem>>, %arg6: memref<256x1xf32, #tpu.memory_space<vmem>>, %arg7: memref<1x512xf32, #tpu.memory_space<vmem>>, %arg8: memref<1x1xf32, #tpu.memory_space<vmem>>, %arg9: memref<1x512xf32, #tpu.memory_space<vmem>>, %arg10: memref<1x1xf32, #tpu.memory_space<vmem>>) attributes {dimension_semantics = [#tpu.dimension_semantics<arbitrary>], iteration_bounds = array<i64: 1>, scalar_prefetch = 0 : i64, scratch_operands = 2 : i64, tpu.core_type = #tpu.core_type<tc>, window_params = [{transform_indices = @transform_0, window_bounds = array<i64: 256, 512>}, {transform_indices = @transform_1, window_bounds = array<i64: 256, 1>}, {pipeline_mode = #tpu.pipeline_mode<synchronous>, transform_indices = @transform_2, window_bounds = array<i64: 1, 512>}, {transform_indices = @transform_3, window_bounds = array<i64: 256, 1>}, {pipeline_mode = #tpu.pipeline_mode<synchronous>, transform_indices = @transform_4, window_bounds = array<i64: 1, 512>}, {transform_indices = @transform_5, window_bounds = array<i64: 256, 1>}, {pipeline_mode = #tpu.pipeline_mode<synchronous>, transform_indices = @transform_6, window_bounds = array<i64: 1, 512>}, {pipeline_mode = #tpu.pipeline_mode<synchronous>, transform_indices = @transform_7, window_bounds = array<i64: 1, 1>}]} {
    %c0_i32 = arith.constant 0 : i32
    %0 = arith.cmpi eq, %arg0, %c0_i32 : i32
    %1 = arith.extui %0 : i1 to i32
    %c0_i32_0 = arith.constant 0 : i32
    %2 = arith.cmpi ne, %1, %c0_i32_0 : i32
    scf.if %2 {
      %cst_27 = arith.constant 0.000000e+00 : f32
      %45 = vector.broadcast %cst_27 : f32 to vector<1x512xf32>
      %c0_28 = arith.constant 0 : index
      %c0_29 = arith.constant 0 : index
      %46 = vector.load %arg9[%c0_28, %c0_29] : memref<1x512xf32, #tpu.memory_space<vmem>>, vector<1x512xf32>
      tpu.vector_store %arg9[%c0_28, %c0_29], %45 {strides = array<i32>} : memref<1x512xf32, #tpu.memory_space<vmem>>, vector<1x512xf32>,
      %cst_30 = arith.constant 0.000000e+00 : f32
      %47 = vector.broadcast %cst_30 : f32 to vector<1x1xf32>
      %c0_31 = arith.constant 0 : index
      %c0_32 = arith.constant 0 : index
      %48 = vector.load %arg10[%c0_31, %c0_32] : memref<1x1xf32, #tpu.memory_space<vmem>>, vector<1x1xf32>
      tpu.vector_store %arg10[%c0_31, %c0_32], %47 {strides = array<i32>} : memref<1x1xf32, #tpu.memory_space<vmem>>, vector<1x1xf32>,
    } else {
    }
    %c0 = arith.constant 0 : index
    %c0_1 = arith.constant 0 : index
    %3 = vector.load %arg1[%c0, %c0_1] : memref<256x512xf32, #tpu.memory_space<vmem>>, vector<256x512xf32>
    %c0_2 = arith.constant 0 : index
    %c0_3 = arith.constant 0 : index
    %4 = vector.load %arg4[%c0_2, %c0_3] : memref<256x1xf32, #tpu.memory_space<vmem>>, vector<256x1xf32>
    %c0_4 = arith.constant 0 : index
    %c0_5 = arith.constant 0 : index
    %5 = vector.load %arg5[%c0_4, %c0_5] : memref<1x512xf32, #tpu.memory_space<vmem>>, vector<1x512xf32>
    %cst = arith.constant 1.000000e+01 : f32
    %6 = vector.broadcast %cst : f32 to vector<1x512xf32>
    %7 = arith.mulf %5, %6 : vector<1x512xf32>
    %cst_6 = arith.constant 1.000000e+01 : f32
    %8 = vector.broadcast %cst_6 : f32 to vector<256x1xf32>
    %9 = arith.mulf %4, %8 : vector<256x1xf32>
    %10 = vector.broadcast %9 : vector<256x1xf32> to vector<256x512xf32>
    %11 = arith.addf %3, %10 : vector<256x512xf32>
    %12 = vector.broadcast %7 : vector<1x512xf32> to vector<256x512xf32>
    %13 = arith.addf %11, %12 : vector<256x512xf32>
    %14 = math.exp %13 : vector<256x512xf32>
    %cst_7 = arith.constant dense<0.000000e+00> : vector<256xf32>
    %15 = vector.multi_reduction <add>, %14, %cst_7 [1] : vector<256x512xf32> to vector<256xf32>
    %16 = vector.shape_cast %15 : vector<256xf32> to vector<256x1xf32>
    %c0_8 = arith.constant 0 : index
    %c0_9 = arith.constant 0 : index
    %17 = vector.load %arg2[%c0_8, %c0_9] : memref<256x1xf32, #tpu.memory_space<vmem>>, vector<256x1xf32>
    %cst_10 = arith.constant 9.99999993E-9 : f32
    %18 = vector.broadcast %cst_10 : f32 to vector<256x1xf32>
    %19 = arith.addf %18, %16 : vector<256x1xf32>
    %20 = math.log %19 : vector<256x1xf32>
    %21 = arith.subf %17, %20 : vector<256x1xf32>
    %cst_11 = arith.constant 1.000000e-01 : f32
    %22 = vector.broadcast %cst_11 : f32 to vector<256x1xf32>
    %23 = arith.mulf %22, %21 : vector<256x1xf32>
    %24 = arith.addf %4, %23 : vector<256x1xf32>
    %c0_12 = arith.constant 0 : index
    %c0_13 = arith.constant 0 : index
    %25 = vector.load %arg6[%c0_12, %c0_13] : memref<256x1xf32, #tpu.memory_space<vmem>>, vector<256x1xf32>
    tpu.vector_store %arg6[%c0_12, %c0_13], %24 {strides = array<i32>} : memref<256x1xf32, #tpu.memory_space<vmem>>, vector<256x1xf32>,
    %cst_14 = arith.constant 1.000000e+01 : f32
    %26 = vector.broadcast %cst_14 : f32 to vector<256x1xf32>
    %27 = arith.mulf %23, %26 : vector<256x1xf32>
    %28 = math.exp %27 : vector<256x1xf32>
    %29 = vector.broadcast %28 : vector<256x1xf32> to vector<256x512xf32>
    %30 = arith.mulf %14, %29 : vector<256x512xf32>
    %c0_15 = arith.constant 0 : index
    %c0_16 = arith.constant 0 : index
    %31 = vector.load %arg9[%c0_15, %c0_16] : memref<1x512xf32, #tpu.memory_space<vmem>>, vector<1x512xf32>
    %cst_17 = arith.constant dense<0.000000e+00> : vector<512xf32>
    %32 = vector.multi_reduction <add>, %30, %cst_17 [0] : vector<256x512xf32> to vector<512xf32>
    %33 = vector.shape_cast %32 : vector<512xf32> to vector<1x512xf32>
    %34 = arith.addf %31, %33 : vector<1x512xf32>
    %c0_18 = arith.constant 0 : index
    %c0_19 = arith.constant 0 : index
    %35 = vector.load %arg9[%c0_18, %c0_19] : memref<1x512xf32, #tpu.memory_space<vmem>>, vector<1x512xf32>
    tpu.vector_store %arg9[%c0_18, %c0_19], %34 {strides = array<i32>} : memref<1x512xf32, #tpu.memory_space<vmem>>, vector<1x512xf32>,
    %c0_20 = arith.constant 0 : index
    %c0_21 = arith.constant 0 : index
    %36 = vector.load %arg10[%c0_20, %c0_21] : memref<1x1xf32, #tpu.memory_space<vmem>>, vector<1x1xf32>
    %37 = math.absf %23 : vector<256x1xf32>
    %cst_22 = arith.constant dense<0.000000e+00> : vector<1xf32>
    %38 = vector.multi_reduction <add>, %37, %cst_22 [0] : vector<256x1xf32> to vector<1xf32>
    %39 = vector.shape_cast %38 : vector<1xf32> to vector<1x1xf32>
    %40 = arith.addf %36, %39 : vector<1x1xf32>
    %c0_23 = arith.constant 0 : index
    %c0_24 = arith.constant 0 : index
    %41 = vector.load %arg10[%c0_23, %c0_24] : memref<1x1xf32, #tpu.memory_space<vmem>>, vector<1x1xf32>
    tpu.vector_store %arg10[%c0_23, %c0_24], %40 {strides = array<i32>} : memref<1x1xf32, #tpu.memory_space<vmem>>, vector<1x1xf32>,
    %c0_i32_25 = arith.constant 0 : i32
    %42 = arith.cmpi eq, %arg0, %c0_i32_25 : i32
    %43 = arith.extui %42 : i1 to i32
    %c0_i32_26 = arith.constant 0 : i32
    %44 = arith.cmpi ne, %43, %c0_i32_26 : i32
    scf.if %44 {
      %c0_27 = arith.constant 0 : index
      %c0_28 = arith.constant 0 : index
      %45 = vector.load %arg3[%c0_27, %c0_28] : memref<1x512xf32, #tpu.memory_space<vmem>>, vector<1x512xf32>
      %c0_29 = arith.constant 0 : index
      %c0_30 = arith.constant 0 : index
      %46 = vector.load %arg9[%c0_29, %c0_30] : memref<1x512xf32, #tpu.memory_space<vmem>>, vector<1x512xf32>
      %cst_31 = arith.constant 9.99999993E-9 : f32
      %47 = vector.broadcast %cst_31 : f32 to vector<1x512xf32>
      %48 = arith.addf %47, %46 : vector<1x512xf32>
      %49 = math.log %48 : vector<1x512xf32>
      %50 = arith.subf %45, %49 : vector<1x512xf32>
      %cst_32 = arith.constant 1.000000e-01 : f32
      %51 = vector.broadcast %cst_32 : f32 to vector<1x512xf32>
      %52 = arith.mulf %51, %50 : vector<1x512xf32>
      %c0_33 = arith.constant 0 : index
      %c0_34 = arith.constant 0 : index
      %53 = vector.load %arg5[%c0_33, %c0_34] : memref<1x512xf32, #tpu.memory_space<vmem>>, vector<1x512xf32>
      %54 = arith.addf %52, %53 : vector<1x512xf32>
      %c0_35 = arith.constant 0 : index
      %c0_36 = arith.constant 0 : index
      %55 = vector.load %arg7[%c0_35, %c0_36] : memref<1x512xf32, #tpu.memory_space<vmem>>, vector<1x512xf32>
      tpu.vector_store %arg7[%c0_35, %c0_36], %54 {strides = array<i32>} : memref<1x512xf32, #tpu.memory_space<vmem>>, vector<1x512xf32>,
      %c0_37 = arith.constant 0 : index
      %c0_38 = arith.constant 0 : index
      %56 = vector.load %arg10[%c0_37, %c0_38] : memref<1x1xf32, #tpu.memory_space<vmem>>, vector<1x1xf32>
      %c0_39 = arith.constant 0 : index
      %c0_40 = arith.constant 0 : index
      %57 = vector.load %arg8[%c0_39, %c0_40] : memref<1x1xf32, #tpu.memory_space<vmem>>, vector<1x1xf32>
      tpu.vector_store %arg8[%c0_39, %c0_40], %56 {strides = array<i32>} : memref<1x1xf32, #tpu.memory_space<vmem>>, vector<1x1xf32>,
    } else {
    }
    return
  }
  func.func @transform_0(%arg0: i32) -> (i32, i32) {
    %c0_i32 = arith.constant 0 : i32
    %c0_i32_0 = arith.constant 0 : i32
    return %arg0, %c0_i32 : i32, i32
  }
  func.func @transform_1(%arg0: i32) -> (i32, i32) {
    %c0_i32 = arith.constant 0 : i32
    %c0_i32_0 = arith.constant 0 : i32
    return %arg0, %c0_i32 : i32, i32
  }
  func.func @transform_2(%arg0: i32) -> (i32, i32) {
    %c0_i32 = arith.constant 0 : i32
    %c0_i32_0 = arith.constant 0 : i32
    %c0_i32_1 = arith.constant 0 : i32
    return %c0_i32, %c0_i32_0 : i32, i32
  }
  func.func @transform_3(%arg0: i32) -> (i32, i32) {
    %c0_i32 = arith.constant 0 : i32
    %c0_i32_0 = arith.constant 0 : i32
    return %arg0, %c0_i32 : i32, i32
  }
  func.func @transform_4(%arg0: i32) -> (i32, i32) {
    %c0_i32 = arith.constant 0 : i32
    %c0_i32_0 = arith.constant 0 : i32
    %c0_i32_1 = arith.constant 0 : i32
    return %c0_i32, %c0_i32_0 : i32, i32
  }
  func.func @transform_5(%arg0: i32) -> (i32, i32) {
    %c0_i32 = arith.constant 0 : i32
    %c0_i32_0 = arith.constant 0 : i32
    return %arg0, %c0_i32 : i32, i32
  }
  func.func @transform_6(%arg0: i32) -> (i32, i32) {
    %c0_i32 = arith.constant 0 : i32
    %c0_i32_0 = arith.constant 0 : i32
    %c0_i32_1 = arith.constant 0 : i32
    return %c0_i32, %c0_i32_0 : i32, i32
  }
  func.func @transform_7(%arg0: i32) -> (i32, i32) {
    %c0_i32 = arith.constant 0 : i32
    %c0_i32_0 = arith.constant 0 : i32
    %c0_i32_1 = arith.constant 0 : i32
    return %c0_i32, %c0_i32_0 : i32, i32
  }
}

module attributes {stable_mosaic.version = 11 : i64} {
  func.func @_transport_cost_kernel(%arg0: i32, %arg1: memref<256x512xf32, #tpu.memory_space<vmem>>, %arg2: memref<256x1xf32, #tpu.memory_space<vmem>>, %arg3: memref<1x512xf32, #tpu.memory_space<vmem>>, %arg4: memref<1x1xf32, #tpu.memory_space<vmem>>, %arg5: memref<1x1xf32, #tpu.memory_space<vmem>>) attributes {dimension_semantics = [#tpu.dimension_semantics<arbitrary>], iteration_bounds = array<i64: 1>, scalar_prefetch = 0 : i64, scratch_operands = 1 : i64, tpu.core_type = #tpu.core_type<tc>, window_params = [{transform_indices = @transform_0, window_bounds = array<i64: 256, 512>}, {transform_indices = @transform_1, window_bounds = array<i64: 256, 1>}, {pipeline_mode = #tpu.pipeline_mode<synchronous>, transform_indices = @transform_2, window_bounds = array<i64: 1, 512>}, {pipeline_mode = #tpu.pipeline_mode<synchronous>, transform_indices = @transform_3, window_bounds = array<i64: 1, 1>}]} {
    %c0_i32 = arith.constant 0 : i32
    %0 = arith.cmpi eq, %arg0, %c0_i32 : i32
    %1 = arith.extui %0 : i1 to i32
    %c0_i32_0 = arith.constant 0 : i32
    %2 = arith.cmpi ne, %1, %c0_i32_0 : i32
    scf.if %2 {
      %cst_16 = arith.constant 0.000000e+00 : f32
      %28 = vector.broadcast %cst_16 : f32 to vector<1x1xf32>
      %c0_17 = arith.constant 0 : index
      %c0_18 = arith.constant 0 : index
      %29 = vector.load %arg5[%c0_17, %c0_18] : memref<1x1xf32, #tpu.memory_space<vmem>>, vector<1x1xf32>
      tpu.vector_store %arg5[%c0_17, %c0_18], %28 {strides = array<i32>} : memref<1x1xf32, #tpu.memory_space<vmem>>, vector<1x1xf32>,
    } else {
    }
    %c0 = arith.constant 0 : index
    %c0_1 = arith.constant 0 : index
    %3 = vector.load %arg1[%c0, %c0_1] : memref<256x512xf32, #tpu.memory_space<vmem>>, vector<256x512xf32>
    %c0_2 = arith.constant 0 : index
    %c0_3 = arith.constant 0 : index
    %4 = vector.load %arg2[%c0_2, %c0_3] : memref<256x1xf32, #tpu.memory_space<vmem>>, vector<256x1xf32>
    %cst = arith.constant 1.000000e+01 : f32
    %5 = vector.broadcast %cst : f32 to vector<256x1xf32>
    %6 = arith.mulf %4, %5 : vector<256x1xf32>
    %7 = vector.broadcast %6 : vector<256x1xf32> to vector<256x512xf32>
    %8 = arith.addf %3, %7 : vector<256x512xf32>
    %c0_4 = arith.constant 0 : index
    %c0_5 = arith.constant 0 : index
    %9 = vector.load %arg3[%c0_4, %c0_5] : memref<1x512xf32, #tpu.memory_space<vmem>>, vector<1x512xf32>
    %cst_6 = arith.constant 1.000000e+01 : f32
    %10 = vector.broadcast %cst_6 : f32 to vector<1x512xf32>
    %11 = arith.mulf %9, %10 : vector<1x512xf32>
    %12 = vector.broadcast %11 : vector<1x512xf32> to vector<256x512xf32>
    %13 = arith.addf %8, %12 : vector<256x512xf32>
    %14 = math.exp %13 : vector<256x512xf32>
    %cst_7 = arith.constant -1.000000e-01 : f32
    %15 = vector.broadcast %cst_7 : f32 to vector<256x512xf32>
    %16 = arith.mulf %14, %15 : vector<256x512xf32>
    %17 = arith.mulf %16, %3 : vector<256x512xf32>
    %cst_8 = arith.constant dense<0.000000e+00> : vector<256xf32>
    %18 = vector.multi_reduction <add>, %17, %cst_8 [1] : vector<256x512xf32> to vector<256xf32>
    %19 = vector.shape_cast %18 : vector<256xf32> to vector<256x1xf32>
    %c0_9 = arith.constant 0 : index
    %c0_10 = arith.constant 0 : index
    %20 = vector.load %arg5[%c0_9, %c0_10] : memref<1x1xf32, #tpu.memory_space<vmem>>, vector<1x1xf32>
    %cst_11 = arith.constant dense<0.000000e+00> : vector<1xf32>
    %21 = vector.multi_reduction <add>, %19, %cst_11 [0] : vector<256x1xf32> to vector<1xf32>
    %22 = vector.shape_cast %21 : vector<1xf32> to vector<1x1xf32>
    %23 = arith.addf %20, %22 : vector<1x1xf32>
    %c0_12 = arith.constant 0 : index
    %c0_13 = arith.constant 0 : index
    %24 = vector.load %arg5[%c0_12, %c0_13] : memref<1x1xf32, #tpu.memory_space<vmem>>, vector<1x1xf32>
    tpu.vector_store %arg5[%c0_12, %c0_13], %23 {strides = array<i32>} : memref<1x1xf32, #tpu.memory_space<vmem>>, vector<1x1xf32>,
    %c0_i32_14 = arith.constant 0 : i32
    %25 = arith.cmpi eq, %arg0, %c0_i32_14 : i32
    %26 = arith.extui %25 : i1 to i32
    %c0_i32_15 = arith.constant 0 : i32
    %27 = arith.cmpi ne, %26, %c0_i32_15 : i32
    scf.if %27 {
      %c0_16 = arith.constant 0 : index
      %c0_17 = arith.constant 0 : index
      %28 = vector.load %arg5[%c0_16, %c0_17] : memref<1x1xf32, #tpu.memory_space<vmem>>, vector<1x1xf32>
      %c0_18 = arith.constant 0 : index
      %c0_19 = arith.constant 0 : index
      %29 = vector.load %arg4[%c0_18, %c0_19] : memref<1x1xf32, #tpu.memory_space<vmem>>, vector<1x1xf32>
      tpu.vector_store %arg4[%c0_18, %c0_19], %28 {strides = array<i32>} : memref<1x1xf32, #tpu.memory_space<vmem>>, vector<1x1xf32>,
    } else {
    }
    return
  }
  func.func @transform_0(%arg0: i32) -> (i32, i32) {
    %c0_i32 = arith.constant 0 : i32
    %c0_i32_0 = arith.constant 0 : i32
    return %arg0, %c0_i32 : i32, i32
  }
  func.func @transform_1(%arg0: i32) -> (i32, i32) {
    %c0_i32 = arith.constant 0 : i32
    %c0_i32_0 = arith.constant 0 : i32
    return %arg0, %c0_i32 : i32, i32
  }
  func.func @transform_2(%arg0: i32) -> (i32, i32) {
    %c0_i32 = arith.constant 0 : i32
    %c0_i32_0 = arith.constant 0 : i32
    %c0_i32_1 = arith.constant 0 : i32
    return %c0_i32, %c0_i32_0 : i32, i32
  }
  func.func @transform_3(%arg0: i32) -> (i32, i32) {
    %c0_i32 = arith.constant 0 : i32
    %c0_i32_0 = arith.constant 0 : i32
    %c0_i32_1 = arith.constant 0 : i32
    return %c0_i32, %c0_i32_0 : i32, i32
  }
}

</mosaic_0001>

<llo_original>
// kernel: _gwd_item.2
$region0: #{_gwd_item.2}
  #allocation0 [shape = 'u32[]', space=smem, size = 0x4, offset = 0x4, fixed_abs, tag = 'smem constant byte address 0x4 - core index']
  #allocation1 [shape = 'u32[144,128]{1,0:T(1,128)}', space=vmem, size = 0x12000, scoped, tag = 'internal scratch']
  %s0 = inlined_call_operand.vmem [shape: f32[256,1], index: 0, kind: input, shape index: {}]
  %s1 = inlined_call_operand.vmem [shape: f32[256,1], index: 1, kind: input, shape index: {}]
  %s2 = inlined_call_operand.vmem [shape: f32[1,512], index: 2, kind: input, shape index: {}]
  %s3 = inlined_call_operand.vmem [shape: f32[1,512], index: 3, kind: input, shape index: {}]
  %s4 = inlined_call_operand.vmem [shape: f32[256,512], index: 4, kind: output, shape index: {}]
  %s5 = sld [smem:[#allocation0]]
  $region26: #{_gwd_item.2} parent=0
    _
  %s7 = ssub.s32 1, %s5
  %s8 = scalar_select 0, %s7, %s5
  // Predicated region
  $region2: #{_gwd_item.2} parent=0 // pred_check
    _
  $region3: #{_gwd_item.2} parent=0 // pred_check_branch
    %10 = sbr.rel (0) target = $region5
  $region4: #{_gwd_item.2} parent=0 // pred_region
    _
  $region5: #{_gwd_item.2} parent=0 // pred_fallthru
    _
  // Predicated region
  $region6: #{_gwd_item.2} parent=0 // pred_check
    _
  $region7: #{_gwd_item.2} parent=0 // pred_check_branch
    %12 = sbr.rel (0) target = $region9
  $region8: #{_gwd_item.2} parent=0 // pred_region
    _
  $region9: #{_gwd_item.2} parent=0 // pred_fallthru
    _
  // Predicated region
  $region10: #{_gwd_item.2} parent=0 // pred_check
    _
  $region11: #{_gwd_item.2} parent=0 // pred_check_branch
    %14 = sbr.rel (0) target = $region13
  $region12: #{_gwd_item.2} parent=0 // pred_region
    _
  $region13: #{_gwd_item.2} parent=0 // pred_fallthru
    _
  // Predicated region
  $region14: #{_gwd_item.2} parent=0 // pred_check
    _
  $region15: #{_gwd_item.2} parent=0 // pred_check_branch
    %16 = sbr.rel (0) target = $region17
  $region16: #{_gwd_item.2} parent=0 // pred_region
    _
  $region17: #{_gwd_item.2} parent=0 // pred_fallthru
    _
  %v17 = vld [vmem:[%s0] sm:$0xff]
  %v18 = vld [vmem:[%s0 + $0x8] sm:$0xff]
  %v19 = vld [vmem:[%s0 + $0x10] sm:$0xff]
  %v20 = vld [vmem:[%s0 + $0x18] sm:$0xff]
  %v21 = vld [vmem:[%s0 + $0x20] sm:$0xff]
  %v22 = vld [vmem:[%s0 + $0x28] sm:$0xff]
  %v23 = vld [vmem:[%s0 + $0x30] sm:$0xff]
  %v24 = vld [vmem:[%s0 + $0x38] sm:$0xff]
  %v25 = vld [vmem:[%s0 + $0x40] sm:$0xff]
  %v26 = vld [vmem:[%s0 + $0x48] sm:$0xff]
  %v27 = vld [vmem:[%s0 + $0x50] sm:$0xff]
  %v28 = vld [vmem:[%s0 + $0x58] sm:$0xff]
  %v29 = vld [vmem:[%s0 + $0x60] sm:$0xff]
  %v30 = vld [vmem:[%s0 + $0x68] sm:$0xff]
  %v31 = vld [vmem:[%s0 + $0x70] sm:$0xff]
  %v32 = vld [vmem:[%s0 + $0x78] sm:$0xff]
  %v33 = vld [vmem:[%s0 + $0x80] sm:$0xff]
  %v34 = vld [vmem:[%s0 + $0x88] sm:$0xff]
  %v35 = vld [vmem:[%s0 + $0x90] sm:$0xff]
  %v36 = vld [vmem:[%s0 + $0x98] sm:$0xff]
  %v37 = vld [vmem:[%s0 + $0xa0] sm:$0xff]
  %v38 = vld [vmem:[%s0 + $0xa8] sm:$0xff]
  %v39 = vld [vmem:[%s0 + $0xb0] sm:$0xff]
  %v40 = vld [vmem:[%s0 + $0xb8] sm:$0xff]
  %v41 = vld [vmem:[%s0 + $0xc0] sm:$0xff]
  %v42 = vld [vmem:[%s0 + $0xc8] sm:$0xff]
  %v43 = vld [vmem:[%s0 + $0xd0] sm:$0xff]
  %v44 = vld [vmem:[%s0 + $0xd8] sm:$0xff]
  %v45 = vld [vmem:[%s0 + $0xe0] sm:$0xff]
  %v46 = vld [vmem:[%s0 + $0xe8] sm:$0xff]
  %v47 = vld [vmem:[%s0 + $0xf0] sm:$0xff]
  %v48 = vld [vmem:[%s0 + $0xf8] sm:$0xff]
  %v49 = vld [vmem:[%s2] sm:$0xf]
  %51 = vset.pattern.permute.xlu0 0
  %52 = vperm.xlu0 %51, %v17
  %v53 = vpop.permute.xlu0 %52
  %56 = vset.pattern.permute.xlu0 0
  %57 = vperm.xlu0 %56, %v18
  %v58 = vpop.permute.xlu0 %57
  %61 = vset.pattern.permute.xlu0 0
  %62 = vperm.xlu0 %61, %v19
  %v63 = vpop.permute.xlu0 %62
  %66 = vset.pattern.permute.xlu0 0
  %67 = vperm.xlu0 %66, %v20
  %v68 = vpop.permute.xlu0 %67
  %71 = vset.pattern.permute.xlu0 0
  %72 = vperm.xlu0 %71, %v21
  %v73 = vpop.permute.xlu0 %72
  %76 = vset.pattern.permute.xlu0 0
  %77 = vperm.xlu0 %76, %v22
  %v78 = vpop.permute.xlu0 %77
  %81 = vset.pattern.permute.xlu0 0
  %82 = vperm.xlu0 %81, %v23
  %v83 = vpop.permute.xlu0 %82
  %86 = vset.pattern.permute.xlu0 0
  %87 = vperm.xlu0 %86, %v24
  %v88 = vpop.permute.xlu0 %87
  %91 = vset.pattern.permute.xlu0 0
  %92 = vperm.xlu0 %91, %v25
  %v93 = vpop.permute.xlu0 %92
  %96 = vset.pattern.permute.xlu0 0
  %97 = vperm.xlu0 %96, %v26
  %v98 = vpop.permute.xlu0 %97
  %101 = vset.pattern.permute.xlu0 0
  %102 = vperm.xlu0 %101, %v27
  %v103 = vpop.permute.xlu0 %102
  %106 = vset.pattern.permute.xlu0 0
  %107 = vperm.xlu0 %106, %v28
  %v108 = vpop.permute.xlu0 %107
  %111 = vset.pattern.permute.xlu0 0
  %112 = vperm.xlu0 %111, %v29
  %v113 = vpop.permute.xlu0 %112
  %116 = vset.pattern.permute.xlu0 0
  %117 = vperm.xlu0 %116, %v30
  %v118 = vpop.permute.xlu0 %117
  %121 = vset.pattern.permute.xlu0 0
  %122 = vperm.xlu0 %121, %v31
  %v123 = vpop.permute.xlu0 %122
  %126 = vset.pattern.permute.xlu0 0
  %127 = vperm.xlu0 %126, %v32
  %v128 = vpop.permute.xlu0 %127
  %131 = vset.pattern.permute.xlu0 0
  %132 = vperm.xlu0 %131, %v33
  %v133 = vpop.permute.xlu0 %132
  %136 = vset.pattern.permute.xlu0 0
  %137 = vperm.xlu0 %136, %v34
  %v138 = vpop.permute.xlu0 %137
  %141 = vset.pattern.permute.xlu0 0
  %142 = vperm.xlu0 %141, %v35
  %v143 = vpop.permute.xlu0 %142
  %146 = vset.pattern.permute.xlu0 0
  %147 = vperm.xlu0 %146, %v36
  %v148 = vpop.permute.xlu0 %147
  %151 = vset.pattern.permute.xlu0 0
  %152 = vperm.xlu0 %151, %v37
  %v153 = vpop.permute.xlu0 %152
  %156 = vset.pattern.permute.xlu0 0
  %157 = vperm.xlu0 %156, %v38
  %v158 = vpop.permute.xlu0 %157
  %161 = vset.pattern.permute.xlu0 0
  %162 = vperm.xlu0 %161, %v39
  %v163 = vpop.permute.xlu0 %162
  %166 = vset.pattern.permute.xlu0 0
  %167 = vperm.xlu0 %166, %v40
  %v168 = vpop.permute.xlu0 %167
  %171 = vset.pattern.permute.xlu0 0
  %172 = vperm.xlu0 %171, %v41
  %v173 = vpop.permute.xlu0 %172
  %176 = vset.pattern.permute.xlu0 0
  %177 = vperm.xlu0 %176, %v42
  %v178 = vpop.permute.xlu0 %177
  %181 = vset.pattern.permute.xlu0 0
  %182 = vperm.xlu0 %181, %v43
  %v183 = vpop.permute.xlu0 %182
  %186 = vset.pattern.permute.xlu0 0
  %187 = vperm.xlu0 %186, %v44
  %v188 = vpop.permute.xlu0 %187
  %191 = vset.pattern.permute.xlu0 0
  %192 = vperm.xlu0 %191, %v45
  %v193 = vpop.permute.xlu0 %192
  %196 = vset.pattern.permute.xlu0 0
  %197 = vperm.xlu0 %196, %v46
  %v198 = vpop.permute.xlu0 %197
  %201 = vset.pattern.permute.xlu0 0
  %202 = vperm.xlu0 %201, %v47
  %v203 = vpop.permute.xlu0 %202
  %206 = vset.pattern.permute.xlu0 0
  %207 = vperm.xlu0 %206, %v48
  %v208 = vpop.permute.xlu0 %207
  %v211 = vlaneseq
  %v212 = vshrl.u32 %v211, 7
  %v213 = vsub.s32 0, %v212
  %v214 = vrot.slane %v49, %v213
  %v215 = vlaneseq
  %v216 = vshrl.u32 %v215, 7
  %v217 = vsub.s32 1, %v216
  %v218 = vrot.slane %v49, %v217
  %v219 = vlaneseq
  %v220 = vshrl.u32 %v219, 7
  %v221 = vsub.s32 2, %v220
  %v222 = vrot.slane %v49, %v221
  %v223 = vlaneseq
  %v224 = vshrl.u32 %v223, 7
  %v225 = vsub.s32 3, %v224
  %v226 = vrot.slane %v49, %v225
  %v231 = vsub.f32 %v53, %v214
  %v232 = vsub.f32 %v53, %v218
  %v233 = vsub.f32 %v53, %v222
  %v234 = vsub.f32 %v53, %v226
  %v235 = vsub.f32 %v58, %v214
  %v236 = vsub.f32 %v58, %v218
  %v237 = vsub.f32 %v58, %v222
  %v238 = vsub.f32 %v58, %v226
  %v239 = vsub.f32 %v63, %v214
  %v240 = vsub.f32 %v63, %v218
  %v241 = vsub.f32 %v63, %v222
  %v242 = vsub.f32 %v63, %v226
  %v243 = vsub.f32 %v68, %v214
  %v244 = vsub.f32 %v68, %v218
  %v245 = vsub.f32 %v68, %v222
  %v246 = vsub.f32 %v68, %v226
  %v247 = vsub.f32 %v73, %v214
  %v248 = vsub.f32 %v73, %v218
  %v249 = vsub.f32 %v73, %v222
  %v250 = vsub.f32 %v73, %v226
  %v251 = vsub.f32 %v78, %v214
  %v252 = vsub.f32 %v78, %v218
  %v253 = vsub.f32 %v78, %v222
  %v254 = vsub.f32 %v78, %v226
  %v255 = vsub.f32 %v83, %v214
  %v256 = vsub.f32 %v83, %v218
  %v257 = vsub.f32 %v83, %v222
  %v258 = vsub.f32 %v83, %v226
  %v259 = vsub.f32 %v88, %v214
  %v260 = vsub.f32 %v88, %v218
  %v261 = vsub.f32 %v88, %v222
  %v262 = vsub.f32 %v88, %v226
  %v263 = vsub.f32 %v93, %v214
  %v264 = vsub.f32 %v93, %v218
  %v265 = vsub.f32 %v93, %v222
  %v266 = vsub.f32 %v93, %v226
  %v267 = vsub.f32 %v98, %v214
  %v268 = vsub.f32 %v98, %v218
  %v269 = vsub.f32 %v98, %v222
  %v270 = vsub.f32 %v98, %v226
  %v271 = vsub.f32 %v103, %v214
  %v272 = vsub.f32 %v103, %v218
  %v273 = vsub.f32 %v103, %v222
  %v274 = vsub.f32 %v103, %v226
  %v275 = vsub.f32 %v108, %v214
  %v276 = vsub.f32 %v108, %v218
  %v277 = vsub.f32 %v108, %v222
  %v278 = vsub.f32 %v108, %v226
  %v279 = vsub.f32 %v113, %v214
  %v280 = vsub.f32 %v113, %v218
  %v281 = vsub.f32 %v113, %v222
  %v282 = vsub.f32 %v113, %v226
  %v283 = vsub.f32 %v118, %v214
  %v284 = vsub.f32 %v118, %v218
  %v285 = vsub.f32 %v118, %v222
  %v286 = vsub.f32 %v118, %v226
  %v287 = vsub.f32 %v123, %v214
  %v288 = vsub.f32 %v123, %v218
  %v289 = vsub.f32 %v123, %v222
  %v290 = vsub.f32 %v123, %v226
  %v291 = vsub.f32 %v128, %v214
  %v292 = vsub.f32 %v128, %v218
  %v293 = vsub.f32 %v128, %v222
  %v294 = vsub.f32 %v128, %v226
  %v295 = vsub.f32 %v133, %v214
  %v296 = vsub.f32 %v133, %v218
  %v297 = vsub.f32 %v133, %v222
  %v298 = vsub.f32 %v133, %v226
  %v299 = vsub.f32 %v138, %v214
  %v300 = vsub.f32 %v138, %v218
  %v301 = vsub.f32 %v138, %v222
  %v302 = vsub.f32 %v138, %v226
  %v303 = vsub.f32 %v143, %v214
  %v304 = vsub.f32 %v143, %v218
  %v305 = vsub.f32 %v143, %v222
  %v306 = vsub.f32 %v143, %v226
  %v307 = vsub.f32 %v148, %v214
  %v308 = vsub.f32 %v148, %v218
  %v309 = vsub.f32 %v148, %v222
  %v310 = vsub.f32 %v148, %v226
  %v311 = vsub.f32 %v153, %v214
  %v312 = vsub.f32 %v153, %v218
  %v313 = vsub.f32 %v153, %v222
  %v314 = vsub.f32 %v153, %v226
  %v315 = vsub.f32 %v158, %v214
  %v316 = vsub.f32 %v158, %v218
  %v317 = vsub.f32 %v158, %v222
  %v318 = vsub.f32 %v158, %v226
  %v319 = vsub.f32 %v163, %v214
  %v320 = vsub.f32 %v163, %v218
  %v321 = vsub.f32 %v163, %v222
  %v322 = vsub.f32 %v163, %v226
  %v323 = vsub.f32 %v168, %v214
  %v324 = vsub.f32 %v168, %v218
  %v325 = vsub.f32 %v168, %v222
  %v326 = vsub.f32 %v168, %v226
  %v327 = vsub.f32 %v173, %v214
  %v328 = vsub.f32 %v173, %v218
  %v329 = vsub.f32 %v173, %v222
  %v330 = vsub.f32 %v173, %v226
  %v331 = vsub.f32 %v178, %v214
  %v332 = vsub.f32 %v178, %v218
  %v333 = vsub.f32 %v178, %v222
  %v334 = vsub.f32 %v178, %v226
  %v335 = vsub.f32 %v183, %v214
  %v336 = vsub.f32 %v183, %v218
  %v337 = vsub.f32 %v183, %v222
  %v338 = vsub.f32 %v183, %v226
  %v339 = vsub.f32 %v188, %v214
  %v340 = vsub.f32 %v188, %v218
  %v341 = vsub.f32 %v188, %v222
  %v342 = vsub.f32 %v188, %v226
  %v343 = vsub.f32 %v193, %v214
  %v344 = vsub.f32 %v193, %v218
  %v345 = vsub.f32 %v193, %v222
  %v346 = vsub.f32 %v193, %v226
  %v347 = vsub.f32 %v198, %v214
  %v348 = vsub.f32 %v198, %v218
  %v349 = vsub.f32 %v198, %v222
  %v350 = vsub.f32 %v198, %v226
  %v351 = vsub.f32 %v203, %v214
  %v352 = vsub.f32 %v203, %v218
  %v353 = vsub.f32 %v203, %v222
  %v354 = vsub.f32 %v203, %v226
  %v355 = vsub.f32 %v208, %v214
  %v356 = vsub.f32 %v208, %v218
  %v357 = vsub.f32 %v208, %v222
  %v358 = vsub.f32 %v208, %v226
  %v359 = vld [vmem:[%s1] sm:$0xff]
  %v360 = vld [vmem:[%s1 + $0x8] sm:$0xff]
  %v361 = vld [vmem:[%s1 + $0x10] sm:$0xff]
  %v362 = vld [vmem:[%s1 + $0x18] sm:$0xff]
  %v363 = vld [vmem:[%s1 + $0x20] sm:$0xff]
  %v364 = vld [vmem:[%s1 + $0x28] sm:$0xff]
  %v365 = vld [vmem:[%s1 + $0x30] sm:$0xff]
  %v366 = vld [vmem:[%s1 + $0x38] sm:$0xff]
  %v367 = vld [vmem:[%s1 + $0x40] sm:$0xff]
  %v368 = vld [vmem:[%s1 + $0x48] sm:$0xff]
  %v369 = vld [vmem:[%s1 + $0x50] sm:$0xff]
  %v370 = vld [vmem:[%s1 + $0x58] sm:$0xff]
  %v371 = vld [vmem:[%s1 + $0x60] sm:$0xff]
  %v372 = vld [vmem:[%s1 + $0x68] sm:$0xff]
  %v373 = vld [vmem:[%s1 + $0x70] sm:$0xff]
  %v374 = vld [vmem:[%s1 + $0x78] sm:$0xff]
  %v375 = vld [vmem:[%s1 + $0x80] sm:$0xff]
  %v376 = vld [vmem:[%s1 + $0x88] sm:$0xff]
  %v377 = vld [vmem:[%s1 + $0x90] sm:$0xff]
  %v378 = vld [vmem:[%s1 + $0x98] sm:$0xff]
  %v379 = vld [vmem:[%s1 + $0xa0] sm:$0xff]
  %v380 = vld [vmem:[%s1 + $0xa8] sm:$0xff]
  %v381 = vld [vmem:[%s1 + $0xb0] sm:$0xff]
  %v382 = vld [vmem:[%s1 + $0xb8] sm:$0xff]
  %v383 = vld [vmem:[%s1 + $0xc0] sm:$0xff]
  %v384 = vld [vmem:[%s1 + $0xc8] sm:$0xff]
  %v385 = vld [vmem:[%s1 + $0xd0] sm:$0xff]
  %v386 = vld [vmem:[%s1 + $0xd8] sm:$0xff]
  %v387 = vld [vmem:[%s1 + $0xe0] sm:$0xff]
  %v388 = vld [vmem:[%s1 + $0xe8] sm:$0xff]
  %v389 = vld [vmem:[%s1 + $0xf0] sm:$0xff]
  %v390 = vld [vmem:[%s1 + $0xf8] sm:$0xff]
  %v391 = vld [vmem:[%s3] sm:$0xf]
  %393 = vset.pattern.permute.xlu0 0
  %394 = vperm.xlu0 %393, %v359
  %v395 = vpop.permute.xlu0 %394
  %398 = vset.pattern.permute.xlu0 0
  %399 = vperm.xlu0 %398, %v360
  %v400 = vpop.permute.xlu0 %399
  %403 = vset.pattern.permute.xlu0 0
  %404 = vperm.xlu0 %403, %v361
  %v405 = vpop.permute.xlu0 %404
  %408 = vset.pattern.permute.xlu0 0
  %409 = vperm.xlu0 %408, %v362
  %v410 = vpop.permute.xlu0 %409
  %413 = vset.pattern.permute.xlu0 0
  %414 = vperm.xlu0 %413, %v363
  %v415 = vpop.permute.xlu0 %414
  %418 = vset.pattern.permute.xlu0 0
  %419 = vperm.xlu0 %418, %v364
  %v420 = vpop.permute.xlu0 %419
  %423 = vset.pattern.permute.xlu0 0
  %424 = vperm.xlu0 %423, %v365
  %v425 = vpop.permute.xlu0 %424
  %428 = vset.pattern.permute.xlu0 0
  %429 = vperm.xlu0 %428, %v366
  %v430 = vpop.permute.xlu0 %429
  %433 = vset.pattern.permute.xlu0 0
  %434 = vperm.xlu0 %433, %v367
  %v435 = vpop.permute.xlu0 %434
  %438 = vset.pattern.permute.xlu0 0
  %439 = vperm.xlu0 %438, %v368
  %v440 = vpop.permute.xlu0 %439
  %443 = vset.pattern.permute.xlu0 0
  %444 = vperm.xlu0 %443, %v369
  %v445 = vpop.permute.xlu0 %444
  %448 = vset.pattern.permute.xlu0 0
  %449 = vperm.xlu0 %448, %v370
  %v450 = vpop.permute.xlu0 %449
  %453 = vset.pattern.permute.xlu0 0
  %454 = vperm.xlu0 %453, %v371
  %v455 = vpop.permute.xlu0 %454
  %458 = vset.pattern.permute.xlu0 0
  %459 = vperm.xlu0 %458, %v372
  %v460 = vpop.permute.xlu0 %459
  %463 = vset.pattern.permute.xlu0 0
  %464 = vperm.xlu0 %463, %v373
  %v465 = vpop.permute.xlu0 %464
  %468 = vset.pattern.permute.xlu0 0
  %469 = vperm.xlu0 %468, %v374
  %v470 = vpop.permute.xlu0 %469
  %473 = vset.pattern.permute.xlu0 0
  %474 = vperm.xlu0 %473, %v375
  %v475 = vpop.permute.xlu0 %474
  %478 = vset.pattern.permute.xlu0 0
  %479 = vperm.xlu0 %478, %v376
  %v480 = vpop.permute.xlu0 %479
  %483 = vset.pattern.permute.xlu0 0
  %484 = vperm.xlu0 %483, %v377
  %v485 = vpop.permute.xlu0 %484
  %488 = vset.pattern.permute.xlu0 0
  %489 = vperm.xlu0 %488, %v378
  %v490 = vpop.permute.xlu0 %489
  %493 = vset.pattern.permute.xlu0 0
  %494 = vperm.xlu0 %493, %v379
  %v495 = vpop.permute.xlu0 %494
  %498 = vset.pattern.permute.xlu0 0
  %499 = vperm.xlu0 %498, %v380
  %v500 = vpop.permute.xlu0 %499
  %503 = vset.pattern.permute.xlu0 0
  %504 = vperm.xlu0 %503, %v381
  %v505 = vpop.permute.xlu0 %504
  %508 = vset.pattern.permute.xlu0 0
  %509 = vperm.xlu0 %508, %v382
  %v510 = vpop.permute.xlu0 %509
  %513 = vset.pattern.permute.xlu0 0
  %514 = vperm.xlu0 %513, %v383
  %v515 = vpop.permute.xlu0 %514
  %518 = vset.pattern.permute.xlu0 0
  %519 = vperm.xlu0 %518, %v384
  %v520 = vpop.permute.xlu0 %519
  %523 = vset.pattern.permute.xlu0 0
  %524 = vperm.xlu0 %523, %v385
  %v525 = vpop.permute.xlu0 %524
  %528 = vset.pattern.permute.xlu0 0
  %529 = vperm.xlu0 %528, %v386
  %v530 = vpop.permute.xlu0 %529
  %533 = vset.pattern.permute.xlu0 0
  %534 = vperm.xlu0 %533, %v387
  %v535 = vpop.permute.xlu0 %534
  %538 = vset.pattern.permute.xlu0 0
  %539 = vperm.xlu0 %538, %v388
  %v540 = vpop.permute.xlu0 %539
  %543 = vset.pattern.permute.xlu0 0
  %544 = vperm.xlu0 %543, %v389
  %v545 = vpop.permute.xlu0 %544
  %548 = vset.pattern.permute.xlu0 0
  %549 = vperm.xlu0 %548, %v390
  %v550 = vpop.permute.xlu0 %549
  %v553 = vlaneseq
  %v554 = vshrl.u32 %v553, 7
  %v555 = vsub.s32 0, %v554
  %v556 = vrot.slane %v391, %v555
  %v557 = vlaneseq
  %v558 = vshrl.u32 %v557, 7
  %v559 = vsub.s32 1, %v558
  %v560 = vrot.slane %v391, %v559
  %v561 = vlaneseq
  %v562 = vshrl.u32 %v561, 7
  %v563 = vsub.s32 2, %v562
  %v564 = vrot.slane %v391, %v563
  %v565 = vlaneseq
  %v566 = vshrl.u32 %v565, 7
  %v567 = vsub.s32 3, %v566
  %v568 = vrot.slane %v391, %v567
  %v573 = vsub.f32 %v395, %v556
  %v574 = vsub.f32 %v395, %v560
  %v575 = vsub.f32 %v395, %v564
  %v576 = vsub.f32 %v395, %v568
  %v577 = vsub.f32 %v400, %v556
  %v578 = vsub.f32 %v400, %v560
  %v579 = vsub.f32 %v400, %v564
  %v580 = vsub.f32 %v400, %v568
  %v581 = vsub.f32 %v405, %v556
  %v582 = vsub.f32 %v405, %v560
  %v583 = vsub.f32 %v405, %v564
  %v584 = vsub.f32 %v405, %v568
  %v585 = vsub.f32 %v410, %v556
  %v586 = vsub.f32 %v410, %v560
  %v587 = vsub.f32 %v410, %v564
  %v588 = vsub.f32 %v410, %v568
  %v589 = vsub.f32 %v415, %v556
  %v590 = vsub.f32 %v415, %v560
  %v591 = vsub.f32 %v415, %v564
  %v592 = vsub.f32 %v415, %v568
  %v593 = vsub.f32 %v420, %v556
  %v594 = vsub.f32 %v420, %v560
  %v595 = vsub.f32 %v420, %v564
  %v596 = vsub.f32 %v420, %v568
  %v597 = vsub.f32 %v425, %v556
  %v598 = vsub.f32 %v425, %v560
  %v599 = vsub.f32 %v425, %v564
  %v600 = vsub.f32 %v425, %v568
  %v601 = vsub.f32 %v430, %v556
  %v602 = vsub.f32 %v430, %v560
  %v603 = vsub.f32 %v430, %v564
  %v604 = vsub.f32 %v430, %v568
  %v605 = vsub.f32 %v435, %v556
  %v606 = vsub.f32 %v435, %v560
  %v607 = vsub.f32 %v435, %v564
  %v608 = vsub.f32 %v435, %v568
  %v609 = vsub.f32 %v440, %v556
  %v610 = vsub.f32 %v440, %v560
  %v611 = vsub.f32 %v440, %v564
  %v612 = vsub.f32 %v440, %v568
  %v613 = vsub.f32 %v445, %v556
  %v614 = vsub.f32 %v445, %v560
  %v615 = vsub.f32 %v445, %v564
  %v616 = vsub.f32 %v445, %v568
  %v617 = vsub.f32 %v450, %v556
  %v618 = vsub.f32 %v450, %v560
  %v619 = vsub.f32 %v450, %v564
  %v620 = vsub.f32 %v450, %v568
  %v621 = vsub.f32 %v455, %v556
  %v622 = vsub.f32 %v455, %v560
  %v623 = vsub.f32 %v455, %v564
  %v624 = vsub.f32 %v455, %v568
  %v625 = vsub.f32 %v460, %v556
  %v626 = vsub.f32 %v460, %v560
  %v627 = vsub.f32 %v460, %v564
  %v628 = vsub.f32 %v460, %v568
  %v629 = vsub.f32 %v465, %v556
  %v630 = vsub.f32 %v465, %v560
  %v631 = vsub.f32 %v465, %v564
  %v632 = vsub.f32 %v465, %v568
  %v633 = vsub.f32 %v470, %v556
  %v634 = vsub.f32 %v470, %v560
  %v635 = vsub.f32 %v470, %v564
  %v636 = vsub.f32 %v470, %v568
  %v637 = vsub.f32 %v475, %v556
  %v638 = vsub.f32 %v475, %v560
  %v639 = vsub.f32 %v475, %v564
  %v640 = vsub.f32 %v475, %v568
  %v641 = vsub.f32 %v480, %v556
  %v642 = vsub.f32 %v480, %v560
  %v643 = vsub.f32 %v480, %v564
  %v644 = vsub.f32 %v480, %v568
  %v645 = vsub.f32 %v485, %v556
  %v646 = vsub.f32 %v485, %v560
  %v647 = vsub.f32 %v485, %v564
  %v648 = vsub.f32 %v485, %v568
  %v649 = vsub.f32 %v490, %v556
  %v650 = vsub.f32 %v490, %v560
  %v651 = vsub.f32 %v490, %v564
  %v652 = vsub.f32 %v490, %v568
  %v653 = vsub.f32 %v495, %v556
  %v654 = vsub.f32 %v495, %v560
  %v655 = vsub.f32 %v495, %v564
  %v656 = vsub.f32 %v495, %v568
  %v657 = vsub.f32 %v500, %v556
  %v658 = vsub.f32 %v500, %v560
  %v659 = vsub.f32 %v500, %v564
  %v660 = vsub.f32 %v500, %v568
  %v661 = vsub.f32 %v505, %v556
  %v662 = vsub.f32 %v505, %v560
  %v663 = vsub.f32 %v505, %v564
  %v664 = vsub.f32 %v505, %v568
  %v665 = vsub.f32 %v510, %v556
  %v666 = vsub.f32 %v510, %v560
  %v667 = vsub.f32 %v510, %v564
  %v668 = vsub.f32 %v510, %v568
  %v669 = vsub.f32 %v515, %v556
  %v670 = vsub.f32 %v515, %v560
  %v671 = vsub.f32 %v515, %v564
  %v672 = vsub.f32 %v515, %v568
  %v673 = vsub.f32 %v520, %v556
  %v674 = vsub.f32 %v520, %v560
  %v675 = vsub.f32 %v520, %v564
  %v676 = vsub.f32 %v520, %v568
  %v677 = vsub.f32 %v525, %v556
  %v678 = vsub.f32 %v525, %v560
  %v679 = vsub.f32 %v525, %v564
  %v680 = vsub.f32 %v525, %v568
  %v681 = vsub.f32 %v530, %v556
  %v682 = vsub.f32 %v530, %v560
  %v683 = vsub.f32 %v530, %v564
  %v684 = vsub.f32 %v530, %v568
  %v685 = vsub.f32 %v535, %v556
  %v686 = vsub.f32 %v535, %v560
  %v687 = vsub.f32 %v535, %v564
  %v688 = vsub.f32 %v535, %v568
  %v689 = vsub.f32 %v540, %v556
  %v690 = vsub.f32 %v540, %v560
  %v691 = vsub.f32 %v540, %v564
  %v692 = vsub.f32 %v540, %v568
  %v693 = vsub.f32 %v545, %v556
  %v694 = vsub.f32 %v545, %v560
  %v695 = vsub.f32 %v545, %v564
  %v696 = vsub.f32 %v545, %v568
  %v697 = vsub.f32 %v550, %v556
  %v698 = vsub.f32 %v550, %v560
  %v699 = vsub.f32 %v550, %v564
  %v700 = vsub.f32 %v550, %v568
  %v701 = vmul.f32 %v231, %v231
  %v702 = vmul.f32 %v232, %v232
  %v703 = vmul.f32 %v233, %v233
  %v704 = vmul.f32 %v234, %v234
  %v705 = vmul.f32 %v235, %v235
  %v706 = vmul.f32 %v236, %v236
  %v707 = vmul.f32 %v237, %v237
  %v708 = vmul.f32 %v238, %v238
  %v709 = vmul.f32 %v239, %v239
  %v710 = vmul.f32 %v240, %v240
  %v711 = vmul.f32 %v241, %v241
  %v712 = vmul.f32 %v242, %v242
  %v713 = vmul.f32 %v243, %v243
  %v714 = vmul.f32 %v244, %v244
  %v715 = vmul.f32 %v245, %v245
  %v716 = vmul.f32 %v246, %v246
  %v717 = vmul.f32 %v247, %v247
  %v718 = vmul.f32 %v248, %v248
  %v719 = vmul.f32 %v249, %v249
  %v720 = vmul.f32 %v250, %v250
  %v721 = vmul.f32 %v251, %v251
  %v722 = vmul.f32 %v252, %v252
  %v723 = vmul.f32 %v253, %v253
  %v724 = vmul.f32 %v254, %v254
  %v725 = vmul.f32 %v255, %v255
  %v726 = vmul.f32 %v256, %v256
  %v727 = vmul.f32 %v257, %v257
  %v728 = vmul.f32 %v258, %v258
  %v729 = vmul.f32 %v259, %v259
  %v730 = vmul.f32 %v260, %v260
  %v731 = vmul.f32 %v261, %v261
  %v732 = vmul.f32 %v262, %v262
  %v733 = vmul.f32 %v263, %v263
  %v734 = vmul.f32 %v264, %v264
  %v735 = vmul.f32 %v265, %v265
  %v736 = vmul.f32 %v266, %v266
  %v737 = vmul.f32 %v267, %v267
  %v738 = vmul.f32 %v268, %v268
  %v739 = vmul.f32 %v269, %v269
  %v740 = vmul.f32 %v270, %v270
  %v741 = vmul.f32 %v271, %v271
  %v742 = vmul.f32 %v272, %v272
  %v743 = vmul.f32 %v273, %v273
  %v744 = vmul.f32 %v274, %v274
  %v745 = vmul.f32 %v275, %v275
  %v746 = vmul.f32 %v276, %v276
  %v747 = vmul.f32 %v277, %v277
  %v748 = vmul.f32 %v278, %v278
  %v749 = vmul.f32 %v279, %v279
  %v750 = vmul.f32 %v280, %v280
  %v751 = vmul.f32 %v281, %v281
  %v752 = vmul.f32 %v282, %v282
  %v753 = vmul.f32 %v283, %v283
  %v754 = vmul.f32 %v284, %v284
  %v755 = vmul.f32 %v285, %v285
  %v756 = vmul.f32 %v286, %v286
  %v757 = vmul.f32 %v287, %v287
  %v758 = vmul.f32 %v288, %v288
  %v759 = vmul.f32 %v289, %v289
  %v760 = vmul.f32 %v290, %v290
  %v761 = vmul.f32 %v291, %v291
  %v762 = vmul.f32 %v292, %v292
  %v763 = vmul.f32 %v293, %v293
  %v764 = vmul.f32 %v294, %v294
  %v765 = vmul.f32 %v295, %v295
  %v766 = vmul.f32 %v296, %v296
  %v767 = vmul.f32 %v297, %v297
  %v768 = vmul.f32 %v298, %v298
  %v769 = vmul.f32 %v299, %v299
  %v770 = vmul.f32 %v300, %v300
  %v771 = vmul.f32 %v301, %v301
  %v772 = vmul.f32 %v302, %v302
  %v773 = vmul.f32 %v303, %v303
  %v774 = vmul.f32 %v304, %v304
  %v775 = vmul.f32 %v305, %v305
  %v776 = vmul.f32 %v306, %v306
  %v777 = vmul.f32 %v307, %v307
  %v778 = vmul.f32 %v308, %v308
  %v779 = vmul.f32 %v309, %v309
  %v780 = vmul.f32 %v310, %v310
  %v781 = vmul.f32 %v311, %v311
  %v782 = vmul.f32 %v312, %v312
  %v783 = vmul.f32 %v313, %v313
  %v784 = vmul.f32 %v314, %v314
  %v785 = vmul.f32 %v315, %v315
  %v786 = vmul.f32 %v316, %v316
  %v787 = vmul.f32 %v317, %v317
  %v788 = vmul.f32 %v318, %v318
  %v789 = vmul.f32 %v319, %v319
  %v790 = vmul.f32 %v320, %v320
  %v791 = vmul.f32 %v321, %v321
  %v792 = vmul.f32 %v322, %v322
  %v793 = vmul.f32 %v323, %v323
  %v794 = vmul.f32 %v324, %v324
  %v795 = vmul.f32 %v325, %v325
  %v796 = vmul.f32 %v326, %v326
  %v797 = vmul.f32 %v327, %v327
  %v798 = vmul.f32 %v328, %v328
  %v799 = vmul.f32 %v329, %v329
  %v800 = vmul.f32 %v330, %v330
  %v801 = vmul.f32 %v331, %v331
  %v802 = vmul.f32 %v332, %v332
  %v803 = vmul.f32 %v333, %v333
  %v804 = vmul.f32 %v334, %v334
  %v805 = vmul.f32 %v335, %v335
  %v806 = vmul.f32 %v336, %v336
  %v807 = vmul.f32 %v337, %v337
  %v808 = vmul.f32 %v338, %v338
  %v809 = vmul.f32 %v339, %v339
  %v810 = vmul.f32 %v340, %v340
  %v811 = vmul.f32 %v341, %v341
  %v812 = vmul.f32 %v342, %v342
  %v813 = vmul.f32 %v343, %v343
  %v814 = vmul.f32 %v344, %v344
  %v815 = vmul.f32 %v345, %v345
  %v816 = vmul.f32 %v346, %v346
  %v817 = vmul.f32 %v347, %v347
  %v818 = vmul.f32 %v348, %v348
  %v819 = vmul.f32 %v349, %v349
  %v820 = vmul.f32 %v350, %v350
  %v821 = vmul.f32 %v351, %v351
  %v822 = vmul.f32 %v352, %v352
  %v823 = vmul.f32 %v353, %v353
  %v824 = vmul.f32 %v354, %v354
  %v825 = vmul.f32 %v355, %v355
  %v826 = vmul.f32 %v356, %v356
  %v827 = vmul.f32 %v357, %v357
  %v828 = vmul.f32 %v358, %v358
  %v829 = vmul.f32 %v573, %v573
  %v830 = vmul.f32 %v574, %v574
  %v831 = vmul.f32 %v575, %v575
  %v832 = vmul.f32 %v576, %v576
  %v833 = vmul.f32 %v577, %v577
  %v834 = vmul.f32 %v578, %v578
  %v835 = vmul.f32 %v579, %v579
  %v836 = vmul.f32 %v580, %v580
  %v837 = vmul.f32 %v581, %v581
  %v838 = vmul.f32 %v582, %v582
  %v839 = vmul.f32 %v583, %v583
  %v840 = vmul.f32 %v584, %v584
  %v841 = vmul.f32 %v585, %v585
  %v842 = vmul.f32 %v586, %v586
  %v843 = vmul.f32 %v587, %v587
  %v844 = vmul.f32 %v588, %v588
  %v845 = vmul.f32 %v589, %v589
  %v846 = vmul.f32 %v590, %v590
  %v847 = vmul.f32 %v591, %v591
  %v848 = vmul.f32 %v592, %v592
  %v849 = vmul.f32 %v593, %v593
  %v850 = vmul.f32 %v594, %v594
  %v851 = vmul.f32 %v595, %v595
  %v852 = vmul.f32 %v596, %v596
  %v853 = vmul.f32 %v597, %v597
  %v854 = vmul.f32 %v598, %v598
  %v855 = vmul.f32 %v599, %v599
  %v856 = vmul.f32 %v600, %v600
  %v857 = vmul.f32 %v601, %v601
  %v858 = vmul.f32 %v602, %v602
  %v859 = vmul.f32 %v603, %v603
  %v860 = vmul.f32 %v604, %v604
  %v861 = vmul.f32 %v605, %v605
  %v862 = vmul.f32 %v606, %v606
  %v863 = vmul.f32 %v607, %v607
  %v864 = vmul.f32 %v608, %v608
  %v865 = vmul.f32 %v609, %v609
  %v866 = vmul.f32 %v610, %v610
  %v867 = vmul.f32 %v611, %v611
  %v868 = vmul.f32 %v612, %v612
  %v869 = vmul.f32 %v613, %v613
  %v870 = vmul.f32 %v614, %v614
  %v871 = vmul.f32 %v615, %v615
  %v872 = vmul.f32 %v616, %v616
  %v873 = vmul.f32 %v617, %v617
  %v874 = vmul.f32 %v618, %v618
  %v875 = vmul.f32 %v619, %v619
  %v876 = vmul.f32 %v620, %v620
  %v877 = vmul.f32 %v621, %v621
  %v878 = vmul.f32 %v622, %v622
  %v879 = vmul.f32 %v623, %v623
  %v880 = vmul.f32 %v624, %v624
  %v881 = vmul.f32 %v625, %v625
  %v882 = vmul.f32 %v626, %v626
  %v883 = vmul.f32 %v627, %v627
  %v884 = vmul.f32 %v628, %v628
  %v885 = vmul.f32 %v629, %v629
  %v886 = vmul.f32 %v630, %v630
  %v887 = vmul.f32 %v631, %v631
  %v888 = vmul.f32 %v632, %v632
  %v889 = vmul.f32 %v633, %v633
  %v890 = vmul.f32 %v634, %v634
  %v891 = vmul.f32 %v635, %v635
  %v892 = vmul.f32 %v636, %v636
  %v893 = vmul.f32 %v637, %v637
  %v894 = vmul.f32 %v638, %v638
  %v895 = vmul.f32 %v639, %v639
  %v896 = vmul.f32 %v640, %v640
  %v897 = vmul.f32 %v641, %v641
  %v898 = vmul.f32 %v642, %v642
  %v899 = vmul.f32 %v643, %v643
  %v900 = vmul.f32 %v644, %v644
  %v901 = vmul.f32 %v645, %v645
  %v902 = vmul.f32 %v646, %v646
  %v903 = vmul.f32 %v647, %v647
  %v904 = vmul.f32 %v648, %v648
  %v905 = vmul.f32 %v649, %v649
  %v906 = vmul.f32 %v650, %v650
  %v907 = vmul.f32 %v651, %v651
  %v908 = vmul.f32 %v652, %v652
  %v909 = vmul.f32 %v653, %v653
  %v910 = vmul.f32 %v654, %v654
  %v911 = vmul.f32 %v655, %v655
  %v912 = vmul.f32 %v656, %v656
  %v913 = vmul.f32 %v657, %v657
  %v914 = vmul.f32 %v658, %v658
  %v915 = vmul.f32 %v659, %v659
  %v916 = vmul.f32 %v660, %v660
  %v917 = vmul.f32 %v661, %v661
  %v918 = vmul.f32 %v662, %v662
  %v919 = vmul.f32 %v663, %v663
  %v920 = vmul.f32 %v664, %v664
  %v921 = vmul.f32 %v665, %v665
  %v922 = vmul.f32 %v666, %v666
  %v923 = vmul.f32 %v667, %v667
  %v924 = vmul.f32 %v668, %v668
  %v925 = vmul.f32 %v669, %v669
  %v926 = vmul.f32 %v670, %v670
  %v927 = vmul.f32 %v671, %v671
  %v928 = vmul.f32 %v672, %v672
  %v929 = vmul.f32 %v673, %v673
  %v930 = vmul.f32 %v674, %v674
  %v931 = vmul.f32 %v675, %v675
  %v932 = vmul.f32 %v676, %v676
  %v933 = vmul.f32 %v677, %v677
  %v934 = vmul.f32 %v678, %v678
  %v935 = vmul.f32 %v679, %v679
  %v936 = vmul.f32 %v680, %v680
  %v937 = vmul.f32 %v681, %v681
  %v938 = vmul.f32 %v682, %v682
  %v939 = vmul.f32 %v683, %v683
  %v940 = vmul.f32 %v684, %v684
  %v941 = vmul.f32 %v685, %v685
  %v942 = vmul.f32 %v686, %v686
  %v943 = vmul.f32 %v687, %v687
  %v944 = vmul.f32 %v688, %v688
  %v945 = vmul.f32 %v689, %v689
  %v946 = vmul.f32 %v690, %v690
  %v947 = vmul.f32 %v691, %v691
  %v948 = vmul.f32 %v692, %v692
  %v949 = vmul.f32 %v693, %v693
  %v950 = vmul.f32 %v694, %v694
  %v951 = vmul.f32 %v695, %v695
  %v952 = vmul.f32 %v696, %v696
  %v953 = vmul.f32 %v697, %v697
  %v954 = vmul.f32 %v698, %v698
  %v955 = vmul.f32 %v699, %v699
  %v956 = vmul.f32 %v700, %v700
  %v957 = vadd.f32 %v701, %v829
  %v958 = vadd.f32 %v702, %v830
  %v959 = vadd.f32 %v703, %v831
  %v960 = vadd.f32 %v704, %v832
  %v961 = vadd.f32 %v705, %v833
  %v962 = vadd.f32 %v706, %v834
  %v963 = vadd.f32 %v707, %v835
  %v964 = vadd.f32 %v708, %v836
  %v965 = vadd.f32 %v709, %v837
  %v966 = vadd.f32 %v710, %v838
  %v967 = vadd.f32 %v711, %v839
  %v968 = vadd.f32 %v712, %v840
  %v969 = vadd.f32 %v713, %v841
  %v970 = vadd.f32 %v714, %v842
  %v971 = vadd.f32 %v715, %v843
  %v972 = vadd.f32 %v716, %v844
  %v973 = vadd.f32 %v717, %v845
  %v974 = vadd.f32 %v718, %v846
  %v975 = vadd.f32 %v719, %v847
  %v976 = vadd.f32 %v720, %v848
  %v977 = vadd.f32 %v721, %v849
  %v978 = vadd.f32 %v722, %v850
  %v979 = vadd.f32 %v723, %v851
  %v980 = vadd.f32 %v724, %v852
  %v981 = vadd.f32 %v725, %v853
  %v982 = vadd.f32 %v726, %v854
  %v983 = vadd.f32 %v727, %v855
  %v984 = vadd.f32 %v728, %v856
  %v985 = vadd.f32 %v729, %v857
  %v986 = vadd.f32 %v730, %v858
  %v987 = vadd.f32 %v731, %v859
  %v988 = vadd.f32 %v732, %v860
  %v989 = vadd.f32 %v733, %v861
  %v990 = vadd.f32 %v734, %v862
  %v991 = vadd.f32 %v735, %v863
  %v992 = vadd.f32 %v736, %v864
  %v993 = vadd.f32 %v737, %v865
  %v994 = vadd.f32 %v738, %v866
  %v995 = vadd.f32 %v739, %v867
  %v996 = vadd.f32 %v740, %v868
  %v997 = vadd.f32 %v741, %v869
  %v998 = vadd.f32 %v742, %v870
  %v999 = vadd.f32 %v743, %v871
  %v1000 = vadd.f32 %v744, %v872
  %v1001 = vadd.f32 %v745, %v873
  %v1002 = vadd.f32 %v746, %v874
  %v1003 = vadd.f32 %v747, %v875
  %v1004 = vadd.f32 %v748, %v876
  %v1005 = vadd.f32 %v749, %v877
  %v1006 = vadd.f32 %v750, %v878
  %v1007 = vadd.f32 %v751, %v879
  %v1008 = vadd.f32 %v752, %v880
  %v1009 = vadd.f32 %v753, %v881
  %v1010 = vadd.f32 %v754, %v882
  %v1011 = vadd.f32 %v755, %v883
  %v1012 = vadd.f32 %v756, %v884
  %v1013 = vadd.f32 %v757, %v885
  %v1014 = vadd.f32 %v758, %v886
  %v1015 = vadd.f32 %v759, %v887
  %v1016 = vadd.f32 %v760, %v888
  %v1017 = vadd.f32 %v761, %v889
  %v1018 = vadd.f32 %v762, %v890
  %v1019 = vadd.f32 %v763, %v891
  %v1020 = vadd.f32 %v764, %v892
  %v1021 = vadd.f32 %v765, %v893
  %v1022 = vadd.f32 %v766, %v894
  %v1023 = vadd.f32 %v767, %v895
  %v1024 = vadd.f32 %v768, %v896
  %v1025 = vadd.f32 %v769, %v897
  %v1026 = vadd.f32 %v770, %v898
  %v1027 = vadd.f32 %v771, %v899
  %v1028 = vadd.f32 %v772, %v900
  %v1029 = vadd.f32 %v773, %v901
  %v1030 = vadd.f32 %v774, %v902
  %v1031 = vadd.f32 %v775, %v903
  %v1032 = vadd.f32 %v776, %v904
  %v1033 = vadd.f32 %v777, %v905
  %v1034 = vadd.f32 %v778, %v906
  %v1035 = vadd.f32 %v779, %v907
  %v1036 = vadd.f32 %v780, %v908
  %v1037 = vadd.f32 %v781, %v909
  %v1038 = vadd.f32 %v782, %v910
  %v1039 = vadd.f32 %v783, %v911
  %v1040 = vadd.f32 %v784, %v912
  %v1041 = vadd.f32 %v785, %v913
  %v1042 = vadd.f32 %v786, %v914
  %v1043 = vadd.f32 %v787, %v915
  %v1044 = vadd.f32 %v788, %v916
  %v1045 = vadd.f32 %v789, %v917
  %v1046 = vadd.f32 %v790, %v918
  %v1047 = vadd.f32 %v791, %v919
  %v1048 = vadd.f32 %v792, %v920
  %v1049 = vadd.f32 %v793, %v921
  %v1050 = vadd.f32 %v794, %v922
  %v1051 = vadd.f32 %v795, %v923
  %v1052 = vadd.f32 %v796, %v924
  %v1053 = vadd.f32 %v797, %v925
  %v1054 = vadd.f32 %v798, %v926
  %v1055 = vadd.f32 %v799, %v927
  %v1056 = vadd.f32 %v800, %v928
  %v1057 = vadd.f32 %v801, %v929
  %v1058 = vadd.f32 %v802, %v930
  %v1059 = vadd.f32 %v803, %v931
  %v1060 = vadd.f32 %v804, %v932
  %v1061 = vadd.f32 %v805, %v933
  %v1062 = vadd.f32 %v806, %v934
  %v1063 = vadd.f32 %v807, %v935
  %v1064 = vadd.f32 %v808, %v936
  %v1065 = vadd.f32 %v809, %v937
  %v1066 = vadd.f32 %v810, %v938
  %v1067 = vadd.f32 %v811, %v939
  %v1068 = vadd.f32 %v812, %v940
  %v1069 = vadd.f32 %v813, %v941
  %v1070 = vadd.f32 %v814, %v942
  %v1071 = vadd.f32 %v815, %v943
  %v1072 = vadd.f32 %v816, %v944
  %v1073 = vadd.f32 %v817, %v945
  %v1074 = vadd.f32 %v818, %v946
  %v1075 = vadd.f32 %v819, %v947
  %v1076 = vadd.f32 %v820, %v948
  %v1077 = vadd.f32 %v821, %v949
  %v1078 = vadd.f32 %v822, %v950
  %v1079 = vadd.f32 %v823, %v951
  %v1080 = vadd.f32 %v824, %v952
  %v1081 = vadd.f32 %v825, %v953
  %v1082 = vadd.f32 %v826, %v954
  %v1083 = vadd.f32 %v827, %v955
  %v1084 = vadd.f32 %v828, %v956
  %v1085 = vrsqrt.pop %v957
  %v1086 = vmul.f32 %v957, %v1085
  %vm1087 = vcmp.eq.f32.partialorder %v957, inf
  %v1088 = vsel %vm1087, %v957, %v1086
  %vm1089 = vcmp.eq.f32.partialorder %v957, 0.0
  %v1090 = vand.u32 %v957, 2147483648
  %v1091 = vsel %vm1089, %v1090, %v1088
  %v1092 = vrsqrt.pop %v958
  %v1093 = vmul.f32 %v958, %v1092
  %vm1094 = vcmp.eq.f32.partialorder %v958, inf
  %v1095 = vsel %vm1094, %v958, %v1093
  %vm1096 = vcmp.eq.f32.partialorder %v958, 0.0
  %v1097 = vand.u32 %v958, 2147483648
  %v1098 = vsel %vm1096, %v1097, %v1095
  %v1099 = vrsqrt.pop %v959
  %v1100 = vmul.f32 %v959, %v1099
  %vm1101 = vcmp.eq.f32.partialorder %v959, inf
  %v1102 = vsel %vm1101, %v959, %v1100
  %vm1103 = vcmp.eq.f32.partialorder %v959, 0.0
  %v1104 = vand.u32 %v959, 2147483648
  %v1105 = vsel %vm1103, %v1104, %v1102
  %v1106 = vrsqrt.pop %v960
  %v1107 = vmul.f32 %v960, %v1106
  %vm1108 = vcmp.eq.f32.partialorder %v960, inf
  %v1109 = vsel %vm1108, %v960, %v1107
  %vm1110 = vcmp.eq.f32.partialorder %v960, 0.0
  %v1111 = vand.u32 %v960, 2147483648
  %v1112 = vsel %vm1110, %v1111, %v1109
  %v1113 = vrsqrt.pop %v961
  %v1114 = vmul.f32 %v961, %v1113
  %vm1115 = vcmp.eq.f32.partialorder %v961, inf
  %v1116 = vsel %vm1115, %v961, %v1114
  %vm1117 = vcmp.eq.f32.partialorder %v961, 0.0
  %v1118 = vand.u32 %v961, 2147483648
  %v1119 = vsel %vm1117, %v1118, %v1116
  %v1120 = vrsqrt.pop %v962
  %v1121 = vmul.f32 %v962, %v1120
  %vm1122 = vcmp.eq.f32.partialorder %v962, inf
  %v1123 = vsel %vm1122, %v962, %v1121
  %vm1124 = vcmp.eq.f32.partialorder %v962, 0.0
  %v1125 = vand.u32 %v962, 2147483648
  %v1126 = vsel %vm1124, %v1125, %v1123
  %v1127 = vrsqrt.pop %v963
  %v1128 = vmul.f32 %v963, %v1127
  %vm1129 = vcmp.eq.f32.partialorder %v963, inf
  %v1130 = vsel %vm1129, %v963, %v1128
  %vm1131 = vcmp.eq.f32.partialorder %v963, 0.0
  %v1132 = vand.u32 %v963, 2147483648
  %v1133 = vsel %vm1131, %v1132, %v1130
  %v1134 = vrsqrt.pop %v964
  %v1135 = vmul.f32 %v964, %v1134
  %vm1136 = vcmp.eq.f32.partialorder %v964, inf
  %v1137 = vsel %vm1136, %v964, %v1135
  %vm1138 = vcmp.eq.f32.partialorder %v964, 0.0
  %v1139 = vand.u32 %v964, 2147483648
  %v1140 = vsel %vm1138, %v1139, %v1137
  %v1141 = vrsqrt.pop %v965
  %v1142 = vmul.f32 %v965, %v1141
  %vm1143 = vcmp.eq.f32.partialorder %v965, inf
  %v1144 = vsel %vm1143, %v965, %v1142
  %vm1145 = vcmp.eq.f32.partialorder %v965, 0.0
  %v1146 = vand.u32 %v965, 2147483648
  %v1147 = vsel %vm1145, %v1146, %v1144
  %v1148 = vrsqrt.pop %v966
  %v1149 = vmul.f32 %v966, %v1148
  %vm1150 = vcmp.eq.f32.partialorder %v966, inf
  %v1151 = vsel %vm1150, %v966, %v1149
  %vm1152 = vcmp.eq.f32.partialorder %v966, 0.0
  %v1153 = vand.u32 %v966, 2147483648
  %v1154 = vsel %vm1152, %v1153, %v1151
  %v1155 = vrsqrt.pop %v967
  %v1156 = vmul.f32 %v967, %v1155
  %vm1157 = vcmp.eq.f32.partialorder %v967, inf
  %v1158 = vsel %vm1157, %v967, %v1156
  %vm1159 = vcmp.eq.f32.partialorder %v967, 0.0
  %v1160 = vand.u32 %v967, 2147483648
  %v1161 = vsel %vm1159, %v1160, %v1158
  %v1162 = vrsqrt.pop %v968
  %v1163 = vmul.f32 %v968, %v1162
  %vm1164 = vcmp.eq.f32.partialorder %v968, inf
  %v1165 = vsel %vm1164, %v968, %v1163
  %vm1166 = vcmp.eq.f32.partialorder %v968, 0.0
  %v1167 = vand.u32 %v968, 2147483648
  %v1168 = vsel %vm1166, %v1167, %v1165
  %v1169 = vrsqrt.pop %v969
  %v1170 = vmul.f32 %v969, %v1169
  %vm1171 = vcmp.eq.f32.partialorder %v969, inf
  %v1172 = vsel %vm1171, %v969, %v1170
  %vm1173 = vcmp.eq.f32.partialorder %v969, 0.0
  %v1174 = vand.u32 %v969, 2147483648
  %v1175 = vsel %vm1173, %v1174, %v1172
  %v1176 = vrsqrt.pop %v970
  %v1177 = vmul.f32 %v970, %v1176
  %vm1178 = vcmp.eq.f32.partialorder %v970, inf
  %v1179 = vsel %vm1178, %v970, %v1177
  %vm1180 = vcmp.eq.f32.partialorder %v970, 0.0
  %v1181 = vand.u32 %v970, 2147483648
  %v1182 = vsel %vm1180, %v1181, %v1179
  %v1183 = vrsqrt.pop %v971
  %v1184 = vmul.f32 %v971, %v1183
  %vm1185 = vcmp.eq.f32.partialorder %v971, inf
  %v1186 = vsel %vm1185, %v971, %v1184
  %vm1187 = vcmp.eq.f32.partialorder %v971, 0.0
  %v1188 = vand.u32 %v971, 2147483648
  %v1189 = vsel %vm1187, %v1188, %v1186
  %v1190 = vrsqrt.pop %v972
  %v1191 = vmul.f32 %v972, %v1190
  %vm1192 = vcmp.eq.f32.partialorder %v972, inf
  %v1193 = vsel %vm1192, %v972, %v1191
  %vm1194 = vcmp.eq.f32.partialorder %v972, 0.0
  %v1195 = vand.u32 %v972, 2147483648
  %v1196 = vsel %vm1194, %v1195, %v1193
  %v1197 = vrsqrt.pop %v973
  %v1198 = vmul.f32 %v973, %v1197
  %vm1199 = vcmp.eq.f32.partialorder %v973, inf
  %v1200 = vsel %vm1199, %v973, %v1198
  %vm1201 = vcmp.eq.f32.partialorder %v973, 0.0
  %v1202 = vand.u32 %v973, 2147483648
  %v1203 = vsel %vm1201, %v1202, %v1200
  %v1204 = vrsqrt.pop %v974
  %v1205 = vmul.f32 %v974, %v1204
  %vm1206 = vcmp.eq.f32.partialorder %v974, inf
  %v1207 = vsel %vm1206, %v974, %v1205
  %vm1208 = vcmp.eq.f32.partialorder %v974, 0.0
  %v1209 = vand.u32 %v974, 2147483648
  %v1210 = vsel %vm1208, %v1209, %v1207
  %v1211 = vrsqrt.pop %v975
  %v1212 = vmul.f32 %v975, %v1211
  %vm1213 = vcmp.eq.f32.partialorder %v975, inf
  %v1214 = vsel %vm1213, %v975, %v1212
  %vm1215 = vcmp.eq.f32.partialorder %v975, 0.0
  %v1216 = vand.u32 %v975, 2147483648
  %v1217 = vsel %vm1215, %v1216, %v1214
  %v1218 = vrsqrt.pop %v976
  %v1219 = vmul.f32 %v976, %v1218
  %vm1220 = vcmp.eq.f32.partialorder %v976, inf
  %v1221 = vsel %vm1220, %v976, %v1219
  %vm1222 = vcmp.eq.f32.partialorder %v976, 0.0
  %v1223 = vand.u32 %v976, 2147483648
  %v1224 = vsel %vm1222, %v1223, %v1221
  %v1225 = vrsqrt.pop %v977
  %v1226 = vmul.f32 %v977, %v1225
  %vm1227 = vcmp.eq.f32.partialorder %v977, inf
  %v1228 = vsel %vm1227, %v977, %v1226
  %vm1229 = vcmp.eq.f32.partialorder %v977, 0.0
  %v1230 = vand.u32 %v977, 2147483648
  %v1231 = vsel %vm1229, %v1230, %v1228
  %v1232 = vrsqrt.pop %v978
  %v1233 = vmul.f32 %v978, %v1232
  %vm1234 = vcmp.eq.f32.partialorder %v978, inf
  %v1235 = vsel %vm1234, %v978, %v1233
  %vm1236 = vcmp.eq.f32.partialorder %v978, 0.0
  %v1237 = vand.u32 %v978, 2147483648
  %v1238 = vsel %vm1236, %v1237, %v1235
  %v1239 = vrsqrt.pop %v979
  %v1240 = vmul.f32 %v979, %v1239
  %vm1241 = vcmp.eq.f32.partialorder %v979, inf
  %v1242 = vsel %vm1241, %v979, %v1240
  %vm1243 = vcmp.eq.f32.partialorder %v979, 0.0
  %v1244 = vand.u32 %v979, 2147483648
  %v1245 = vsel %vm1243, %v1244, %v1242
  %v1246 = vrsqrt.pop %v980
  %v1247 = vmul.f32 %v980, %v1246
  %vm1248 = vcmp.eq.f32.partialorder %v980, inf
  %v1249 = vsel %vm1248, %v980, %v1247
  %vm1250 = vcmp.eq.f32.partialorder %v980, 0.0
  %v1251 = vand.u32 %v980, 2147483648
  %v1252 = vsel %vm1250, %v1251, %v1249
  %v1253 = vrsqrt.pop %v981
  %v1254 = vmul.f32 %v981, %v1253
  %vm1255 = vcmp.eq.f32.partialorder %v981, inf
  %v1256 = vsel %vm1255, %v981, %v1254
  %vm1257 = vcmp.eq.f32.partialorder %v981, 0.0
  %v1258 = vand.u32 %v981, 2147483648
  %v1259 = vsel %vm1257, %v1258, %v1256
  %v1260 = vrsqrt.pop %v982
  %v1261 = vmul.f32 %v982, %v1260
  %vm1262 = vcmp.eq.f32.partialorder %v982, inf
  %v1263 = vsel %vm1262, %v982, %v1261
  %vm1264 = vcmp.eq.f32.partialorder %v982, 0.0
  %v1265 = vand.u32 %v982, 2147483648
  %v1266 = vsel %vm1264, %v1265, %v1263
  %v1267 = vrsqrt.pop %v983
  %v1268 = vmul.f32 %v983, %v1267
  %vm1269 = vcmp.eq.f32.partialorder %v983, inf
  %v1270 = vsel %vm1269, %v983, %v1268
  %vm1271 = vcmp.eq.f32.partialorder %v983, 0.0
  %v1272 = vand.u32 %v983, 2147483648
  %v1273 = vsel %vm1271, %v1272, %v1270
  %v1274 = vrsqrt.pop %v984
  %v1275 = vmul.f32 %v984, %v1274
  %vm1276 = vcmp.eq.f32.partialorder %v984, inf
  %v1277 = vsel %vm1276, %v984, %v1275
  %vm1278 = vcmp.eq.f32.partialorder %v984, 0.0
  %v1279 = vand.u32 %v984, 2147483648
  %v1280 = vsel %vm1278, %v1279, %v1277
  %v1281 = vrsqrt.pop %v985
  %v1282 = vmul.f32 %v985, %v1281
  %vm1283 = vcmp.eq.f32.partialorder %v985, inf
  %v1284 = vsel %vm1283, %v985, %v1282
  %vm1285 = vcmp.eq.f32.partialorder %v985, 0.0
  %v1286 = vand.u32 %v985, 2147483648
  %v1287 = vsel %vm1285, %v1286, %v1284
  %v1288 = vrsqrt.pop %v986
  %v1289 = vmul.f32 %v986, %v1288
  %vm1290 = vcmp.eq.f32.partialorder %v986, inf
  %v1291 = vsel %vm1290, %v986, %v1289
  %vm1292 = vcmp.eq.f32.partialorder %v986, 0.0
  %v1293 = vand.u32 %v986, 2147483648
  %v1294 = vsel %vm1292, %v1293, %v1291
  %v1295 = vrsqrt.pop %v987
  %v1296 = vmul.f32 %v987, %v1295
  %vm1297 = vcmp.eq.f32.partialorder %v987, inf
  %v1298 = vsel %vm1297, %v987, %v1296
  %vm1299 = vcmp.eq.f32.partialorder %v987, 0.0
  %v1300 = vand.u32 %v987, 2147483648
  %v1301 = vsel %vm1299, %v1300, %v1298
  %v1302 = vrsqrt.pop %v988
  %v1303 = vmul.f32 %v988, %v1302
  %vm1304 = vcmp.eq.f32.partialorder %v988, inf
  %v1305 = vsel %vm1304, %v988, %v1303
  %vm1306 = vcmp.eq.f32.partialorder %v988, 0.0
  %v1307 = vand.u32 %v988, 2147483648
  %v1308 = vsel %vm1306, %v1307, %v1305
  %v1309 = vrsqrt.pop %v989
  %v1310 = vmul.f32 %v989, %v1309
  %vm1311 = vcmp.eq.f32.partialorder %v989, inf
  %v1312 = vsel %vm1311, %v989, %v1310
  %vm1313 = vcmp.eq.f32.partialorder %v989, 0.0
  %v1314 = vand.u32 %v989, 2147483648
  %v1315 = vsel %vm1313, %v1314, %v1312
  %v1316 = vrsqrt.pop %v990
  %v1317 = vmul.f32 %v990, %v1316
  %vm1318 = vcmp.eq.f32.partialorder %v990, inf
  %v1319 = vsel %vm1318, %v990, %v1317
  %vm1320 = vcmp.eq.f32.partialorder %v990, 0.0
  %v1321 = vand.u32 %v990, 2147483648
  %v1322 = vsel %vm1320, %v1321, %v1319
  %v1323 = vrsqrt.pop %v991
  %v1324 = vmul.f32 %v991, %v1323
  %vm1325 = vcmp.eq.f32.partialorder %v991, inf
  %v1326 = vsel %vm1325, %v991, %v1324
  %vm1327 = vcmp.eq.f32.partialorder %v991, 0.0
  %v1328 = vand.u32 %v991, 2147483648
  %v1329 = vsel %vm1327, %v1328, %v1326
  %v1330 = vrsqrt.pop %v992
  %v1331 = vmul.f32 %v992, %v1330
  %vm1332 = vcmp.eq.f32.partialorder %v992, inf
  %v1333 = vsel %vm1332, %v992, %v1331
  %vm1334 = vcmp.eq.f32.partialorder %v992, 0.0
  %v1335 = vand.u32 %v992, 2147483648
  %v1336 = vsel %vm1334, %v1335, %v1333
  %v1337 = vrsqrt.pop %v993
  %v1338 = vmul.f32 %v993, %v1337
  %vm1339 = vcmp.eq.f32.partialorder %v993, inf
  %v1340 = vsel %vm1339, %v993, %v1338
  %vm1341 = vcmp.eq.f32.partialorder %v993, 0.0
  %v1342 = vand.u32 %v993, 2147483648
  %v1343 = vsel %vm1341, %v1342, %v1340
  %v1344 = vrsqrt.pop %v994
  %v1345 = vmul.f32 %v994, %v1344
  %vm1346 = vcmp.eq.f32.partialorder %v994, inf
  %v1347 = vsel %vm1346, %v994, %v1345
  %vm1348 = vcmp.eq.f32.partialorder %v994, 0.0
  %v1349 = vand.u32 %v994, 2147483648
  %v1350 = vsel %vm1348, %v1349, %v1347
  %v1351 = vrsqrt.pop %v995
  %v1352 = vmul.f32 %v995, %v1351
  %vm1353 = vcmp.eq.f32.partialorder %v995, inf
  %v1354 = vsel %vm1353, %v995, %v1352
  %vm1355 = vcmp.eq.f32.partialorder %v995, 0.0
  %v1356 = vand.u32 %v995, 2147483648
  %v1357 = vsel %vm1355, %v1356, %v1354
  %v1358 = vrsqrt.pop %v996
  %v1359 = vmul.f32 %v996, %v1358
  %vm1360 = vcmp.eq.f32.partialorder %v996, inf
  %v1361 = vsel %vm1360, %v996, %v1359
  %vm1362 = vcmp.eq.f32.partialorder %v996, 0.0
  %v1363 = vand.u32 %v996, 2147483648
  %v1364 = vsel %vm1362, %v1363, %v1361
  %v1365 = vrsqrt.pop %v997
  %v1366 = vmul.f32 %v997, %v1365
  %vm1367 = vcmp.eq.f32.partialorder %v997, inf
  %v1368 = vsel %vm1367, %v997, %v1366
  %vm1369 = vcmp.eq.f32.partialorder %v997, 0.0
  %v1370 = vand.u32 %v997, 2147483648
  %v1371 = vsel %vm1369, %v1370, %v1368
  %v1372 = vrsqrt.pop %v998
  %v1373 = vmul.f32 %v998, %v1372
  %vm1374 = vcmp.eq.f32.partialorder %v998, inf
  %v1375 = vsel %vm1374, %v998, %v1373
  %vm1376 = vcmp.eq.f32.partialorder %v998, 0.0
  %v1377 = vand.u32 %v998, 2147483648
  %v1378 = vsel %vm1376, %v1377, %v1375
  %v1379 = vrsqrt.pop %v999
  %v1380 = vmul.f32 %v999, %v1379
  %vm1381 = vcmp.eq.f32.partialorder %v999, inf
  %v1382 = vsel %vm1381, %v999, %v1380
  %vm1383 = vcmp.eq.f32.partialorder %v999, 0.0
  %v1384 = vand.u32 %v999, 2147483648
  %v1385 = vsel %vm1383, %v1384, %v1382
  %v1386 = vrsqrt.pop %v1000
  %v1387 = vmul.f32 %v1000, %v1386
  %vm1388 = vcmp.eq.f32.partialorder %v1000, inf
  %v1389 = vsel %vm1388, %v1000, %v1387
  %vm1390 = vcmp.eq.f32.partialorder %v1000, 0.0
  %v1391 = vand.u32 %v1000, 2147483648
  %v1392 = vsel %vm1390, %v1391, %v1389
  %v1393 = vrsqrt.pop %v1001
  %v1394 = vmul.f32 %v1001, %v1393
  %vm1395 = vcmp.eq.f32.partialorder %v1001, inf
  %v1396 = vsel %vm1395, %v1001, %v1394
  %vm1397 = vcmp.eq.f32.partialorder %v1001, 0.0
  %v1398 = vand.u32 %v1001, 2147483648
  %v1399 = vsel %vm1397, %v1398, %v1396
  %v1400 = vrsqrt.pop %v1002
  %v1401 = vmul.f32 %v1002, %v1400
  %vm1402 = vcmp.eq.f32.partialorder %v1002, inf
  %v1403 = vsel %vm1402, %v1002, %v1401
  %vm1404 = vcmp.eq.f32.partialorder %v1002, 0.0
  %v1405 = vand.u32 %v1002, 2147483648
  %v1406 = vsel %vm1404, %v1405, %v1403
  %v1407 = vrsqrt.pop %v1003
  %v1408 = vmul.f32 %v1003, %v1407
  %vm1409 = vcmp.eq.f32.partialorder %v1003, inf
  %v1410 = vsel %vm1409, %v1003, %v1408
  %vm1411 = vcmp.eq.f32.partialorder %v1003, 0.0
  %v1412 = vand.u32 %v1003, 2147483648
  %v1413 = vsel %vm1411, %v1412, %v1410
  %v1414 = vrsqrt.pop %v1004
  %v1415 = vmul.f32 %v1004, %v1414
  %vm1416 = vcmp.eq.f32.partialorder %v1004, inf
  %v1417 = vsel %vm1416, %v1004, %v1415
  %vm1418 = vcmp.eq.f32.partialorder %v1004, 0.0
  %v1419 = vand.u32 %v1004, 2147483648
  %v1420 = vsel %vm1418, %v1419, %v1417
  %v1421 = vrsqrt.pop %v1005
  %v1422 = vmul.f32 %v1005, %v1421
  %vm1423 = vcmp.eq.f32.partialorder %v1005, inf
  %v1424 = vsel %vm1423, %v1005, %v1422
  %vm1425 = vcmp.eq.f32.partialorder %v1005, 0.0
  %v1426 = vand.u32 %v1005, 2147483648
  %v1427 = vsel %vm1425, %v1426, %v1424
  %v1428 = vrsqrt.pop %v1006
  %v1429 = vmul.f32 %v1006, %v1428
  %vm1430 = vcmp.eq.f32.partialorder %v1006, inf
  %v1431 = vsel %vm1430, %v1006, %v1429
  %vm1432 = vcmp.eq.f32.partialorder %v1006, 0.0
  %v1433 = vand.u32 %v1006, 2147483648
  %v1434 = vsel %vm1432, %v1433, %v1431
  %v1435 = vrsqrt.pop %v1007
  %v1436 = vmul.f32 %v1007, %v1435
  %vm1437 = vcmp.eq.f32.partialorder %v1007, inf
  %v1438 = vsel %vm1437, %v1007, %v1436
  %vm1439 = vcmp.eq.f32.partialorder %v1007, 0.0
  %v1440 = vand.u32 %v1007, 2147483648
  %v1441 = vsel %vm1439, %v1440, %v1438
  %v1442 = vrsqrt.pop %v1008
  %v1443 = vmul.f32 %v1008, %v1442
  %vm1444 = vcmp.eq.f32.partialorder %v1008, inf
  %v1445 = vsel %vm1444, %v1008, %v1443
  %vm1446 = vcmp.eq.f32.partialorder %v1008, 0.0
  %v1447 = vand.u32 %v1008, 2147483648
  %v1448 = vsel %vm1446, %v1447, %v1445
  %v1449 = vrsqrt.pop %v1009
  %v1450 = vmul.f32 %v1009, %v1449
  %vm1451 = vcmp.eq.f32.partialorder %v1009, inf
  %v1452 = vsel %vm1451, %v1009, %v1450
  %vm1453 = vcmp.eq.f32.partialorder %v1009, 0.0
  %v1454 = vand.u32 %v1009, 2147483648
  %v1455 = vsel %vm1453, %v1454, %v1452
  %v1456 = vrsqrt.pop %v1010
  %v1457 = vmul.f32 %v1010, %v1456
  %vm1458 = vcmp.eq.f32.partialorder %v1010, inf
  %v1459 = vsel %vm1458, %v1010, %v1457
  %vm1460 = vcmp.eq.f32.partialorder %v1010, 0.0
  %v1461 = vand.u32 %v1010, 2147483648
  %v1462 = vsel %vm1460, %v1461, %v1459
  %v1463 = vrsqrt.pop %v1011
  %v1464 = vmul.f32 %v1011, %v1463
  %vm1465 = vcmp.eq.f32.partialorder %v1011, inf
  %v1466 = vsel %vm1465, %v1011, %v1464
  %vm1467 = vcmp.eq.f32.partialorder %v1011, 0.0
  %v1468 = vand.u32 %v1011, 2147483648
  %v1469 = vsel %vm1467, %v1468, %v1466
  %v1470 = vrsqrt.pop %v1012
  %v1471 = vmul.f32 %v1012, %v1470
  %vm1472 = vcmp.eq.f32.partialorder %v1012, inf
  %v1473 = vsel %vm1472, %v1012, %v1471
  %vm1474 = vcmp.eq.f32.partialorder %v1012, 0.0
  %v1475 = vand.u32 %v1012, 2147483648
  %v1476 = vsel %vm1474, %v1475, %v1473
  %v1477 = vrsqrt.pop %v1013
  %v1478 = vmul.f32 %v1013, %v1477
  %vm1479 = vcmp.eq.f32.partialorder %v1013, inf
  %v1480 = vsel %vm1479, %v1013, %v1478
  %vm1481 = vcmp.eq.f32.partialorder %v1013, 0.0
  %v1482 = vand.u32 %v1013, 2147483648
  %v1483 = vsel %vm1481, %v1482, %v1480
  %v1484 = vrsqrt.pop %v1014
  %v1485 = vmul.f32 %v1014, %v1484
  %vm1486 = vcmp.eq.f32.partialorder %v1014, inf
  %v1487 = vsel %vm1486, %v1014, %v1485
  %vm1488 = vcmp.eq.f32.partialorder %v1014, 0.0
  %v1489 = vand.u32 %v1014, 2147483648
  %v1490 = vsel %vm1488, %v1489, %v1487
  %v1491 = vrsqrt.pop %v1015
  %v1492 = vmul.f32 %v1015, %v1491
  %vm1493 = vcmp.eq.f32.partialorder %v1015, inf
  %v1494 = vsel %vm1493, %v1015, %v1492
  %vm1495 = vcmp.eq.f32.partialorder %v1015, 0.0
  %v1496 = vand.u32 %v1015, 2147483648
  %v1497 = vsel %vm1495, %v1496, %v1494
  %v1498 = vrsqrt.pop %v1016
  %v1499 = vmul.f32 %v1016, %v1498
  %vm1500 = vcmp.eq.f32.partialorder %v1016, inf
  %v1501 = vsel %vm1500, %v1016, %v1499
  %vm1502 = vcmp.eq.f32.partialorder %v1016, 0.0
  %v1503 = vand.u32 %v1016, 2147483648
  %v1504 = vsel %vm1502, %v1503, %v1501
  %v1505 = vrsqrt.pop %v1017
  %v1506 = vmul.f32 %v1017, %v1505
  %vm1507 = vcmp.eq.f32.partialorder %v1017, inf
  %v1508 = vsel %vm1507, %v1017, %v1506
  %vm1509 = vcmp.eq.f32.partialorder %v1017, 0.0
  %v1510 = vand.u32 %v1017, 2147483648
  %v1511 = vsel %vm1509, %v1510, %v1508
  %v1512 = vrsqrt.pop %v1018
  %v1513 = vmul.f32 %v1018, %v1512
  %vm1514 = vcmp.eq.f32.partialorder %v1018, inf
  %v1515 = vsel %vm1514, %v1018, %v1513
  %vm1516 = vcmp.eq.f32.partialorder %v1018, 0.0
  %v1517 = vand.u32 %v1018, 2147483648
  %v1518 = vsel %vm1516, %v1517, %v1515
  %v1519 = vrsqrt.pop %v1019
  %v1520 = vmul.f32 %v1019, %v1519
  %vm1521 = vcmp.eq.f32.partialorder %v1019, inf
  %v1522 = vsel %vm1521, %v1019, %v1520
  %vm1523 = vcmp.eq.f32.partialorder %v1019, 0.0
  %v1524 = vand.u32 %v1019, 2147483648
  %v1525 = vsel %vm1523, %v1524, %v1522
  %v1526 = vrsqrt.pop %v1020
  %v1527 = vmul.f32 %v1020, %v1526
  %vm1528 = vcmp.eq.f32.partialorder %v1020, inf
  %v1529 = vsel %vm1528, %v1020, %v1527
  %vm1530 = vcmp.eq.f32.partialorder %v1020, 0.0
  %v1531 = vand.u32 %v1020, 2147483648
  %v1532 = vsel %vm1530, %v1531, %v1529
  %v1533 = vrsqrt.pop %v1021
  %v1534 = vmul.f32 %v1021, %v1533
  %vm1535 = vcmp.eq.f32.partialorder %v1021, inf
  %v1536 = vsel %vm1535, %v1021, %v1534
  %vm1537 = vcmp.eq.f32.partialorder %v1021, 0.0
  %v1538 = vand.u32 %v1021, 2147483648
  %v1539 = vsel %vm1537, %v1538, %v1536
  %v1540 = vrsqrt.pop %v1022
  %v1541 = vmul.f32 %v1022, %v1540
  %vm1542 = vcmp.eq.f32.partialorder %v1022, inf
  %v1543 = vsel %vm1542, %v1022, %v1541
  %vm1544 = vcmp.eq.f32.partialorder %v1022, 0.0
  %v1545 = vand.u32 %v1022, 2147483648
  %v1546 = vsel %vm1544, %v1545, %v1543
  %v1547 = vrsqrt.pop %v1023
  %v1548 = vmul.f32 %v1023, %v1547
  %vm1549 = vcmp.eq.f32.partialorder %v1023, inf
  %v1550 = vsel %vm1549, %v1023, %v1548
  %vm1551 = vcmp.eq.f32.partialorder %v1023, 0.0
  %v1552 = vand.u32 %v1023, 2147483648
  %v1553 = vsel %vm1551, %v1552, %v1550
  %v1554 = vrsqrt.pop %v1024
  %v1555 = vmul.f32 %v1024, %v1554
  %vm1556 = vcmp.eq.f32.partialorder %v1024, inf
  %v1557 = vsel %vm1556, %v1024, %v1555
  %vm1558 = vcmp.eq.f32.partialorder %v1024, 0.0
  %v1559 = vand.u32 %v1024, 2147483648
  %v1560 = vsel %vm1558, %v1559, %v1557
  %v1561 = vrsqrt.pop %v1025
  %v1562 = vmul.f32 %v1025, %v1561
  %vm1563 = vcmp.eq.f32.partialorder %v1025, inf
  %v1564 = vsel %vm1563, %v1025, %v1562
  %vm1565 = vcmp.eq.f32.partialorder %v1025, 0.0
  %v1566 = vand.u32 %v1025, 2147483648
  %v1567 = vsel %vm1565, %v1566, %v1564
  %v1568 = vrsqrt.pop %v1026
  %v1569 = vmul.f32 %v1026, %v1568
  %vm1570 = vcmp.eq.f32.partialorder %v1026, inf
  %v1571 = vsel %vm1570, %v1026, %v1569
  %vm1572 = vcmp.eq.f32.partialorder %v1026, 0.0
  %v1573 = vand.u32 %v1026, 2147483648
  %v1574 = vsel %vm1572, %v1573, %v1571
  %v1575 = vrsqrt.pop %v1027
  %v1576 = vmul.f32 %v1027, %v1575
  %vm1577 = vcmp.eq.f32.partialorder %v1027, inf
  %v1578 = vsel %vm1577, %v1027, %v1576
  %vm1579 = vcmp.eq.f32.partialorder %v1027, 0.0
  %v1580 = vand.u32 %v1027, 2147483648
  %v1581 = vsel %vm1579, %v1580, %v1578
  %v1582 = vrsqrt.pop %v1028
  %v1583 = vmul.f32 %v1028, %v1582
  %vm1584 = vcmp.eq.f32.partialorder %v1028, inf
  %v1585 = vsel %vm1584, %v1028, %v1583
  %vm1586 = vcmp.eq.f32.partialorder %v1028, 0.0
  %v1587 = vand.u32 %v1028, 2147483648
  %v1588 = vsel %vm1586, %v1587, %v1585
  %v1589 = vrsqrt.pop %v1029
  %v1590 = vmul.f32 %v1029, %v1589
  %vm1591 = vcmp.eq.f32.partialorder %v1029, inf
  %v1592 = vsel %vm1591, %v1029, %v1590
  %vm1593 = vcmp.eq.f32.partialorder %v1029, 0.0
  %v1594 = vand.u32 %v1029, 2147483648
  %v1595 = vsel %vm1593, %v1594, %v1592
  %v1596 = vrsqrt.pop %v1030
  %v1597 = vmul.f32 %v1030, %v1596
  %vm1598 = vcmp.eq.f32.partialorder %v1030, inf
  %v1599 = vsel %vm1598, %v1030, %v1597
  %vm1600 = vcmp.eq.f32.partialorder %v1030, 0.0
  %v1601 = vand.u32 %v1030, 2147483648
  %v1602 = vsel %vm1600, %v1601, %v1599
  %v1603 = vrsqrt.pop %v1031
  %v1604 = vmul.f32 %v1031, %v1603
  %vm1605 = vcmp.eq.f32.partialorder %v1031, inf
  %v1606 = vsel %vm1605, %v1031, %v1604
  %vm1607 = vcmp.eq.f32.partialorder %v1031, 0.0
  %v1608 = vand.u32 %v1031, 2147483648
  %v1609 = vsel %vm1607, %v1608, %v1606
  %v1610 = vrsqrt.pop %v1032
  %v1611 = vmul.f32 %v1032, %v1610
  %vm1612 = vcmp.eq.f32.partialorder %v1032, inf
  %v1613 = vsel %vm1612, %v1032, %v1611
  %vm1614 = vcmp.eq.f32.partialorder %v1032, 0.0
  %v1615 = vand.u32 %v1032, 2147483648
  %v1616 = vsel %vm1614, %v1615, %v1613
  %v1617 = vrsqrt.pop %v1033
  %v1618 = vmul.f32 %v1033, %v1617
  %vm1619 = vcmp.eq.f32.partialorder %v1033, inf
  %v1620 = vsel %vm1619, %v1033, %v1618
  %vm1621 = vcmp.eq.f32.partialorder %v1033, 0.0
  %v1622 = vand.u32 %v1033, 2147483648
  %v1623 = vsel %vm1621, %v1622, %v1620
  %v1624 = vrsqrt.pop %v1034
  %v1625 = vmul.f32 %v1034, %v1624
  %vm1626 = vcmp.eq.f32.partialorder %v1034, inf
  %v1627 = vsel %vm1626, %v1034, %v1625
  %vm1628 = vcmp.eq.f32.partialorder %v1034, 0.0
  %v1629 = vand.u32 %v1034, 2147483648
  %v1630 = vsel %vm1628, %v1629, %v1627
  %v1631 = vrsqrt.pop %v1035
  %v1632 = vmul.f32 %v1035, %v1631
  %vm1633 = vcmp.eq.f32.partialorder %v1035, inf
  %v1634 = vsel %vm1633, %v1035, %v1632
  %vm1635 = vcmp.eq.f32.partialorder %v1035, 0.0
  %v1636 = vand.u32 %v1035, 2147483648
  %v1637 = vsel %vm1635, %v1636, %v1634
  %v1638 = vrsqrt.pop %v1036
  %v1639 = vmul.f32 %v1036, %v1638
  %vm1640 = vcmp.eq.f32.partialorder %v1036, inf
  %v1641 = vsel %vm1640, %v1036, %v1639
  %vm1642 = vcmp.eq.f32.partialorder %v1036, 0.0
  %v1643 = vand.u32 %v1036, 2147483648
  %v1644 = vsel %vm1642, %v1643, %v1641
  %v1645 = vrsqrt.pop %v1037
  %v1646 = vmul.f32 %v1037, %v1645
  %vm1647 = vcmp.eq.f32.partialorder %v1037, inf
  %v1648 = vsel %vm1647, %v1037, %v1646
  %vm1649 = vcmp.eq.f32.partialorder %v1037, 0.0
  %v1650 = vand.u32 %v1037, 2147483648
  %v1651 = vsel %vm1649, %v1650, %v1648
  %v1652 = vrsqrt.pop %v1038
  %v1653 = vmul.f32 %v1038, %v1652
  %vm1654 = vcmp.eq.f32.partialorder %v1038, inf
  %v1655 = vsel %vm1654, %v1038, %v1653
  %vm1656 = vcmp.eq.f32.partialorder %v1038, 0.0
  %v1657 = vand.u32 %v1038, 2147483648
  %v1658 = vsel %vm1656, %v1657, %v1655
  %v1659 = vrsqrt.pop %v1039
  %v1660 = vmul.f32 %v1039, %v1659
  %vm1661 = vcmp.eq.f32.partialorder %v1039, inf
  %v1662 = vsel %vm1661, %v1039, %v1660
  %vm1663 = vcmp.eq.f32.partialorder %v1039, 0.0
  %v1664 = vand.u32 %v1039, 2147483648
  %v1665 = vsel %vm1663, %v1664, %v1662
  %v1666 = vrsqrt.pop %v1040
  %v1667 = vmul.f32 %v1040, %v1666
  %vm1668 = vcmp.eq.f32.partialorder %v1040, inf
  %v1669 = vsel %vm1668, %v1040, %v1667
  %vm1670 = vcmp.eq.f32.partialorder %v1040, 0.0
  %v1671 = vand.u32 %v1040, 2147483648
  %v1672 = vsel %vm1670, %v1671, %v1669
  %v1673 = vrsqrt.pop %v1041
  %v1674 = vmul.f32 %v1041, %v1673
  %vm1675 = vcmp.eq.f32.partialorder %v1041, inf
  %v1676 = vsel %vm1675, %v1041, %v1674
  %vm1677 = vcmp.eq.f32.partialorder %v1041, 0.0
  %v1678 = vand.u32 %v1041, 2147483648
  %v1679 = vsel %vm1677, %v1678, %v1676
  %v1680 = vrsqrt.pop %v1042
  %v1681 = vmul.f32 %v1042, %v1680
  %vm1682 = vcmp.eq.f32.partialorder %v1042, inf
  %v1683 = vsel %vm1682, %v1042, %v1681
  %vm1684 = vcmp.eq.f32.partialorder %v1042, 0.0
  %v1685 = vand.u32 %v1042, 2147483648
  %v1686 = vsel %vm1684, %v1685, %v1683
  %v1687 = vrsqrt.pop %v1043
  %v1688 = vmul.f32 %v1043, %v1687
  %vm1689 = vcmp.eq.f32.partialorder %v1043, inf
  %v1690 = vsel %vm1689, %v1043, %v1688
  %vm1691 = vcmp.eq.f32.partialorder %v1043, 0.0
  %v1692 = vand.u32 %v1043, 2147483648
  %v1693 = vsel %vm1691, %v1692, %v1690
  %v1694 = vrsqrt.pop %v1044
  %v1695 = vmul.f32 %v1044, %v1694
  %vm1696 = vcmp.eq.f32.partialorder %v1044, inf
  %v1697 = vsel %vm1696, %v1044, %v1695
  %vm1698 = vcmp.eq.f32.partialorder %v1044, 0.0
  %v1699 = vand.u32 %v1044, 2147483648
  %v1700 = vsel %vm1698, %v1699, %v1697
  %v1701 = vrsqrt.pop %v1045
  %v1702 = vmul.f32 %v1045, %v1701
  %vm1703 = vcmp.eq.f32.partialorder %v1045, inf
  %v1704 = vsel %vm1703, %v1045, %v1702
  %vm1705 = vcmp.eq.f32.partialorder %v1045, 0.0
  %v1706 = vand.u32 %v1045, 2147483648
  %v1707 = vsel %vm1705, %v1706, %v1704
  %v1708 = vrsqrt.pop %v1046
  %v1709 = vmul.f32 %v1046, %v1708
  %vm1710 = vcmp.eq.f32.partialorder %v1046, inf
  %v1711 = vsel %vm1710, %v1046, %v1709
  %vm1712 = vcmp.eq.f32.partialorder %v1046, 0.0
  %v1713 = vand.u32 %v1046, 2147483648
  %v1714 = vsel %vm1712, %v1713, %v1711
  %v1715 = vrsqrt.pop %v1047
  %v1716 = vmul.f32 %v1047, %v1715
  %vm1717 = vcmp.eq.f32.partialorder %v1047, inf
  %v1718 = vsel %vm1717, %v1047, %v1716
  %vm1719 = vcmp.eq.f32.partialorder %v1047, 0.0
  %v1720 = vand.u32 %v1047, 2147483648
  %v1721 = vsel %vm1719, %v1720, %v1718
  %v1722 = vrsqrt.pop %v1048
  %v1723 = vmul.f32 %v1048, %v1722
  %vm1724 = vcmp.eq.f32.partialorder %v1048, inf
  %v1725 = vsel %vm1724, %v1048, %v1723
  %vm1726 = vcmp.eq.f32.partialorder %v1048, 0.0
  %v1727 = vand.u32 %v1048, 2147483648
  %v1728 = vsel %vm1726, %v1727, %v1725
  %v1729 = vrsqrt.pop %v1049
  %v1730 = vmul.f32 %v1049, %v1729
  %vm1731 = vcmp.eq.f32.partialorder %v1049, inf
  %v1732 = vsel %vm1731, %v1049, %v1730
  %vm1733 = vcmp.eq.f32.partialorder %v1049, 0.0
  %v1734 = vand.u32 %v1049, 2147483648
  %v1735 = vsel %vm1733, %v1734, %v1732
  %v1736 = vrsqrt.pop %v1050
  %v1737 = vmul.f32 %v1050, %v1736
  %vm1738 = vcmp.eq.f32.partialorder %v1050, inf
  %v1739 = vsel %vm1738, %v1050, %v1737
  %vm1740 = vcmp.eq.f32.partialorder %v1050, 0.0
  %v1741 = vand.u32 %v1050, 2147483648
  %v1742 = vsel %vm1740, %v1741, %v1739
  %v1743 = vrsqrt.pop %v1051
  %v1744 = vmul.f32 %v1051, %v1743
  %vm1745 = vcmp.eq.f32.partialorder %v1051, inf
  %v1746 = vsel %vm1745, %v1051, %v1744
  %vm1747 = vcmp.eq.f32.partialorder %v1051, 0.0
  %v1748 = vand.u32 %v1051, 2147483648
  %v1749 = vsel %vm1747, %v1748, %v1746
  %v1750 = vrsqrt.pop %v1052
  %v1751 = vmul.f32 %v1052, %v1750
  %vm1752 = vcmp.eq.f32.partialorder %v1052, inf
  %v1753 = vsel %vm1752, %v1052, %v1751
  %vm1754 = vcmp.eq.f32.partialorder %v1052, 0.0
  %v1755 = vand.u32 %v1052, 2147483648
  %v1756 = vsel %vm1754, %v1755, %v1753
  %v1757 = vrsqrt.pop %v1053
  %v1758 = vmul.f32 %v1053, %v1757
  %vm1759 = vcmp.eq.f32.partialorder %v1053, inf
  %v1760 = vsel %vm1759, %v1053, %v1758
  %vm1761 = vcmp.eq.f32.partialorder %v1053, 0.0
  %v1762 = vand.u32 %v1053, 2147483648
  %v1763 = vsel %vm1761, %v1762, %v1760
  %v1764 = vrsqrt.pop %v1054
  %v1765 = vmul.f32 %v1054, %v1764
  %vm1766 = vcmp.eq.f32.partialorder %v1054, inf
  %v1767 = vsel %vm1766, %v1054, %v1765
  %vm1768 = vcmp.eq.f32.partialorder %v1054, 0.0
  %v1769 = vand.u32 %v1054, 2147483648
  %v1770 = vsel %vm1768, %v1769, %v1767
  %v1771 = vrsqrt.pop %v1055
  %v1772 = vmul.f32 %v1055, %v1771
  %vm1773 = vcmp.eq.f32.partialorder %v1055, inf
  %v1774 = vsel %vm1773, %v1055, %v1772
  %vm1775 = vcmp.eq.f32.partialorder %v1055, 0.0
  %v1776 = vand.u32 %v1055, 2147483648
  %v1777 = vsel %vm1775, %v1776, %v1774
  %v1778 = vrsqrt.pop %v1056
  %v1779 = vmul.f32 %v1056, %v1778
  %vm1780 = vcmp.eq.f32.partialorder %v1056, inf
  %v1781 = vsel %vm1780, %v1056, %v1779
  %vm1782 = vcmp.eq.f32.partialorder %v1056, 0.0
  %v1783 = vand.u32 %v1056, 2147483648
  %v1784 = vsel %vm1782, %v1783, %v1781
  %v1785 = vrsqrt.pop %v1057
  %v1786 = vmul.f32 %v1057, %v1785
  %vm1787 = vcmp.eq.f32.partialorder %v1057, inf
  %v1788 = vsel %vm1787, %v1057, %v1786
  %vm1789 = vcmp.eq.f32.partialorder %v1057, 0.0
  %v1790 = vand.u32 %v1057, 2147483648
  %v1791 = vsel %vm1789, %v1790, %v1788
  %v1792 = vrsqrt.pop %v1058
  %v1793 = vmul.f32 %v1058, %v1792
  %vm1794 = vcmp.eq.f32.partialorder %v1058, inf
  %v1795 = vsel %vm1794, %v1058, %v1793
  %vm1796 = vcmp.eq.f32.partialorder %v1058, 0.0
  %v1797 = vand.u32 %v1058, 2147483648
  %v1798 = vsel %vm1796, %v1797, %v1795
  %v1799 = vrsqrt.pop %v1059
  %v1800 = vmul.f32 %v1059, %v1799
  %vm1801 = vcmp.eq.f32.partialorder %v1059, inf
  %v1802 = vsel %vm1801, %v1059, %v1800
  %vm1803 = vcmp.eq.f32.partialorder %v1059, 0.0
  %v1804 = vand.u32 %v1059, 2147483648
  %v1805 = vsel %vm1803, %v1804, %v1802
  %v1806 = vrsqrt.pop %v1060
  %v1807 = vmul.f32 %v1060, %v1806
  %vm1808 = vcmp.eq.f32.partialorder %v1060, inf
  %v1809 = vsel %vm1808, %v1060, %v1807
  %vm1810 = vcmp.eq.f32.partialorder %v1060, 0.0
  %v1811 = vand.u32 %v1060, 2147483648
  %v1812 = vsel %vm1810, %v1811, %v1809
  %v1813 = vrsqrt.pop %v1061
  %v1814 = vmul.f32 %v1061, %v1813
  %vm1815 = vcmp.eq.f32.partialorder %v1061, inf
  %v1816 = vsel %vm1815, %v1061, %v1814
  %vm1817 = vcmp.eq.f32.partialorder %v1061, 0.0
  %v1818 = vand.u32 %v1061, 2147483648
  %v1819 = vsel %vm1817, %v1818, %v1816
  %v1820 = vrsqrt.pop %v1062
  %v1821 = vmul.f32 %v1062, %v1820
  %vm1822 = vcmp.eq.f32.partialorder %v1062, inf
  %v1823 = vsel %vm1822, %v1062, %v1821
  %vm1824 = vcmp.eq.f32.partialorder %v1062, 0.0
  %v1825 = vand.u32 %v1062, 2147483648
  %v1826 = vsel %vm1824, %v1825, %v1823
  %v1827 = vrsqrt.pop %v1063
  %v1828 = vmul.f32 %v1063, %v1827
  %vm1829 = vcmp.eq.f32.partialorder %v1063, inf
  %v1830 = vsel %vm1829, %v1063, %v1828
  %vm1831 = vcmp.eq.f32.partialorder %v1063, 0.0
  %v1832 = vand.u32 %v1063, 2147483648
  %v1833 = vsel %vm1831, %v1832, %v1830
  %v1834 = vrsqrt.pop %v1064
  %v1835 = vmul.f32 %v1064, %v1834
  %vm1836 = vcmp.eq.f32.partialorder %v1064, inf
  %v1837 = vsel %vm1836, %v1064, %v1835
  %vm1838 = vcmp.eq.f32.partialorder %v1064, 0.0
  %v1839 = vand.u32 %v1064, 2147483648
  %v1840 = vsel %vm1838, %v1839, %v1837
  %v1841 = vrsqrt.pop %v1065
  %v1842 = vmul.f32 %v1065, %v1841
  %vm1843 = vcmp.eq.f32.partialorder %v1065, inf
  %v1844 = vsel %vm1843, %v1065, %v1842
  %vm1845 = vcmp.eq.f32.partialorder %v1065, 0.0
  %v1846 = vand.u32 %v1065, 2147483648
  %v1847 = vsel %vm1845, %v1846, %v1844
  %v1848 = vrsqrt.pop %v1066
  %v1849 = vmul.f32 %v1066, %v1848
  %vm1850 = vcmp.eq.f32.partialorder %v1066, inf
  %v1851 = vsel %vm1850, %v1066, %v1849
  %vm1852 = vcmp.eq.f32.partialorder %v1066, 0.0
  %v1853 = vand.u32 %v1066, 2147483648
  %v1854 = vsel %vm1852, %v1853, %v1851
  %v1855 = vrsqrt.pop %v1067
  %v1856 = vmul.f32 %v1067, %v1855
  %vm1857 = vcmp.eq.f32.partialorder %v1067, inf
  %v1858 = vsel %vm1857, %v1067, %v1856
  %vm1859 = vcmp.eq.f32.partialorder %v1067, 0.0
  %v1860 = vand.u32 %v1067, 2147483648
  %v1861 = vsel %vm1859, %v1860, %v1858
  %v1862 = vrsqrt.pop %v1068
  %v1863 = vmul.f32 %v1068, %v1862
  %vm1864 = vcmp.eq.f32.partialorder %v1068, inf
  %v1865 = vsel %vm1864, %v1068, %v1863
  %vm1866 = vcmp.eq.f32.partialorder %v1068, 0.0
  %v1867 = vand.u32 %v1068, 2147483648
  %v1868 = vsel %vm1866, %v1867, %v1865
  %v1869 = vrsqrt.pop %v1069
  %v1870 = vmul.f32 %v1069, %v1869
  %vm1871 = vcmp.eq.f32.partialorder %v1069, inf
  %v1872 = vsel %vm1871, %v1069, %v1870
  %vm1873 = vcmp.eq.f32.partialorder %v1069, 0.0
  %v1874 = vand.u32 %v1069, 2147483648
  %v1875 = vsel %vm1873, %v1874, %v1872
  %v1876 = vrsqrt.pop %v1070
  %v1877 = vmul.f32 %v1070, %v1876
  %vm1878 = vcmp.eq.f32.partialorder %v1070, inf
  %v1879 = vsel %vm1878, %v1070, %v1877
  %vm1880 = vcmp.eq.f32.partialorder %v1070, 0.0
  %v1881 = vand.u32 %v1070, 2147483648
  %v1882 = vsel %vm1880, %v1881, %v1879
  %v1883 = vrsqrt.pop %v1071
  %v1884 = vmul.f32 %v1071, %v1883
  %vm1885 = vcmp.eq.f32.partialorder %v1071, inf
  %v1886 = vsel %vm1885, %v1071, %v1884
  %vm1887 = vcmp.eq.f32.partialorder %v1071, 0.0
  %v1888 = vand.u32 %v1071, 2147483648
  %v1889 = vsel %vm1887, %v1888, %v1886
  %v1890 = vrsqrt.pop %v1072
  %v1891 = vmul.f32 %v1072, %v1890
  %vm1892 = vcmp.eq.f32.partialorder %v1072, inf
  %v1893 = vsel %vm1892, %v1072, %v1891
  %vm1894 = vcmp.eq.f32.partialorder %v1072, 0.0
  %v1895 = vand.u32 %v1072, 2147483648
  %v1896 = vsel %vm1894, %v1895, %v1893
  %v1897 = vrsqrt.pop %v1073
  %v1898 = vmul.f32 %v1073, %v1897
  %vm1899 = vcmp.eq.f32.partialorder %v1073, inf
  %v1900 = vsel %vm1899, %v1073, %v1898
  %vm1901 = vcmp.eq.f32.partialorder %v1073, 0.0
  %v1902 = vand.u32 %v1073, 2147483648
  %v1903 = vsel %vm1901, %v1902, %v1900
  %v1904 = vrsqrt.pop %v1074
  %v1905 = vmul.f32 %v1074, %v1904
  %vm1906 = vcmp.eq.f32.partialorder %v1074, inf
  %v1907 = vsel %vm1906, %v1074, %v1905
  %vm1908 = vcmp.eq.f32.partialorder %v1074, 0.0
  %v1909 = vand.u32 %v1074, 2147483648
  %v1910 = vsel %vm1908, %v1909, %v1907
  %v1911 = vrsqrt.pop %v1075
  %v1912 = vmul.f32 %v1075, %v1911
  %vm1913 = vcmp.eq.f32.partialorder %v1075, inf
  %v1914 = vsel %vm1913, %v1075, %v1912
  %vm1915 = vcmp.eq.f32.partialorder %v1075, 0.0
  %v1916 = vand.u32 %v1075, 2147483648
  %v1917 = vsel %vm1915, %v1916, %v1914
  %v1918 = vrsqrt.pop %v1076
  %v1919 = vmul.f32 %v1076, %v1918
  %vm1920 = vcmp.eq.f32.partialorder %v1076, inf
  %v1921 = vsel %vm1920, %v1076, %v1919
  %vm1922 = vcmp.eq.f32.partialorder %v1076, 0.0
  %v1923 = vand.u32 %v1076, 2147483648
  %v1924 = vsel %vm1922, %v1923, %v1921
  %v1925 = vrsqrt.pop %v1077
  %v1926 = vmul.f32 %v1077, %v1925
  %vm1927 = vcmp.eq.f32.partialorder %v1077, inf
  %v1928 = vsel %vm1927, %v1077, %v1926
  %vm1929 = vcmp.eq.f32.partialorder %v1077, 0.0
  %v1930 = vand.u32 %v1077, 2147483648
  %v1931 = vsel %vm1929, %v1930, %v1928
  %v1932 = vrsqrt.pop %v1078
  %v1933 = vmul.f32 %v1078, %v1932
  %vm1934 = vcmp.eq.f32.partialorder %v1078, inf
  %v1935 = vsel %vm1934, %v1078, %v1933
  %vm1936 = vcmp.eq.f32.partialorder %v1078, 0.0
  %v1937 = vand.u32 %v1078, 2147483648
  %v1938 = vsel %vm1936, %v1937, %v1935
  %v1939 = vrsqrt.pop %v1079
  %v1940 = vmul.f32 %v1079, %v1939
  %vm1941 = vcmp.eq.f32.partialorder %v1079, inf
  %v1942 = vsel %vm1941, %v1079, %v1940
  %vm1943 = vcmp.eq.f32.partialorder %v1079, 0.0
  %v1944 = vand.u32 %v1079, 2147483648
  %v1945 = vsel %vm1943, %v1944, %v1942
  %v1946 = vrsqrt.pop %v1080
  %v1947 = vmul.f32 %v1080, %v1946
  %vm1948 = vcmp.eq.f32.partialorder %v1080, inf
  %v1949 = vsel %vm1948, %v1080, %v1947
  %vm1950 = vcmp.eq.f32.partialorder %v1080, 0.0
  %v1951 = vand.u32 %v1080, 2147483648
  %v1952 = vsel %vm1950, %v1951, %v1949
  %v1953 = vrsqrt.pop %v1081
  %v1954 = vmul.f32 %v1081, %v1953
  %vm1955 = vcmp.eq.f32.partialorder %v1081, inf
  %v1956 = vsel %vm1955, %v1081, %v1954
  %vm1957 = vcmp.eq.f32.partialorder %v1081, 0.0
  %v1958 = vand.u32 %v1081, 2147483648
  %v1959 = vsel %vm1957, %v1958, %v1956
  %v1960 = vrsqrt.pop %v1082
  %v1961 = vmul.f32 %v1082, %v1960
  %vm1962 = vcmp.eq.f32.partialorder %v1082, inf
  %v1963 = vsel %vm1962, %v1082, %v1961
  %vm1964 = vcmp.eq.f32.partialorder %v1082, 0.0
  %v1965 = vand.u32 %v1082, 2147483648
  %v1966 = vsel %vm1964, %v1965, %v1963
  %v1967 = vrsqrt.pop %v1083
  %v1968 = vmul.f32 %v1083, %v1967
  %vm1969 = vcmp.eq.f32.partialorder %v1083, inf
  %v1970 = vsel %vm1969, %v1083, %v1968
  %vm1971 = vcmp.eq.f32.partialorder %v1083, 0.0
  %v1972 = vand.u32 %v1083, 2147483648
  %v1973 = vsel %vm1971, %v1972, %v1970
  %v1974 = vrsqrt.pop %v1084
  %v1975 = vmul.f32 %v1084, %v1974
  %vm1976 = vcmp.eq.f32.partialorder %v1084, inf
  %v1977 = vsel %vm1976, %v1084, %v1975
  %vm1978 = vcmp.eq.f32.partialorder %v1084, 0.0
  %v1979 = vand.u32 %v1084, 2147483648
  %v1980 = vsel %vm1978, %v1979, %v1977
  %v1981 = vmul.f32 %v1091, 0.047140453
  %v1982 = vmul.f32 %v1098, 0.047140453
  %v1983 = vmul.f32 %v1105, 0.047140453
  %v1984 = vmul.f32 %v1112, 0.047140453
  %v1985 = vmul.f32 %v1119, 0.047140453
  %v1986 = vmul.f32 %v1126, 0.047140453
  %v1987 = vmul.f32 %v1133, 0.047140453
  %v1988 = vmul.f32 %v1140, 0.047140453
  %v1989 = vmul.f32 %v1147, 0.047140453
  %v1990 = vmul.f32 %v1154, 0.047140453
  %v1991 = vmul.f32 %v1161, 0.047140453
  %v1992 = vmul.f32 %v1168, 0.047140453
  %v1993 = vmul.f32 %v1175, 0.047140453
  %v1994 = vmul.f32 %v1182, 0.047140453
  %v1995 = vmul.f32 %v1189, 0.047140453
  %v1996 = vmul.f32 %v1196, 0.047140453
  %v1997 = vmul.f32 %v1203, 0.047140453
  %v1998 = vmul.f32 %v1210, 0.047140453
  %v1999 = vmul.f32 %v1217, 0.047140453
  %v2000 = vmul.f32 %v1224, 0.047140453
  %v2001 = vmul.f32 %v1231, 0.047140453
  %v2002 = vmul.f32 %v1238, 0.047140453
  %v2003 = vmul.f32 %v1245, 0.047140453
  %v2004 = vmul.f32 %v1252, 0.047140453
  %v2005 = vmul.f32 %v1259, 0.047140453
  %v2006 = vmul.f32 %v1266, 0.047140453
  %v2007 = vmul.f32 %v1273, 0.047140453
  %v2008 = vmul.f32 %v1280, 0.047140453
  %v2009 = vmul.f32 %v1287, 0.047140453
  %v2010 = vmul.f32 %v1294, 0.047140453
  %v2011 = vmul.f32 %v1301, 0.047140453
  %v2012 = vmul.f32 %v1308, 0.047140453
  %v2013 = vmul.f32 %v1315, 0.047140453
  %v2014 = vmul.f32 %v1322, 0.047140453
  %v2015 = vmul.f32 %v1329, 0.047140453
  %v2016 = vmul.f32 %v1336, 0.047140453
  %v2017 = vmul.f32 %v1343, 0.047140453
  %v2018 = vmul.f32 %v1350, 0.047140453
  %v2019 = vmul.f32 %v1357, 0.047140453
  %v2020 = vmul.f32 %v1364, 0.047140453
  %v2021 = vmul.f32 %v1371, 0.047140453
  %v2022 = vmul.f32 %v1378, 0.047140453
  %v2023 = vmul.f32 %v1385, 0.047140453
  %v2024 = vmul.f32 %v1392, 0.047140453
  %v2025 = vmul.f32 %v1399, 0.047140453
  %v2026 = vmul.f32 %v1406, 0.047140453
  %v2027 = vmul.f32 %v1413, 0.047140453
  %v2028 = vmul.f32 %v1420, 0.047140453
  %v2029 = vmul.f32 %v1427, 0.047140453
  %v2030 = vmul.f32 %v1434, 0.047140453
  %v2031 = vmul.f32 %v1441, 0.047140453
  %v2032 = vmul.f32 %v1448, 0.047140453
  %v2033 = vmul.f32 %v1455, 0.047140453
  %v2034 = vmul.f32 %v1462, 0.047140453
  %v2035 = vmul.f32 %v1469, 0.047140453
  %v2036 = vmul.f32 %v1476, 0.047140453
  %v2037 = vmul.f32 %v1483, 0.047140453
  %v2038 = vmul.f32 %v1490, 0.047140453
  %v2039 = vmul.f32 %v1497, 0.047140453
  %v2040 = vmul.f32 %v1504, 0.047140453
  %v2041 = vmul.f32 %v1511, 0.047140453
  %v2042 = vmul.f32 %v1518, 0.047140453
  %v2043 = vmul.f32 %v1525, 0.047140453
  %v2044 = vmul.f32 %v1532, 0.047140453
  %v2045 = vmul.f32 %v1539, 0.047140453
  %v2046 = vmul.f32 %v1546, 0.047140453
  %v2047 = vmul.f32 %v1553, 0.047140453
  %v2048 = vmul.f32 %v1560, 0.047140453
  %v2049 = vmul.f32 %v1567, 0.047140453
  %v2050 = vmul.f32 %v1574, 0.047140453
  %v2051 = vmul.f32 %v1581, 0.047140453
  %v2052 = vmul.f32 %v1588, 0.047140453
  %v2053 = vmul.f32 %v1595, 0.047140453
  %v2054 = vmul.f32 %v1602, 0.047140453
  %v2055 = vmul.f32 %v1609, 0.047140453
  %v2056 = vmul.f32 %v1616, 0.047140453
  %v2057 = vmul.f32 %v1623, 0.047140453
  %v2058 = vmul.f32 %v1630, 0.047140453
  %v2059 = vmul.f32 %v1637, 0.047140453
  %v2060 = vmul.f32 %v1644, 0.047140453
  %v2061 = vmul.f32 %v1651, 0.047140453
  %v2062 = vmul.f32 %v1658, 0.047140453
  %v2063 = vmul.f32 %v1665, 0.047140453
  %v2064 = vmul.f32 %v1672, 0.047140453
  %v2065 = vmul.f32 %v1679, 0.047140453
  %v2066 = vmul.f32 %v1686, 0.047140453
  %v2067 = vmul.f32 %v1693, 0.047140453
  %v2068 = vmul.f32 %v1700, 0.047140453
  %v2069 = vmul.f32 %v1707, 0.047140453
  %v2070 = vmul.f32 %v1714, 0.047140453
  %v2071 = vmul.f32 %v1721, 0.047140453
  %v2072 = vmul.f32 %v1728, 0.047140453
  %v2073 = vmul.f32 %v1735, 0.047140453
  %v2074 = vmul.f32 %v1742, 0.047140453
  %v2075 = vmul.f32 %v1749, 0.047140453
  %v2076 = vmul.f32 %v1756, 0.047140453
  %v2077 = vmul.f32 %v1763, 0.047140453
  %v2078 = vmul.f32 %v1770, 0.047140453
  %v2079 = vmul.f32 %v1777, 0.047140453
  %v2080 = vmul.f32 %v1784, 0.047140453
  %v2081 = vmul.f32 %v1791, 0.047140453
  %v2082 = vmul.f32 %v1798, 0.047140453
  %v2083 = vmul.f32 %v1805, 0.047140453
  %v2084 = vmul.f32 %v1812, 0.047140453
  %v2085 = vmul.f32 %v1819, 0.047140453
  %v2086 = vmul.f32 %v1826, 0.047140453
  %v2087 = vmul.f32 %v1833, 0.047140453
  %v2088 = vmul.f32 %v1840, 0.047140453
  %v2089 = vmul.f32 %v1847, 0.047140453
  %v2090 = vmul.f32 %v1854, 0.047140453
  %v2091 = vmul.f32 %v1861, 0.047140453
  %v2092 = vmul.f32 %v1868, 0.047140453
  %v2093 = vmul.f32 %v1875, 0.047140453
  %v2094 = vmul.f32 %v1882, 0.047140453
  %v2095 = vmul.f32 %v1889, 0.047140453
  %v2096 = vmul.f32 %v1896, 0.047140453
  %v2097 = vmul.f32 %v1903, 0.047140453
  %v2098 = vmul.f32 %v1910, 0.047140453
  %v2099 = vmul.f32 %v1917, 0.047140453
  %v2100 = vmul.f32 %v1924, 0.047140453
  %v2101 = vmul.f32 %v1931, 0.047140453
  %v2102 = vmul.f32 %v1938, 0.047140453
  %v2103 = vmul.f32 %v1945, 0.047140453
  %v2104 = vmul.f32 %v1952, 0.047140453
  %v2105 = vmul.f32 %v1959, 0.047140453
  %v2106 = vmul.f32 %v1966, 0.047140453
  %v2107 = vmul.f32 %v1973, 0.047140453
  %v2108 = vmul.f32 %v1980, 0.047140453
  %2109 = vst [vmem:[%s4] sm:$0xff] %v1981
  %2110 = vst [vmem:[%s4 + $0x8] sm:$0xff] %v1982
  %2111 = vst [vmem:[%s4 + $0x10] sm:$0xff] %v1983
  %2112 = vst [vmem:[%s4 + $0x18] sm:$0xff] %v1984
  %2113 = vst [vmem:[%s4 + $0x20] sm:$0xff] %v1985
  %2114 = vst [vmem:[%s4 + $0x28] sm:$0xff] %v1986
  %2115 = vst [vmem:[%s4 + $0x30] sm:$0xff] %v1987
  %2116 = vst [vmem:[%s4 + $0x38] sm:$0xff] %v1988
  %2117 = vst [vmem:[%s4 + $0x40] sm:$0xff] %v1989
  %2118 = vst [vmem:[%s4 + $0x48] sm:$0xff] %v1990
  %2119 = vst [vmem:[%s4 + $0x50] sm:$0xff] %v1991
  %2120 = vst [vmem:[%s4 + $0x58] sm:$0xff] %v1992
  %2121 = vst [vmem:[%s4 + $0x60] sm:$0xff] %v1993
  %2122 = vst [vmem:[%s4 + $0x68] sm:$0xff] %v1994
  %2123 = vst [vmem:[%s4 + $0x70] sm:$0xff] %v1995
  %2124 = vst [vmem:[%s4 + $0x78] sm:$0xff] %v1996
  %2125 = vst [vmem:[%s4 + $0x80] sm:$0xff] %v1997
  %2126 = vst [vmem:[%s4 + $0x88] sm:$0xff] %v1998
  %2127 = vst [vmem:[%s4 + $0x90] sm:$0xff] %v1999
  %2128 = vst [vmem:[%s4 + $0x98] sm:$0xff] %v2000
  %2129 = vst [vmem:[%s4 + $0xa0] sm:$0xff] %v2001
  %2130 = vst [vmem:[%s4 + $0xa8] sm:$0xff] %v2002
  %2131 = vst [vmem:[%s4 + $0xb0] sm:$0xff] %v2003
  %2132 = vst [vmem:[%s4 + $0xb8] sm:$0xff] %v2004
  %2133 = vst [vmem:[%s4 + $0xc0] sm:$0xff] %v2005
  %2134 = vst [vmem:[%s4 + $0xc8] sm:$0xff] %v2006
  %2135 = vst [vmem:[%s4 + $0xd0] sm:$0xff] %v2007
  %2136 = vst [vmem:[%s4 + $0xd8] sm:$0xff] %v2008
  %2137 = vst [vmem:[%s4 + $0xe0] sm:$0xff] %v2009
  %2138 = vst [vmem:[%s4 + $0xe8] sm:$0xff] %v2010
  %2139 = vst [vmem:[%s4 + $0xf0] sm:$0xff] %v2011
  %2140 = vst [vmem:[%s4 + $0xf8] sm:$0xff] %v2012
  %2141 = vst [vmem:[%s4 + $0x100] sm:$0xff] %v2013
  %2142 = vst [vmem:[%s4 + $0x108] sm:$0xff] %v2014
  %2143 = vst [vmem:[%s4 + $0x110] sm:$0xff] %v2015
  %2144 = vst [vmem:[%s4 + $0x118] sm:$0xff] %v2016
  %2145 = vst [vmem:[%s4 + $0x120] sm:$0xff] %v2017
  %2146 = vst [vmem:[%s4 + $0x128] sm:$0xff] %v2018
  %2147 = vst [vmem:[%s4 + $0x130] sm:$0xff] %v2019
  %2148 = vst [vmem:[%s4 + $0x138] sm:$0xff] %v2020
  %2149 = vst [vmem:[%s4 + $0x140] sm:$0xff] %v2021
  %2150 = vst [vmem:[%s4 + $0x148] sm:$0xff] %v2022
  %2151 = vst [vmem:[%s4 + $0x150] sm:$0xff] %v2023
  %2152 = vst [vmem:[%s4 + $0x158] sm:$0xff] %v2024
  %2153 = vst [vmem:[%s4 + $0x160] sm:$0xff] %v2025
  %2154 = vst [vmem:[%s4 + $0x168] sm:$0xff] %v2026
  %2155 = vst [vmem:[%s4 + $0x170] sm:$0xff] %v2027
  %2156 = vst [vmem:[%s4 + $0x178] sm:$0xff] %v2028
  %2157 = vst [vmem:[%s4 + $0x180] sm:$0xff] %v2029
  %2158 = vst [vmem:[%s4 + $0x188] sm:$0xff] %v2030
  %2159 = vst [vmem:[%s4 + $0x190] sm:$0xff] %v2031
  %2160 = vst [vmem:[%s4 + $0x198] sm:$0xff] %v2032
  %2161 = vst [vmem:[%s4 + $0x1a0] sm:$0xff] %v2033
  %2162 = vst [vmem:[%s4 + $0x1a8] sm:$0xff] %v2034
  %2163 = vst [vmem:[%s4 + $0x1b0] sm:$0xff] %v2035
  %2164 = vst [vmem:[%s4 + $0x1b8] sm:$0xff] %v2036
  %2165 = vst [vmem:[%s4 + $0x1c0] sm:$0xff] %v2037
  %2166 = vst [vmem:[%s4 + $0x1c8] sm:$0xff] %v2038
  %2167 = vst [vmem:[%s4 + $0x1d0] sm:$0xff] %v2039
  %2168 = vst [vmem:[%s4 + $0x1d8] sm:$0xff] %v2040
  %2169 = vst [vmem:[%s4 + $0x1e0] sm:$0xff] %v2041
  %2170 = vst [vmem:[%s4 + $0x1e8] sm:$0xff] %v2042
  %2171 = vst [vmem:[%s4 + $0x1f0] sm:$0xff] %v2043
  %2172 = vst [vmem:[%s4 + $0x1f8] sm:$0xff] %v2044
  %2173 = vst [vmem:[%s4 + $0x200] sm:$0xff] %v2045
  %2174 = vst [vmem:[%s4 + $0x208] sm:$0xff] %v2046
  %2175 = vst [vmem:[%s4 + $0x210] sm:$0xff] %v2047
  %2176 = vst [vmem:[%s4 + $0x218] sm:$0xff] %v2048
  %2177 = vst [vmem:[%s4 + $0x220] sm:$0xff] %v2049
  %2178 = vst [vmem:[%s4 + $0x228] sm:$0xff] %v2050
  %2179 = vst [vmem:[%s4 + $0x230] sm:$0xff] %v2051
  %2180 = vst [vmem:[%s4 + $0x238] sm:$0xff] %v2052
  %2181 = vst [vmem:[%s4 + $0x240] sm:$0xff] %v2053
  %2182 = vst [vmem:[%s4 + $0x248] sm:$0xff] %v2054
  %2183 = vst [vmem:[%s4 + $0x250] sm:$0xff] %v2055
  %2184 = vst [vmem:[%s4 + $0x258] sm:$0xff] %v2056
  %2185 = vst [vmem:[%s4 + $0x260] sm:$0xff] %v2057
  %2186 = vst [vmem:[%s4 + $0x268] sm:$0xff] %v2058
  %2187 = vst [vmem:[%s4 + $0x270] sm:$0xff] %v2059
  %2188 = vst [vmem:[%s4 + $0x278] sm:$0xff] %v2060
  %2189 = vst [vmem:[%s4 + $0x280] sm:$0xff] %v2061
  %2190 = vst [vmem:[%s4 + $0x288] sm:$0xff] %v2062
  %2191 = vst [vmem:[%s4 + $0x290] sm:$0xff] %v2063
  %2192 = vst [vmem:[%s4 + $0x298] sm:$0xff] %v2064
  %2193 = vst [vmem:[%s4 + $0x2a0] sm:$0xff] %v2065
  %2194 = vst [vmem:[%s4 + $0x2a8] sm:$0xff] %v2066
  %2195 = vst [vmem:[%s4 + $0x2b0] sm:$0xff] %v2067
  %2196 = vst [vmem:[%s4 + $0x2b8] sm:$0xff] %v2068
  %2197 = vst [vmem:[%s4 + $0x2c0] sm:$0xff] %v2069
  %2198 = vst [vmem:[%s4 + $0x2c8] sm:$0xff] %v2070
  %2199 = vst [vmem:[%s4 + $0x2d0] sm:$0xff] %v2071
  %2200 = vst [vmem:[%s4 + $0x2d8] sm:$0xff] %v2072
  %2201 = vst [vmem:[%s4 + $0x2e0] sm:$0xff] %v2073
  %2202 = vst [vmem:[%s4 + $0x2e8] sm:$0xff] %v2074
  %2203 = vst [vmem:[%s4 + $0x2f0] sm:$0xff] %v2075
  %2204 = vst [vmem:[%s4 + $0x2f8] sm:$0xff] %v2076
  %2205 = vst [vmem:[%s4 + $0x300] sm:$0xff] %v2077
  %2206 = vst [vmem:[%s4 + $0x308] sm:$0xff] %v2078
  %2207 = vst [vmem:[%s4 + $0x310] sm:$0xff] %v2079
  %2208 = vst [vmem:[%s4 + $0x318] sm:$0xff] %v2080
  %2209 = vst [vmem:[%s4 + $0x320] sm:$0xff] %v2081
  %2210 = vst [vmem:[%s4 + $0x328] sm:$0xff] %v2082
  %2211 = vst [vmem:[%s4 + $0x330] sm:$0xff] %v2083
  %2212 = vst [vmem:[%s4 + $0x338] sm:$0xff] %v2084
  %2213 = vst [vmem:[%s4 + $0x340] sm:$0xff] %v2085
  %2214 = vst [vmem:[%s4 + $0x348] sm:$0xff] %v2086
  %2215 = vst [vmem:[%s4 + $0x350] sm:$0xff] %v2087
  %2216 = vst [vmem:[%s4 + $0x358] sm:$0xff] %v2088
  %2217 = vst [vmem:[%s4 + $0x360] sm:$0xff] %v2089
  %2218 = vst [vmem:[%s4 + $0x368] sm:$0xff] %v2090
  %2219 = vst [vmem:[%s4 + $0x370] sm:$0xff] %v2091
  %2220 = vst [vmem:[%s4 + $0x378] sm:$0xff] %v2092
  %2221 = vst [vmem:[%s4 + $0x380] sm:$0xff] %v2093
  %2222 = vst [vmem:[%s4 + $0x388] sm:$0xff] %v2094
  %2223 = vst [vmem:[%s4 + $0x390] sm:$0xff] %v2095
  %2224 = vst [vmem:[%s4 + $0x398] sm:$0xff] %v2096
  %2225 = vst [vmem:[%s4 + $0x3a0] sm:$0xff] %v2097
  %2226 = vst [vmem:[%s4 + $0x3a8] sm:$0xff] %v2098
  %2227 = vst [vmem:[%s4 + $0x3b0] sm:$0xff] %v2099
  %2228 = vst [vmem:[%s4 + $0x3b8] sm:$0xff] %v2100
  %2229 = vst [vmem:[%s4 + $0x3c0] sm:$0xff] %v2101
  %2230 = vst [vmem:[%s4 + $0x3c8] sm:$0xff] %v2102
  %2231 = vst [vmem:[%s4 + $0x3d0] sm:$0xff] %v2103
  %2232 = vst [vmem:[%s4 + $0x3d8] sm:$0xff] %v2104
  %2233 = vst [vmem:[%s4 + $0x3e0] sm:$0xff] %v2105
  %2234 = vst [vmem:[%s4 + $0x3e8] sm:$0xff] %v2106
  %2235 = vst [vmem:[%s4 + $0x3f0] sm:$0xff] %v2107
  %2236 = vst [vmem:[%s4 + $0x3f8] sm:$0xff] %v2108
  // Predicated region
  $region18: #{_gwd_item.2} parent=0 // pred_check
    _
  $region19: #{_gwd_item.2} parent=0 // pred_check_branch
    %2238 = sbr.rel (0) target = $region21
  $region20: #{_gwd_item.2} parent=0 // pred_region
    _
  $region21: #{_gwd_item.2} parent=0 // pred_fallthru
    _
  // Predicated region
  $region22: #{_gwd_item.2} parent=0 // pred_check
    _
  $region23: #{_gwd_item.2} parent=0 // pred_check_branch
    %2240 = sbr.rel (0) target = $region25
  $region24: #{_gwd_item.2} parent=0 // pred_region
    _
  $region25: #{_gwd_item.2} parent=0 // pred_fallthru
    _

// kernel: body.4
$region0: #{body.4}
  #allocation0 [shape = 'u32[]', space=smem, size = 0x4, offset = 0x4, fixed_abs, tag = 'smem constant byte address 0x4 - core index']
  #allocation1 [shape = 'u32[144,128]{1,0:T(1,128)}', space=vmem, size = 0x12000, scoped, tag = 'internal scratch']
  #allocation2 [shape = 'f32[1,512]{1,0:T(1,128)}', space=vmem, size = 0x800, scoped, tag = 'scratch operand']
  #allocation3 [shape = 'f32[1,1]{1,0:T(1,128)}', space=vmem, size = 0x200, scoped, tag = 'scratch operand']
  %s0 = inlined_call_operand.vmem [shape: f32[256,512], index: 0, kind: input, shape index: {}]
  %s1 = inlined_call_operand.vmem [shape: f32[256,1], index: 1, kind: input, shape index: {}]
  %s2 = inlined_call_operand.vmem [shape: f32[1,512], index: 2, kind: input, shape index: {}]
  %s3 = inlined_call_operand.vmem [shape: f32[256,1], index: 3, kind: input, shape index: {}]
  %s4 = inlined_call_operand.vmem [shape: f32[1,512], index: 4, kind: input, shape index: {}]
  %s5 = inlined_call_operand.vmem [shape: f32[256,1], index: 5, kind: output, shape index: {0}]
  %s6 = inlined_call_operand.vmem [shape: f32[1,512], index: 6, kind: output, shape index: {1}]
  %s7 = inlined_call_operand.hbm [shape: f32[1,1], index: 7, kind: output, shape index: {2}]
  %8 = xla_tuple %s5, %s6, %s7
  %s9 = sld [smem:[#allocation0]]
  $region54: #{body.4} parent=0
    _
  %s11 = ssub.s32 1, %s9
  %s12 = scalar_select 0, %s11, %s9
  $region1: #{body.4} parent=0
    #allocation4 [shape = 'u8[512]{0}', space=vmem, size = 0x400, scoped, tag = 'output window, operand 2, single buffered']
    #allocation5 [shape = 's32[1]{0}', space=sflag, size = 0x4, scoped, tag = 'scoped memory for body.4']
    %13 = vsyncpa [#allocation5], 0
    // Predicated region
    $region2: #{body.4} parent=1 // pred_check
      _
    $region3: #{body.4} parent=1 // pred_check_branch
      %15 = sbr.rel (0) target = $region5
    $region4: #{body.4} parent=1 // pred_region
      _
    $region5: #{body.4} parent=1 // pred_fallthru
      _
    // Predicated region
    $region6: #{body.4} parent=1 // pred_check
      _
    $region7: #{body.4} parent=1 // pred_check_branch
      %17 = sbr.rel (0) target = $region9
    $region8: #{body.4} parent=1 // pred_region
      _
    $region9: #{body.4} parent=1 // pred_fallthru
      _
    // Predicated region
    $region10: #{body.4} parent=1 // pred_check
      _
    $region11: #{body.4} parent=1 // pred_check_branch
      %19 = sbr.rel (0) target = $region13
    $region12: #{body.4} parent=1 // pred_region
      _
    $region13: #{body.4} parent=1 // pred_fallthru
      _
    // Predicated region
    $region14: #{body.4} parent=1 // pred_check
      _
    $region15: #{body.4} parent=1 // pred_check_branch
      %21 = sbr.rel (0) target = $region17
    $region16: #{body.4} parent=1 // pred_region
      _
    $region17: #{body.4} parent=1 // pred_fallthru
      _
    // Predicated region
    $region18: #{body.4} parent=1 // pred_check
      _
    $region19: #{body.4} parent=1 // pred_check_branch
      %23 = sbr.rel (0) target = $region21
    $region20: #{body.4} parent=1 // pred_region
      _
    $region21: #{body.4} parent=1 // pred_fallthru
      _
    %p24 = scmp.eq.s32.totalorder 0, 0
    // Predicated region
    $region22: #{body.4} parent=1 // pred_check
      %p25 = pneg %p24
    $region23: #{body.4} parent=1 // pred_check_branch
      %27 = sbr.rel (%p25) target = $region25
    $region24: #{body.4} parent=1 // pred_region
      %v28 = vlaneseq
      %vm29 = vcmp.ge.s32.totalorder %v28, 0
      %vm30 = vcmp.lt.s32.totalorder %v28, 512
      %vm31 = vmand %vm29, %vm30
      %32 = vst.msk [vmem:[#allocation2] sm:$0xf] %vm31, 0.0
      %vm33 = vcmask 0
      %34 = vst.msk [vmem:[#allocation3] sm:$0x1] %vm33, 0.0
    $region25: #{body.4} parent=1 // pred_fallthru
      _
    %v35 = vld [vmem:[%s0] sm:$0xff]
    %v36 = vld [vmem:[%s0 + $0x8] sm:$0xff]
    %v37 = vld [vmem:[%s0 + $0x10] sm:$0xff]
    %v38 = vld [vmem:[%s0 + $0x18] sm:$0xff]
    %v39 = vld [vmem:[%s0 + $0x20] sm:$0xff]
    %v40 = vld [vmem:[%s0 + $0x28] sm:$0xff]
    %v41 = vld [vmem:[%s0 + $0x30] sm:$0xff]
    %v42 = vld [vmem:[%s0 + $0x38] sm:$0xff]
    %v43 = vld [vmem:[%s0 + $0x40] sm:$0xff]
    %v44 = vld [vmem:[%s0 + $0x48] sm:$0xff]
    %v45 = vld [vmem:[%s0 + $0x50] sm:$0xff]
    %v46 = vld [vmem:[%s0 + $0x58] sm:$0xff]
    %v47 = vld [vmem:[%s0 + $0x60] sm:$0xff]
    %v48 = vld [vmem:[%s0 + $0x68] sm:$0xff]
    %v49 = vld [vmem:[%s0 + $0x70] sm:$0xff]
    %v50 = vld [vmem:[%s0 + $0x78] sm:$0xff]
    %v51 = vld [vmem:[%s0 + $0x80] sm:$0xff]
    %v52 = vld [vmem:[%s0 + $0x88] sm:$0xff]
    %v53 = vld [vmem:[%s0 + $0x90] sm:$0xff]
    %v54 = vld [vmem:[%s0 + $0x98] sm:$0xff]
    %v55 = vld [vmem:[%s0 + $0xa0] sm:$0xff]
    %v56 = vld [vmem:[%s0 + $0xa8] sm:$0xff]
    %v57 = vld [vmem:[%s0 + $0xb0] sm:$0xff]
    %v58 = vld [vmem:[%s0 + $0xb8] sm:$0xff]
    %v59 = vld [vmem:[%s0 + $0xc0] sm:$0xff]
    %v60 = vld [vmem:[%s0 + $0xc8] sm:$0xff]
    %v61 = vld [vmem:[%s0 + $0xd0] sm:$0xff]
    %v62 = vld [vmem:[%s0 + $0xd8] sm:$0xff]
    %v63 = vld [vmem:[%s0 + $0xe0] sm:$0xff]
    %v64 = vld [vmem:[%s0 + $0xe8] sm:$0xff]
    %v65 = vld [vmem:[%s0 + $0xf0] sm:$0xff]
    %v66 = vld [vmem:[%s0 + $0xf8] sm:$0xff]
    %v67 = vld [vmem:[%s0 + $0x100] sm:$0xff]
    %v68 = vld [vmem:[%s0 + $0x108] sm:$0xff]
    %v69 = vld [vmem:[%s0 + $0x110] sm:$0xff]
    %v70 = vld [vmem:[%s0 + $0x118] sm:$0xff]
    %v71 = vld [vmem:[%s0 + $0x120] sm:$0xff]
    %v72 = vld [vmem:[%s0 + $0x128] sm:$0xff]
    %v73 = vld [vmem:[%s0 + $0x130] sm:$0xff]
    %v74 = vld [vmem:[%s0 + $0x138] sm:$0xff]
    %v75 = vld [vmem:[%s0 + $0x140] sm:$0xff]
    %v76 = vld [vmem:[%s0 + $0x148] sm:$0xff]
    %v77 = vld [vmem:[%s0 + $0x150] sm:$0xff]
    %v78 = vld [vmem:[%s0 + $0x158] sm:$0xff]
    %v79 = vld [vmem:[%s0 + $0x160] sm:$0xff]
    %v80 = vld [vmem:[%s0 + $0x168] sm:$0xff]
    %v81 = vld [vmem:[%s0 + $0x170] sm:$0xff]
    %v82 = vld [vmem:[%s0 + $0x178] sm:$0xff]
    %v83 = vld [vmem:[%s0 + $0x180] sm:$0xff]
    %v84 = vld [vmem:[%s0 + $0x188] sm:$0xff]
    %v85 = vld [vmem:[%s0 + $0x190] sm:$0xff]
    %v86 = vld [vmem:[%s0 + $0x198] sm:$0xff]
    %v87 = vld [vmem:[%s0 + $0x1a0] sm:$0xff]
    %v88 = vld [vmem:[%s0 + $0x1a8] sm:$0xff]
    %v89 = vld [vmem:[%s0 + $0x1b0] sm:$0xff]
    %v90 = vld [vmem:[%s0 + $0x1b8] sm:$0xff]
    %v91 = vld [vmem:[%s0 + $0x1c0] sm:$0xff]
    %v92 = vld [vmem:[%s0 + $0x1c8] sm:$0xff]
    %v93 = vld [vmem:[%s0 + $0x1d0] sm:$0xff]
    %v94 = vld [vmem:[%s0 + $0x1d8] sm:$0xff]
    %v95 = vld [vmem:[%s0 + $0x1e0] sm:$0xff]
    %v96 = vld [vmem:[%s0 + $0x1e8] sm:$0xff]
    %v97 = vld [vmem:[%s0 + $0x1f0] sm:$0xff]
    %v98 = vld [vmem:[%s0 + $0x1f8] sm:$0xff]
    %v99 = vld [vmem:[%s0 + $0x200] sm:$0xff]
    %v100 = vld [vmem:[%s0 + $0x208] sm:$0xff]
    %v101 = vld [vmem:[%s0 + $0x210] sm:$0xff]
    %v102 = vld [vmem:[%s0 + $0x218] sm:$0xff]
    %v103 = vld [vmem:[%s0 + $0x220] sm:$0xff]
    %v104 = vld [vmem:[%s0 + $0x228] sm:$0xff]
    %v105 = vld [vmem:[%s0 + $0x230] sm:$0xff]
    %v106 = vld [vmem:[%s0 + $0x238] sm:$0xff]
    %v107 = vld [vmem:[%s0 + $0x240] sm:$0xff]
    %v108 = vld [vmem:[%s0 + $0x248] sm:$0xff]
    %v109 = vld [vmem:[%s0 + $0x250] sm:$0xff]
    %v110 = vld [vmem:[%s0 + $0x258] sm:$0xff]
    %v111 = vld [vmem:[%s0 + $0x260] sm:$0xff]
    %v112 = vld [vmem:[%s0 + $0x268] sm:$0xff]
    %v113 = vld [vmem:[%s0 + $0x270] sm:$0xff]
    %v114 = vld [vmem:[%s0 + $0x278] sm:$0xff]
    %v115 = vld [vmem:[%s0 + $0x280] sm:$0xff]
    %v116 = vld [vmem:[%s0 + $0x288] sm:$0xff]
    %v117 = vld [vmem:[%s0 + $0x290] sm:$0xff]
    %v118 = vld [vmem:[%s0 + $0x298] sm:$0xff]
    %v119 = vld [vmem:[%s0 + $0x2a0] sm:$0xff]
    %v120 = vld [vmem:[%s0 + $0x2a8] sm:$0xff]
    %v121 = vld [vmem:[%s0 + $0x2b0] sm:$0xff]
    %v122 = vld [vmem:[%s0 + $0x2b8] sm:$0xff]
    %v123 = vld [vmem:[%s0 + $0x2c0] sm:$0xff]
    %v124 = vld [vmem:[%s0 + $0x2c8] sm:$0xff]
    %v125 = vld [vmem:[%s0 + $0x2d0] sm:$0xff]
    %v126 = vld [vmem:[%s0 + $0x2d8] sm:$0xff]
    %v127 = vld [vmem:[%s0 + $0x2e0] sm:$0xff]
    %v128 = vld [vmem:[%s0 + $0x2e8] sm:$0xff]
    %v129 = vld [vmem:[%s0 + $0x2f0] sm:$0xff]
    %v130 = vld [vmem:[%s0 + $0x2f8] sm:$0xff]
    %v131 = vld [vmem:[%s0 + $0x300] sm:$0xff]
    %v132 = vld [vmem:[%s0 + $0x308] sm:$0xff]
    %v133 = vld [vmem:[%s0 + $0x310] sm:$0xff]
    %v134 = vld [vmem:[%s0 + $0x318] sm:$0xff]
    %v135 = vld [vmem:[%s0 + $0x320] sm:$0xff]
    %v136 = vld [vmem:[%s0 + $0x328] sm:$0xff]
    %v137 = vld [vmem:[%s0 + $0x330] sm:$0xff]
    %v138 = vld [vmem:[%s0 + $0x338] sm:$0xff]
    %v139 = vld [vmem:[%s0 + $0x340] sm:$0xff]
    %v140 = vld [vmem:[%s0 + $0x348] sm:$0xff]
    %v141 = vld [vmem:[%s0 + $0x350] sm:$0xff]
    %v142 = vld [vmem:[%s0 + $0x358] sm:$0xff]
    %v143 = vld [vmem:[%s0 + $0x360] sm:$0xff]
    %v144 = vld [vmem:[%s0 + $0x368] sm:$0xff]
    %v145 = vld [vmem:[%s0 + $0x370] sm:$0xff]
    %v146 = vld [vmem:[%s0 + $0x378] sm:$0xff]
    %v147 = vld [vmem:[%s0 + $0x380] sm:$0xff]
    %v148 = vld [vmem:[%s0 + $0x388] sm:$0xff]
    %v149 = vld [vmem:[%s0 + $0x390] sm:$0xff]
    %v150 = vld [vmem:[%s0 + $0x398] sm:$0xff]
    %v151 = vld [vmem:[%s0 + $0x3a0] sm:$0xff]
    %v152 = vld [vmem:[%s0 + $0x3a8] sm:$0xff]
    %v153 = vld [vmem:[%s0 + $0x3b0] sm:$0xff]
    %v154 = vld [vmem:[%s0 + $0x3b8] sm:$0xff]
    %v155 = vld [vmem:[%s0 + $0x3c0] sm:$0xff]
    %v156 = vld [vmem:[%s0 + $0x3c8] sm:$0xff]
    %v157 = vld [vmem:[%s0 + $0x3d0] sm:$0xff]
    %v158 = vld [vmem:[%s0 + $0x3d8] sm:$0xff]
    %v159 = vld [vmem:[%s0 + $0x3e0] sm:$0xff]
    %v160 = vld [vmem:[%s0 + $0x3e8] sm:$0xff]
    %v161 = vld [vmem:[%s0 + $0x3f0] sm:$0xff]
    %v162 = vld [vmem:[%s0 + $0x3f8] sm:$0xff]
    %v163 = vld [vmem:[%s3] sm:$0xff]
    %v164 = vld [vmem:[%s3 + $0x8] sm:$0xff]
    %v165 = vld [vmem:[%s3 + $0x10] sm:$0xff]
    %v166 = vld [vmem:[%s3 + $0x18] sm:$0xff]
    %v167 = vld [vmem:[%s3 + $0x20] sm:$0xff]
    %v168 = vld [vmem:[%s3 + $0x28] sm:$0xff]
    %v169 = vld [vmem:[%s3 + $0x30] sm:$0xff]
    %v170 = vld [vmem:[%s3 + $0x38] sm:$0xff]
    %v171 = vld [vmem:[%s3 + $0x40] sm:$0xff]
    %v172 = vld [vmem:[%s3 + $0x48] sm:$0xff]
    %v173 = vld [vmem:[%s3 + $0x50] sm:$0xff]
    %v174 = vld [vmem:[%s3 + $0x58] sm:$0xff]
    %v175 = vld [vmem:[%s3 + $0x60] sm:$0xff]
    %v176 = vld [vmem:[%s3 + $0x68] sm:$0xff]
    %v177 = vld [vmem:[%s3 + $0x70] sm:$0xff]
    %v178 = vld [vmem:[%s3 + $0x78] sm:$0xff]
    %v179 = vld [vmem:[%s3 + $0x80] sm:$0xff]
    %v180 = vld [vmem:[%s3 + $0x88] sm:$0xff]
    %v181 = vld [vmem:[%s3 + $0x90] sm:$0xff]
    %v182 = vld [vmem:[%s3 + $0x98] sm:$0xff]
    %v183 = vld [vmem:[%s3 + $0xa0] sm:$0xff]
    %v184 = vld [vmem:[%s3 + $0xa8] sm:$0xff]
    %v185 = vld [vmem:[%s3 + $0xb0] sm:$0xff]
    %v186 = vld [vmem:[%s3 + $0xb8] sm:$0xff]
    %v187 = vld [vmem:[%s3 + $0xc0] sm:$0xff]
    %v188 = vld [vmem:[%s3 + $0xc8] sm:$0xff]
    %v189 = vld [vmem:[%s3 + $0xd0] sm:$0xff]
    %v190 = vld [vmem:[%s3 + $0xd8] sm:$0xff]
    %v191 = vld [vmem:[%s3 + $0xe0] sm:$0xff]
    %v192 = vld [vmem:[%s3 + $0xe8] sm:$0xff]
    %v193 = vld [vmem:[%s3 + $0xf0] sm:$0xff]
    %v194 = vld [vmem:[%s3 + $0xf8] sm:$0xff]
    %v195 = vld [vmem:[%s4] sm:$0xf]
    %v196 = vmul.f32 %v195, 10.0
    %v197 = vmul.f32 %v163, 10.0
    %v198 = vmul.f32 %v164, 10.0
    %v199 = vmul.f32 %v165, 10.0
    %v200 = vmul.f32 %v166, 10.0
    %v201 = vmul.f32 %v167, 10.0
    %v202 = vmul.f32 %v168, 10.0
    %v203 = vmul.f32 %v169, 10.0
    %v204 = vmul.f32 %v170, 10.0
    %v205 = vmul.f32 %v171, 10.0
    %v206 = vmul.f32 %v172, 10.0
    %v207 = vmul.f32 %v173, 10.0
    %v208 = vmul.f32 %v174, 10.0
    %v209 = vmul.f32 %v175, 10.0
    %v210 = vmul.f32 %v176, 10.0
    %v211 = vmul.f32 %v177, 10.0
    %v212 = vmul.f32 %v178, 10.0
    %v213 = vmul.f32 %v179, 10.0
    %v214 = vmul.f32 %v180, 10.0
    %v215 = vmul.f32 %v181, 10.0
    %v216 = vmul.f32 %v182, 10.0
    %v217 = vmul.f32 %v183, 10.0
    %v218 = vmul.f32 %v184, 10.0
    %v219 = vmul.f32 %v185, 10.0
    %v220 = vmul.f32 %v186, 10.0
    %v221 = vmul.f32 %v187, 10.0
    %v222 = vmul.f32 %v188, 10.0
    %v223 = vmul.f32 %v189, 10.0
    %v224 = vmul.f32 %v190, 10.0
    %v225 = vmul.f32 %v191, 10.0
    %v226 = vmul.f32 %v192, 10.0
    %v227 = vmul.f32 %v193, 10.0
    %v228 = vmul.f32 %v194, 10.0
    %230 = vset.pattern.permute.xlu0 0
    %231 = vperm.xlu0 %230, %v197
    %v232 = vpop.permute.xlu0 %231
    %235 = vset.pattern.permute.xlu0 0
    %236 = vperm.xlu0 %235, %v198
    %v237 = vpop.permute.xlu0 %236
    %240 = vset.pattern.permute.xlu0 0
    %241 = vperm.xlu0 %240, %v199
    %v242 = vpop.permute.xlu0 %241
    %245 = vset.pattern.permute.xlu0 0
    %246 = vperm.xlu0 %245, %v200
    %v247 = vpop.permute.xlu0 %246
    %250 = vset.pattern.permute.xlu0 0
    %251 = vperm.xlu0 %250, %v201
    %v252 = vpop.permute.xlu0 %251
    %255 = vset.pattern.permute.xlu0 0
    %256 = vperm.xlu0 %255, %v202
    %v257 = vpop.permute.xlu0 %256
    %260 = vset.pattern.permute.xlu0 0
    %261 = vperm.xlu0 %260, %v203
    %v262 = vpop.permute.xlu0 %261
    %265 = vset.pattern.permute.xlu0 0
    %266 = vperm.xlu0 %265, %v204
    %v267 = vpop.permute.xlu0 %266
    %270 = vset.pattern.permute.xlu0 0
    %271 = vperm.xlu0 %270, %v205
    %v272 = vpop.permute.xlu0 %271
    %275 = vset.pattern.permute.xlu0 0
    %276 = vperm.xlu0 %275, %v206
    %v277 = vpop.permute.xlu0 %276
    %280 = vset.pattern.permute.xlu0 0
    %281 = vperm.xlu0 %280, %v207
    %v282 = vpop.permute.xlu0 %281
    %285 = vset.pattern.permute.xlu0 0
    %286 = vperm.xlu0 %285, %v208
    %v287 = vpop.permute.xlu0 %286
    %290 = vset.pattern.permute.xlu0 0
    %291 = vperm.xlu0 %290, %v209
    %v292 = vpop.permute.xlu0 %291
    %295 = vset.pattern.permute.xlu0 0
    %296 = vperm.xlu0 %295, %v210
    %v297 = vpop.permute.xlu0 %296
    %300 = vset.pattern.permute.xlu0 0
    %301 = vperm.xlu0 %300, %v211
    %v302 = vpop.permute.xlu0 %301
    %305 = vset.pattern.permute.xlu0 0
    %306 = vperm.xlu0 %305, %v212
    %v307 = vpop.permute.xlu0 %306
    %310 = vset.pattern.permute.xlu0 0
    %311 = vperm.xlu0 %310, %v213
    %v312 = vpop.permute.xlu0 %311
    %315 = vset.pattern.permute.xlu0 0
    %316 = vperm.xlu0 %315, %v214
    %v317 = vpop.permute.xlu0 %316
    %320 = vset.pattern.permute.xlu0 0
    %321 = vperm.xlu0 %320, %v215
    %v322 = vpop.permute.xlu0 %321
    %325 = vset.pattern.permute.xlu0 0
    %326 = vperm.xlu0 %325, %v216
    %v327 = vpop.permute.xlu0 %326
    %330 = vset.pattern.permute.xlu0 0
    %331 = vperm.xlu0 %330, %v217
    %v332 = vpop.permute.xlu0 %331
    %335 = vset.pattern.permute.xlu0 0
    %336 = vperm.xlu0 %335, %v218
    %v337 = vpop.permute.xlu0 %336
    %340 = vset.pattern.permute.xlu0 0
    %341 = vperm.xlu0 %340, %v219
    %v342 = vpop.permute.xlu0 %341
    %345 = vset.pattern.permute.xlu0 0
    %346 = vperm.xlu0 %345, %v220
    %v347 = vpop.permute.xlu0 %346
    %350 = vset.pattern.permute.xlu0 0
    %351 = vperm.xlu0 %350, %v221
    %v352 = vpop.permute.xlu0 %351
    %355 = vset.pattern.permute.xlu0 0
    %356 = vperm.xlu0 %355, %v222
    %v357 = vpop.permute.xlu0 %356
    %360 = vset.pattern.permute.xlu0 0
    %361 = vperm.xlu0 %360, %v223
    %v362 = vpop.permute.xlu0 %361
    %365 = vset.pattern.permute.xlu0 0
    %366 = vperm.xlu0 %365, %v224
    %v367 = vpop.permute.xlu0 %366
    %370 = vset.pattern.permute.xlu0 0
    %371 = vperm.xlu0 %370, %v225
    %v372 = vpop.permute.xlu0 %371
    %375 = vset.pattern.permute.xlu0 0
    %376 = vperm.xlu0 %375, %v226
    %v377 = vpop.permute.xlu0 %376
    %380 = vset.pattern.permute.xlu0 0
    %381 = vperm.xlu0 %380, %v227
    %v382 = vpop.permute.xlu0 %381
    %385 = vset.pattern.permute.xlu0 0
    %386 = vperm.xlu0 %385, %v228
    %v387 = vpop.permute.xlu0 %386
    %v389 = vadd.f32 %v35, %v232
    %v390 = vadd.f32 %v36, %v232
    %v391 = vadd.f32 %v37, %v232
    %v392 = vadd.f32 %v38, %v232
    %v393 = vadd.f32 %v39, %v237
    %v394 = vadd.f32 %v40, %v237
    %v395 = vadd.f32 %v41, %v237
    %v396 = vadd.f32 %v42, %v237
    %v397 = vadd.f32 %v43, %v242
    %v398 = vadd.f32 %v44, %v242
    %v399 = vadd.f32 %v45, %v242
    %v400 = vadd.f32 %v46, %v242
    %v401 = vadd.f32 %v47, %v247
    %v402 = vadd.f32 %v48, %v247
    %v403 = vadd.f32 %v49, %v247
    %v404 = vadd.f32 %v50, %v247
    %v405 = vadd.f32 %v51, %v252
    %v406 = vadd.f32 %v52, %v252
    %v407 = vadd.f32 %v53, %v252
    %v408 = vadd.f32 %v54, %v252
    %v409 = vadd.f32 %v55, %v257
    %v410 = vadd.f32 %v56, %v257
    %v411 = vadd.f32 %v57, %v257
    %v412 = vadd.f32 %v58, %v257
    %v413 = vadd.f32 %v59, %v262
    %v414 = vadd.f32 %v60, %v262
    %v415 = vadd.f32 %v61, %v262
    %v416 = vadd.f32 %v62, %v262
    %v417 = vadd.f32 %v63, %v267
    %v418 = vadd.f32 %v64, %v267
    %v419 = vadd.f32 %v65, %v267
    %v420 = vadd.f32 %v66, %v267
    %v421 = vadd.f32 %v67, %v272
    %v422 = vadd.f32 %v68, %v272
    %v423 = vadd.f32 %v69, %v272
    %v424 = vadd.f32 %v70, %v272
    %v425 = vadd.f32 %v71, %v277
    %v426 = vadd.f32 %v72, %v277
    %v427 = vadd.f32 %v73, %v277
    %v428 = vadd.f32 %v74, %v277
    %v429 = vadd.f32 %v75, %v282
    %v430 = vadd.f32 %v76, %v282
    %v431 = vadd.f32 %v77, %v282
    %v432 = vadd.f32 %v78, %v282
    %v433 = vadd.f32 %v79, %v287
    %v434 = vadd.f32 %v80, %v287
    %v435 = vadd.f32 %v81, %v287
    %v436 = vadd.f32 %v82, %v287
    %v437 = vadd.f32 %v83, %v292
    %v438 = vadd.f32 %v84, %v292
    %v439 = vadd.f32 %v85, %v292
    %v440 = vadd.f32 %v86, %v292
    %v441 = vadd.f32 %v87, %v297
    %v442 = vadd.f32 %v88, %v297
    %v443 = vadd.f32 %v89, %v297
    %v444 = vadd.f32 %v90, %v297
    %v445 = vadd.f32 %v91, %v302
    %v446 = vadd.f32 %v92, %v302
    %v447 = vadd.f32 %v93, %v302
    %v448 = vadd.f32 %v94, %v302
    %v449 = vadd.f32 %v95, %v307
    %v450 = vadd.f32 %v96, %v307
    %v451 = vadd.f32 %v97, %v307
    %v452 = vadd.f32 %v98, %v307
    %v453 = vadd.f32 %v99, %v312
    %v454 = vadd.f32 %v100, %v312
    %v455 = vadd.f32 %v101, %v312
    %v456 = vadd.f32 %v102, %v312
    %v457 = vadd.f32 %v103, %v317
    %v458 = vadd.f32 %v104, %v317
    %v459 = vadd.f32 %v105, %v317
    %v460 = vadd.f32 %v106, %v317
    %v461 = vadd.f32 %v107, %v322
    %v462 = vadd.f32 %v108, %v322
    %v463 = vadd.f32 %v109, %v322
    %v464 = vadd.f32 %v110, %v322
    %v465 = vadd.f32 %v111, %v327
    %v466 = vadd.f32 %v112, %v327
    %v467 = vadd.f32 %v113, %v327
    %v468 = vadd.f32 %v114, %v327
    %v469 = vadd.f32 %v115, %v332
    %v470 = vadd.f32 %v116, %v332
    %v471 = vadd.f32 %v117, %v332
    %v472 = vadd.f32 %v118, %v332
    %v473 = vadd.f32 %v119, %v337
    %v474 = vadd.f32 %v120, %v337
    %v475 = vadd.f32 %v121, %v337
    %v476 = vadd.f32 %v122, %v337
    %v477 = vadd.f32 %v123, %v342
    %v478 = vadd.f32 %v124, %v342
    %v479 = vadd.f32 %v125, %v342
    %v480 = vadd.f32 %v126, %v342
    %v481 = vadd.f32 %v127, %v347
    %v482 = vadd.f32 %v128, %v347
    %v483 = vadd.f32 %v129, %v347
    %v484 = vadd.f32 %v130, %v347
    %v485 = vadd.f32 %v131, %v352
    %v486 = vadd.f32 %v132, %v352
    %v487 = vadd.f32 %v133, %v352
    %v488 = vadd.f32 %v134, %v352
    %v489 = vadd.f32 %v135, %v357
    %v490 = vadd.f32 %v136, %v357
    %v491 = vadd.f32 %v137, %v357
    %v492 = vadd.f32 %v138, %v357
    %v493 = vadd.f32 %v139, %v362
    %v494 = vadd.f32 %v140, %v362
    %v495 = vadd.f32 %v141, %v362
    %v496 = vadd.f32 %v142, %v362
    %v497 = vadd.f32 %v143, %v367
    %v498 = vadd.f32 %v144, %v367
    %v499 = vadd.f32 %v145, %v367
    %v500 = vadd.f32 %v146, %v367
    %v501 = vadd.f32 %v147, %v372
    %v502 = vadd.f32 %v148, %v372
    %v503 = vadd.f32 %v149, %v372
    %v504 = vadd.f32 %v150, %v372
    %v505 = vadd.f32 %v151, %v377
    %v506 = vadd.f32 %v152, %v377
    %v507 = vadd.f32 %v153, %v377
    %v508 = vadd.f32 %v154, %v377
    %v509 = vadd.f32 %v155, %v382
    %v510 = vadd.f32 %v156, %v382
    %v511 = vadd.f32 %v157, %v382
    %v512 = vadd.f32 %v158, %v382
    %v513 = vadd.f32 %v159, %v387
    %v514 = vadd.f32 %v160, %v387
    %v515 = vadd.f32 %v161, %v387
    %v516 = vadd.f32 %v162, %v387
    %v518 = vlaneseq
    %v519 = vshrl.u32 %v518, 7
    %v520 = vsub.s32 0, %v519
    %v521 = vrot.slane %v196, %v520
    %v522 = vlaneseq
    %v523 = vshrl.u32 %v522, 7
    %v524 = vsub.s32 1, %v523
    %v525 = vrot.slane %v196, %v524
    %v526 = vlaneseq
    %v527 = vshrl.u32 %v526, 7
    %v528 = vsub.s32 2, %v527
    %v529 = vrot.slane %v196, %v528
    %v530 = vlaneseq
    %v531 = vshrl.u32 %v530, 7
    %v532 = vsub.s32 3, %v531
    %v533 = vrot.slane %v196, %v532
    %v538 = vadd.f32 %v389, %v521
    %v539 = vadd.f32 %v390, %v525
    %v540 = vadd.f32 %v391, %v529
    %v541 = vadd.f32 %v392, %v533
    %v542 = vadd.f32 %v393, %v521
    %v543 = vadd.f32 %v394, %v525
    %v544 = vadd.f32 %v395, %v529
    %v545 = vadd.f32 %v396, %v533
    %v546 = vadd.f32 %v397, %v521
    %v547 = vadd.f32 %v398, %v525
    %v548 = vadd.f32 %v399, %v529
    %v549 = vadd.f32 %v400, %v533
    %v550 = vadd.f32 %v401, %v521
    %v551 = vadd.f32 %v402, %v525
    %v552 = vadd.f32 %v403, %v529
    %v553 = vadd.f32 %v404, %v533
    %v554 = vadd.f32 %v405, %v521
    %v555 = vadd.f32 %v406, %v525
    %v556 = vadd.f32 %v407, %v529
    %v557 = vadd.f32 %v408, %v533
    %v558 = vadd.f32 %v409, %v521
    %v559 = vadd.f32 %v410, %v525
    %v560 = vadd.f32 %v411, %v529
    %v561 = vadd.f32 %v412, %v533
    %v562 = vadd.f32 %v413, %v521
    %v563 = vadd.f32 %v414, %v525
    %v564 = vadd.f32 %v415, %v529
    %v565 = vadd.f32 %v416, %v533
    %v566 = vadd.f32 %v417, %v521
    %v567 = vadd.f32 %v418, %v525
    %v568 = vadd.f32 %v419, %v529
    %v569 = vadd.f32 %v420, %v533
    %v570 = vadd.f32 %v421, %v521
    %v571 = vadd.f32 %v422, %v525
    %v572 = vadd.f32 %v423, %v529
    %v573 = vadd.f32 %v424, %v533
    %v574 = vadd.f32 %v425, %v521
    %v575 = vadd.f32 %v426, %v525
    %v576 = vadd.f32 %v427, %v529
    %v577 = vadd.f32 %v428, %v533
    %v578 = vadd.f32 %v429, %v521
    %v579 = vadd.f32 %v430, %v525
    %v580 = vadd.f32 %v431, %v529
    %v581 = vadd.f32 %v432, %v533
    %v582 = vadd.f32 %v433, %v521
    %v583 = vadd.f32 %v434, %v525
    %v584 = vadd.f32 %v435, %v529
    %v585 = vadd.f32 %v436, %v533
    %v586 = vadd.f32 %v437, %v521
    %v587 = vadd.f32 %v438, %v525
    %v588 = vadd.f32 %v439, %v529
    %v589 = vadd.f32 %v440, %v533
    %v590 = vadd.f32 %v441, %v521
    %v591 = vadd.f32 %v442, %v525
    %v592 = vadd.f32 %v443, %v529
    %v593 = vadd.f32 %v444, %v533
    %v594 = vadd.f32 %v445, %v521
    %v595 = vadd.f32 %v446, %v525
    %v596 = vadd.f32 %v447, %v529
    %v597 = vadd.f32 %v448, %v533
    %v598 = vadd.f32 %v449, %v521
    %v599 = vadd.f32 %v450, %v525
    %v600 = vadd.f32 %v451, %v529
    %v601 = vadd.f32 %v452, %v533
    %v602 = vadd.f32 %v453, %v521
    %v603 = vadd.f32 %v454, %v525
    %v604 = vadd.f32 %v455, %v529
    %v605 = vadd.f32 %v456, %v533
    %v606 = vadd.f32 %v457, %v521
    %v607 = vadd.f32 %v458, %v525
    %v608 = vadd.f32 %v459, %v529
    %v609 = vadd.f32 %v460, %v533
    %v610 = vadd.f32 %v461, %v521
    %v611 = vadd.f32 %v462, %v525
    %v612 = vadd.f32 %v463, %v529
    %v613 = vadd.f32 %v464, %v533
    %v614 = vadd.f32 %v465, %v521
    %v615 = vadd.f32 %v466, %v525
    %v616 = vadd.f32 %v467, %v529
    %v617 = vadd.f32 %v468, %v533
    %v618 = vadd.f32 %v469, %v521
    %v619 = vadd.f32 %v470, %v525
    %v620 = vadd.f32 %v471, %v529
    %v621 = vadd.f32 %v472, %v533
    %v622 = vadd.f32 %v473, %v521
    %v623 = vadd.f32 %v474, %v525
    %v624 = vadd.f32 %v475, %v529
    %v625 = vadd.f32 %v476, %v533
    %v626 = vadd.f32 %v477, %v521
    %v627 = vadd.f32 %v478, %v525
    %v628 = vadd.f32 %v479, %v529
    %v629 = vadd.f32 %v480, %v533
    %v630 = vadd.f32 %v481, %v521
    %v631 = vadd.f32 %v482, %v525
    %v632 = vadd.f32 %v483, %v529
    %v633 = vadd.f32 %v484, %v533
    %v634 = vadd.f32 %v485, %v521
    %v635 = vadd.f32 %v486, %v525
    %v636 = vadd.f32 %v487, %v529
    %v637 = vadd.f32 %v488, %v533
    %v638 = vadd.f32 %v489, %v521
    %v639 = vadd.f32 %v490, %v525
    %v640 = vadd.f32 %v491, %v529
    %v641 = vadd.f32 %v492, %v533
    %v642 = vadd.f32 %v493, %v521
    %v643 = vadd.f32 %v494, %v525
    %v644 = vadd.f32 %v495, %v529
    %v645 = vadd.f32 %v496, %v533
    %v646 = vadd.f32 %v497, %v521
    %v647 = vadd.f32 %v498, %v525
    %v648 = vadd.f32 %v499, %v529
    %v649 = vadd.f32 %v500, %v533
    %v650 = vadd.f32 %v501, %v521
    %v651 = vadd.f32 %v502, %v525
    %v652 = vadd.f32 %v503, %v529
    %v653 = vadd.f32 %v504, %v533
    %v654 = vadd.f32 %v505, %v521
    %v655 = vadd.f32 %v506, %v525
    %v656 = vadd.f32 %v507, %v529
    %v657 = vadd.f32 %v508, %v533
    %v658 = vadd.f32 %v509, %v521
    %v659 = vadd.f32 %v510, %v525
    %v660 = vadd.f32 %v511, %v529
    %v661 = vadd.f32 %v512, %v533
    %v662 = vadd.f32 %v513, %v521
    %v663 = vadd.f32 %v514, %v525
    %v664 = vadd.f32 %v515, %v529
    %v665 = vadd.f32 %v516, %v533
    %v666 = vmul.f32 %v538, 1.442695
    %v667 = vpow.pop %v666
    %v668 = vmul.f32 %v539, 1.442695
    %v669 = vpow.pop %v668
    %v670 = vmul.f32 %v540, 1.442695
    %v671 = vpow.pop %v670
    %v672 = vmul.f32 %v541, 1.442695
    %v673 = vpow.pop %v672
    %v674 = vmul.f32 %v542, 1.442695
    %v675 = vpow.pop %v674
    %v676 = vmul.f32 %v543, 1.442695
    %v677 = vpow.pop %v676
    %v678 = vmul.f32 %v544, 1.442695
    %v679 = vpow.pop %v678
    %v680 = vmul.f32 %v545, 1.442695
    %v681 = vpow.pop %v680
    %v682 = vmul.f32 %v546, 1.442695
    %v683 = vpow.pop %v682
    %v684 = vmul.f32 %v547, 1.442695
    %v685 = vpow.pop %v684
    %v686 = vmul.f32 %v548, 1.442695
    %v687 = vpow.pop %v686
    %v688 = vmul.f32 %v549, 1.442695
    %v689 = vpow.pop %v688
    %v690 = vmul.f32 %v550, 1.442695
    %v691 = vpow.pop %v690
    %v692 = vmul.f32 %v551, 1.442695
    %v693 = vpow.pop %v692
    %v694 = vmul.f32 %v552, 1.442695
    %v695 = vpow.pop %v694
    %v696 = vmul.f32 %v553, 1.442695
    %v697 = vpow.pop %v696
    %v698 = vmul.f32 %v554, 1.442695
    %v699 = vpow.pop %v698
    %v700 = vmul.f32 %v555, 1.442695
    %v701 = vpow.pop %v700
    %v702 = vmul.f32 %v556, 1.442695
    %v703 = vpow.pop %v702
    %v704 = vmul.f32 %v557, 1.442695
    %v705 = vpow.pop %v704
    %v706 = vmul.f32 %v558, 1.442695
    %v707 = vpow.pop %v706
    %v708 = vmul.f32 %v559, 1.442695
    %v709 = vpow.pop %v708
    %v710 = vmul.f32 %v560, 1.442695
    %v711 = vpow.pop %v710
    %v712 = vmul.f32 %v561, 1.442695
    %v713 = vpow.pop %v712
    %v714 = vmul.f32 %v562, 1.442695
    %v715 = vpow.pop %v714
    %v716 = vmul.f32 %v563, 1.442695
    %v717 = vpow.pop %v716
    %v718 = vmul.f32 %v564, 1.442695
    %v719 = vpow.pop %v718
    %v720 = vmul.f32 %v565, 1.442695
    %v721 = vpow.pop %v720
    %v722 = vmul.f32 %v566, 1.442695
    %v723 = vpow.pop %v722
    %v724 = vmul.f32 %v567, 1.442695
    %v725 = vpow.pop %v724
    %v726 = vmul.f32 %v568, 1.442695
    %v727 = vpow.pop %v726
    %v728 = vmul.f32 %v569, 1.442695
    %v729 = vpow.pop %v728
    %v730 = vmul.f32 %v570, 1.442695
    %v731 = vpow.pop %v730
    %v732 = vmul.f32 %v571, 1.442695
    %v733 = vpow.pop %v732
    %v734 = vmul.f32 %v572, 1.442695
    %v735 = vpow.pop %v734
    %v736 = vmul.f32 %v573, 1.442695
    %v737 = vpow.pop %v736
    %v738 = vmul.f32 %v574, 1.442695
    %v739 = vpow.pop %v738
    %v740 = vmul.f32 %v575, 1.442695
    %v741 = vpow.pop %v740
    %v742 = vmul.f32 %v576, 1.442695
    %v743 = vpow.pop %v742
    %v744 = vmul.f32 %v577, 1.442695
    %v745 = vpow.pop %v744
    %v746 = vmul.f32 %v578, 1.442695
    %v747 = vpow.pop %v746
    %v748 = vmul.f32 %v579, 1.442695
    %v749 = vpow.pop %v748
    %v750 = vmul.f32 %v580, 1.442695
    %v751 = vpow.pop %v750
    %v752 = vmul.f32 %v581, 1.442695
    %v753 = vpow.pop %v752
    %v754 = vmul.f32 %v582, 1.442695
    %v755 = vpow.pop %v754
    %v756 = vmul.f32 %v583, 1.442695
    %v757 = vpow.pop %v756
    %v758 = vmul.f32 %v584, 1.442695
    %v759 = vpow.pop %v758
    %v760 = vmul.f32 %v585, 1.442695
    %v761 = vpow.pop %v760
    %v762 = vmul.f32 %v586, 1.442695
    %v763 = vpow.pop %v762
    %v764 = vmul.f32 %v587, 1.442695
    %v765 = vpow.pop %v764
    %v766 = vmul.f32 %v588, 1.442695
    %v767 = vpow.pop %v766
    %v768 = vmul.f32 %v589, 1.442695
    %v769 = vpow.pop %v768
    %v770 = vmul.f32 %v590, 1.442695
    %v771 = vpow.pop %v770
    %v772 = vmul.f32 %v591, 1.442695
    %v773 = vpow.pop %v772
    %v774 = vmul.f32 %v592, 1.442695
    %v775 = vpow.pop %v774
    %v776 = vmul.f32 %v593, 1.442695
    %v777 = vpow.pop %v776
    %v778 = vmul.f32 %v594, 1.442695
    %v779 = vpow.pop %v778
    %v780 = vmul.f32 %v595, 1.442695
    %v781 = vpow.pop %v780
    %v782 = vmul.f32 %v596, 1.442695
    %v783 = vpow.pop %v782
    %v784 = vmul.f32 %v597, 1.442695
    %v785 = vpow.pop %v784
    %v786 = vmul.f32 %v598, 1.442695
    %v787 = vpow.pop %v786
    %v788 = vmul.f32 %v599, 1.442695
    %v789 = vpow.pop %v788
    %v790 = vmul.f32 %v600, 1.442695
    %v791 = vpow.pop %v790
    %v792 = vmul.f32 %v601, 1.442695
    %v793 = vpow.pop %v792
    %v794 = vmul.f32 %v602, 1.442695
    %v795 = vpow.pop %v794
    %v796 = vmul.f32 %v603, 1.442695
    %v797 = vpow.pop %v796
    %v798 = vmul.f32 %v604, 1.442695
    %v799 = vpow.pop %v798
    %v800 = vmul.f32 %v605, 1.442695
    %v801 = vpow.pop %v800
    %v802 = vmul.f32 %v606, 1.442695
    %v803 = vpow.pop %v802
    %v804 = vmul.f32 %v607, 1.442695
    %v805 = vpow.pop %v804
    %v806 = vmul.f32 %v608, 1.442695
    %v807 = vpow.pop %v806
    %v808 = vmul.f32 %v609, 1.442695
    %v809 = vpow.pop %v808
    %v810 = vmul.f32 %v610, 1.442695
    %v811 = vpow.pop %v810
    %v812 = vmul.f32 %v611, 1.442695
    %v813 = vpow.pop %v812
    %v814 = vmul.f32 %v612, 1.442695
    %v815 = vpow.pop %v814
    %v816 = vmul.f32 %v613, 1.442695
    %v817 = vpow.pop %v816
    %v818 = vmul.f32 %v614, 1.442695
    %v819 = vpow.pop %v818
    %v820 = vmul.f32 %v615, 1.442695
    %v821 = vpow.pop %v820
    %v822 = vmul.f32 %v616, 1.442695
    %v823 = vpow.pop %v822
    %v824 = vmul.f32 %v617, 1.442695
    %v825 = vpow.pop %v824
    %v826 = vmul.f32 %v618, 1.442695
    %v827 = vpow.pop %v826
    %v828 = vmul.f32 %v619, 1.442695
    %v829 = vpow.pop %v828
    %v830 = vmul.f32 %v620, 1.442695
    %v831 = vpow.pop %v830
    %v832 = vmul.f32 %v621, 1.442695
    %v833 = vpow.pop %v832
    %v834 = vmul.f32 %v622, 1.442695
    %v835 = vpow.pop %v834
    %v836 = vmul.f32 %v623, 1.442695
    %v837 = vpow.pop %v836
    %v838 = vmul.f32 %v624, 1.442695
    %v839 = vpow.pop %v838
    %v840 = vmul.f32 %v625, 1.442695
    %v841 = vpow.pop %v840
    %v842 = vmul.f32 %v626, 1.442695
    %v843 = vpow.pop %v842
    %v844 = vmul.f32 %v627, 1.442695
    %v845 = vpow.pop %v844
    %v846 = vmul.f32 %v628, 1.442695
    %v847 = vpow.pop %v846
    %v848 = vmul.f32 %v629, 1.442695
    %v849 = vpow.pop %v848
    %v850 = vmul.f32 %v630, 1.442695
    %v851 = vpow.pop %v850
    %v852 = vmul.f32 %v631, 1.442695
    %v853 = vpow.pop %v852
    %v854 = vmul.f32 %v632, 1.442695
    %v855 = vpow.pop %v854
    %v856 = vmul.f32 %v633, 1.442695
    %v857 = vpow.pop %v856
    %v858 = vmul.f32 %v634, 1.442695
    %v859 = vpow.pop %v858
    %v860 = vmul.f32 %v635, 1.442695
    %v861 = vpow.pop %v860
    %v862 = vmul.f32 %v636, 1.442695
    %v863 = vpow.pop %v862
    %v864 = vmul.f32 %v637, 1.442695
    %v865 = vpow.pop %v864
    %v866 = vmul.f32 %v638, 1.442695
    %v867 = vpow.pop %v866
    %v868 = vmul.f32 %v639, 1.442695
    %v869 = vpow.pop %v868
    %v870 = vmul.f32 %v640, 1.442695
    %v871 = vpow.pop %v870
    %v872 = vmul.f32 %v641, 1.442695
    %v873 = vpow.pop %v872
    %v874 = vmul.f32 %v642, 1.442695
    %v875 = vpow.pop %v874
    %v876 = vmul.f32 %v643, 1.442695
    %v877 = vpow.pop %v876
    %v878 = vmul.f32 %v644, 1.442695
    %v879 = vpow.pop %v878
    %v880 = vmul.f32 %v645, 1.442695
    %v881 = vpow.pop %v880
    %v882 = vmul.f32 %v646, 1.442695
    %v883 = vpow.pop %v882
    %v884 = vmul.f32 %v647, 1.442695
    %v885 = vpow.pop %v884
    %v886 = vmul.f32 %v648, 1.442695
    %v887 = vpow.pop %v886
    %v888 = vmul.f32 %v649, 1.442695
    %v889 = vpow.pop %v888
    %v890 = vmul.f32 %v650, 1.442695
    %v891 = vpow.pop %v890
    %v892 = vmul.f32 %v651, 1.442695
    %v893 = vpow.pop %v892
    %v894 = vmul.f32 %v652, 1.442695
    %v895 = vpow.pop %v894
    %v896 = vmul.f32 %v653, 1.442695
    %v897 = vpow.pop %v896
    %v898 = vmul.f32 %v654, 1.442695
    %v899 = vpow.pop %v898
    %v900 = vmul.f32 %v655, 1.442695
    %v901 = vpow.pop %v900
    %v902 = vmul.f32 %v656, 1.442695
    %v903 = vpow.pop %v902
    %v904 = vmul.f32 %v657, 1.442695
    %v905 = vpow.pop %v904
    %v906 = vmul.f32 %v658, 1.442695
    %v907 = vpow.pop %v906
    %v908 = vmul.f32 %v659, 1.442695
    %v909 = vpow.pop %v908
    %v910 = vmul.f32 %v660, 1.442695
    %v911 = vpow.pop %v910
    %v912 = vmul.f32 %v661, 1.442695
    %v913 = vpow.pop %v912
    %v914 = vmul.f32 %v662, 1.442695
    %v915 = vpow.pop %v914
    %v916 = vmul.f32 %v663, 1.442695
    %v917 = vpow.pop %v916
    %v918 = vmul.f32 %v664, 1.442695
    %v919 = vpow.pop %v918
    %v920 = vmul.f32 %v665, 1.442695
    %v921 = vpow.pop %v920
    %v922 = vadd.f32 %v667, %v669
    %v923 = vadd.f32 %v922, %v671
    %v924 = vadd.f32 %v923, %v673
    %925 = vadd.xlane.f32.xlu0 %v924
    %v926 = vpop.xlane.xlu0 %925
    %v927 = vadd.f32 %v675, %v677
    %v928 = vadd.f32 %v927, %v679
    %v929 = vadd.f32 %v928, %v681
    %930 = vadd.xlane.f32.xlu0 %v929
    %v931 = vpop.xlane.xlu0 %930
    %v932 = vadd.f32 %v683, %v685
    %v933 = vadd.f32 %v932, %v687
    %v934 = vadd.f32 %v933, %v689
    %935 = vadd.xlane.f32.xlu0 %v934
    %v936 = vpop.xlane.xlu0 %935
    %v937 = vadd.f32 %v691, %v693
    %v938 = vadd.f32 %v937, %v695
    %v939 = vadd.f32 %v938, %v697
    %940 = vadd.xlane.f32.xlu0 %v939
    %v941 = vpop.xlane.xlu0 %940
    %v942 = vadd.f32 %v699, %v701
    %v943 = vadd.f32 %v942, %v703
    %v944 = vadd.f32 %v943, %v705
    %945 = vadd.xlane.f32.xlu0 %v944
    %v946 = vpop.xlane.xlu0 %945
    %v947 = vadd.f32 %v707, %v709
    %v948 = vadd.f32 %v947, %v711
    %v949 = vadd.f32 %v948, %v713
    %950 = vadd.xlane.f32.xlu0 %v949
    %v951 = vpop.xlane.xlu0 %950
    %v952 = vadd.f32 %v715, %v717
    %v953 = vadd.f32 %v952, %v719
    %v954 = vadd.f32 %v953, %v721
    %955 = vadd.xlane.f32.xlu0 %v954
    %v956 = vpop.xlane.xlu0 %955
    %v957 = vadd.f32 %v723, %v725
    %v958 = vadd.f32 %v957, %v727
    %v959 = vadd.f32 %v958, %v729
    %960 = vadd.xlane.f32.xlu0 %v959
    %v961 = vpop.xlane.xlu0 %960
    %v962 = vadd.f32 %v731, %v733
    %v963 = vadd.f32 %v962, %v735
    %v964 = vadd.f32 %v963, %v737
    %965 = vadd.xlane.f32.xlu0 %v964
    %v966 = vpop.xlane.xlu0 %965
    %v967 = vadd.f32 %v739, %v741
    %v968 = vadd.f32 %v967, %v743
    %v969 = vadd.f32 %v968, %v745
    %970 = vadd.xlane.f32.xlu0 %v969
    %v971 = vpop.xlane.xlu0 %970
    %v972 = vadd.f32 %v747, %v749
    %v973 = vadd.f32 %v972, %v751
    %v974 = vadd.f32 %v973, %v753
    %975 = vadd.xlane.f32.xlu0 %v974
    %v976 = vpop.xlane.xlu0 %975
    %v977 = vadd.f32 %v755, %v757
    %v978 = vadd.f32 %v977, %v759
    %v979 = vadd.f32 %v978, %v761
    %980 = vadd.xlane.f32.xlu0 %v979
    %v981 = vpop.xlane.xlu0 %980
    %v982 = vadd.f32 %v763, %v765
    %v983 = vadd.f32 %v982, %v767
    %v984 = vadd.f32 %v983, %v769
    %985 = vadd.xlane.f32.xlu0 %v984
    %v986 = vpop.xlane.xlu0 %985
    %v987 = vadd.f32 %v771, %v773
    %v988 = vadd.f32 %v987, %v775
    %v989 = vadd.f32 %v988, %v777
    %990 = vadd.xlane.f32.xlu0 %v989
    %v991 = vpop.xlane.xlu0 %990
    %v992 = vadd.f32 %v779, %v781
    %v993 = vadd.f32 %v992, %v783
    %v994 = vadd.f32 %v993, %v785
    %995 = vadd.xlane.f32.xlu0 %v994
    %v996 = vpop.xlane.xlu0 %995
    %v997 = vadd.f32 %v787, %v789
    %v998 = vadd.f32 %v997, %v791
    %v999 = vadd.f32 %v998, %v793
    %1000 = vadd.xlane.f32.xlu0 %v999
    %v1001 = vpop.xlane.xlu0 %1000
    %v1002 = vadd.f32 %v795, %v797
    %v1003 = vadd.f32 %v1002, %v799
    %v1004 = vadd.f32 %v1003, %v801
    %1005 = vadd.xlane.f32.xlu0 %v1004
    %v1006 = vpop.xlane.xlu0 %1005
    %v1007 = vadd.f32 %v803, %v805
    %v1008 = vadd.f32 %v1007, %v807
    %v1009 = vadd.f32 %v1008, %v809
    %1010 = vadd.xlane.f32.xlu0 %v1009
    %v1011 = vpop.xlane.xlu0 %1010
    %v1012 = vadd.f32 %v811, %v813
    %v1013 = vadd.f32 %v1012, %v815
    %v1014 = vadd.f32 %v1013, %v817
    %1015 = vadd.xlane.f32.xlu0 %v1014
    %v1016 = vpop.xlane.xlu0 %1015
    %v1017 = vadd.f32 %v819, %v821
    %v1018 = vadd.f32 %v1017, %v823
    %v1019 = vadd.f32 %v1018, %v825
    %1020 = vadd.xlane.f32.xlu0 %v1019
    %v1021 = vpop.xlane.xlu0 %1020
    %v1022 = vadd.f32 %v827, %v829
    %v1023 = vadd.f32 %v1022, %v831
    %v1024 = vadd.f32 %v1023, %v833
    %1025 = vadd.xlane.f32.xlu0 %v1024
    %v1026 = vpop.xlane.xlu0 %1025
    %v1027 = vadd.f32 %v835, %v837
    %v1028 = vadd.f32 %v1027, %v839
    %v1029 = vadd.f32 %v1028, %v841
    %1030 = vadd.xlane.f32.xlu0 %v1029
    %v1031 = vpop.xlane.xlu0 %1030
    %v1032 = vadd.f32 %v843, %v845
    %v1033 = vadd.f32 %v1032, %v847
    %v1034 = vadd.f32 %v1033, %v849
    %1035 = vadd.xlane.f32.xlu0 %v1034
    %v1036 = vpop.xlane.xlu0 %1035
    %v1037 = vadd.f32 %v851, %v853
    %v1038 = vadd.f32 %v1037, %v855
    %v1039 = vadd.f32 %v1038, %v857
    %1040 = vadd.xlane.f32.xlu0 %v1039
    %v1041 = vpop.xlane.xlu0 %1040
    %v1042 = vadd.f32 %v859, %v861
    %v1043 = vadd.f32 %v1042, %v863
    %v1044 = vadd.f32 %v1043, %v865
    %1045 = vadd.xlane.f32.xlu0 %v1044
    %v1046 = vpop.xlane.xlu0 %1045
    %v1047 = vadd.f32 %v867, %v869
    %v1048 = vadd.f32 %v1047, %v871
    %v1049 = vadd.f32 %v1048, %v873
    %1050 = vadd.xlane.f32.xlu0 %v1049
    %v1051 = vpop.xlane.xlu0 %1050
    %v1052 = vadd.f32 %v875, %v877
    %v1053 = vadd.f32 %v1052, %v879
    %v1054 = vadd.f32 %v1053, %v881
    %1055 = vadd.xlane.f32.xlu0 %v1054
    %v1056 = vpop.xlane.xlu0 %1055
    %v1057 = vadd.f32 %v883, %v885
    %v1058 = vadd.f32 %v1057, %v887
    %v1059 = vadd.f32 %v1058, %v889
    %1060 = vadd.xlane.f32.xlu0 %v1059
    %v1061 = vpop.xlane.xlu0 %1060
    %v1062 = vadd.f32 %v891, %v893
    %v1063 = vadd.f32 %v1062, %v895
    %v1064 = vadd.f32 %v1063, %v897
    %1065 = vadd.xlane.f32.xlu0 %v1064
    %v1066 = vpop.xlane.xlu0 %1065
    %v1067 = vadd.f32 %v899, %v901
    %v1068 = vadd.f32 %v1067, %v903
    %v1069 = vadd.f32 %v1068, %v905
    %1070 = vadd.xlane.f32.xlu0 %v1069
    %v1071 = vpop.xlane.xlu0 %1070
    %v1072 = vadd.f32 %v907, %v909
    %v1073 = vadd.f32 %v1072, %v911
    %v1074 = vadd.f32 %v1073, %v913
    %1075 = vadd.xlane.f32.xlu0 %v1074
    %v1076 = vpop.xlane.xlu0 %1075
    %v1077 = vadd.f32 %v915, %v917
    %v1078 = vadd.f32 %v1077, %v919
    %v1079 = vadd.f32 %v1078, %v921
    %1080 = vadd.xlane.f32.xlu0 %v1079
    %v1081 = vpop.xlane.xlu0 %1080
    %v1082 = vld [vmem:[%s1] sm:$0xff]
    %v1083 = vld [vmem:[%s1 + $0x8] sm:$0xff]
    %v1084 = vld [vmem:[%s1 + $0x10] sm:$0xff]
    %v1085 = vld [vmem:[%s1 + $0x18] sm:$0xff]
    %v1086 = vld [vmem:[%s1 + $0x20] sm:$0xff]
    %v1087 = vld [vmem:[%s1 + $0x28] sm:$0xff]
    %v1088 = vld [vmem:[%s1 + $0x30] sm:$0xff]
    %v1089 = vld [vmem:[%s1 + $0x38] sm:$0xff]
    %v1090 = vld [vmem:[%s1 + $0x40] sm:$0xff]
    %v1091 = vld [vmem:[%s1 + $0x48] sm:$0xff]
    %v1092 = vld [vmem:[%s1 + $0x50] sm:$0xff]
    %v1093 = vld [vmem:[%s1 + $0x58] sm:$0xff]
    %v1094 = vld [vmem:[%s1 + $0x60] sm:$0xff]
    %v1095 = vld [vmem:[%s1 + $0x68] sm:$0xff]
    %v1096 = vld [vmem:[%s1 + $0x70] sm:$0xff]
    %v1097 = vld [vmem:[%s1 + $0x78] sm:$0xff]
    %v1098 = vld [vmem:[%s1 + $0x80] sm:$0xff]
    %v1099 = vld [vmem:[%s1 + $0x88] sm:$0xff]
    %v1100 = vld [vmem:[%s1 + $0x90] sm:$0xff]
    %v1101 = vld [vmem:[%s1 + $0x98] sm:$0xff]
    %v1102 = vld [vmem:[%s1 + $0xa0] sm:$0xff]
    %v1103 = vld [vmem:[%s1 + $0xa8] sm:$0xff]
    %v1104 = vld [vmem:[%s1 + $0xb0] sm:$0xff]
    %v1105 = vld [vmem:[%s1 + $0xb8] sm:$0xff]
    %v1106 = vld [vmem:[%s1 + $0xc0] sm:$0xff]
    %v1107 = vld [vmem:[%s1 + $0xc8] sm:$0xff]
    %v1108 = vld [vmem:[%s1 + $0xd0] sm:$0xff]
    %v1109 = vld [vmem:[%s1 + $0xd8] sm:$0xff]
    %v1110 = vld [vmem:[%s1 + $0xe0] sm:$0xff]
    %v1111 = vld [vmem:[%s1 + $0xe8] sm:$0xff]
    %v1112 = vld [vmem:[%s1 + $0xf0] sm:$0xff]
    %v1113 = vld [vmem:[%s1 + $0xf8] sm:$0xff]
    %v1114 = vadd.f32 %v926, 1e-08
    %v1115 = vadd.f32 %v931, 1e-08
    %v1116 = vadd.f32 %v936, 1e-08
    %v1117 = vadd.f32 %v941, 1e-08
    %v1118 = vadd.f32 %v946, 1e-08
    %v1119 = vadd.f32 %v951, 1e-08
    %v1120 = vadd.f32 %v956, 1e-08
    %v1121 = vadd.f32 %v961, 1e-08
    %v1122 = vadd.f32 %v966, 1e-08
    %v1123 = vadd.f32 %v971, 1e-08
    %v1124 = vadd.f32 %v976, 1e-08
    %v1125 = vadd.f32 %v981, 1e-08
    %v1126 = vadd.f32 %v986, 1e-08
    %v1127 = vadd.f32 %v991, 1e-08
    %v1128 = vadd.f32 %v996, 1e-08
    %v1129 = vadd.f32 %v1001, 1e-08
    %v1130 = vadd.f32 %v1006, 1e-08
    %v1131 = vadd.f32 %v1011, 1e-08
    %v1132 = vadd.f32 %v1016, 1e-08
    %v1133 = vadd.f32 %v1021, 1e-08
    %v1134 = vadd.f32 %v1026, 1e-08
    %v1135 = vadd.f32 %v1031, 1e-08
    %v1136 = vadd.f32 %v1036, 1e-08
    %v1137 = vadd.f32 %v1041, 1e-08
    %v1138 = vadd.f32 %v1046, 1e-08
    %v1139 = vadd.f32 %v1051, 1e-08
    %v1140 = vadd.f32 %v1056, 1e-08
    %v1141 = vadd.f32 %v1061, 1e-08
    %v1142 = vadd.f32 %v1066, 1e-08
    %v1143 = vadd.f32 %v1071, 1e-08
    %v1144 = vadd.f32 %v1076, 1e-08
    %v1145 = vadd.f32 %v1081, 1e-08
    %v1146 = vlog2.pop %v1114
    %v1147 = vmul.f32 %v1146, 0.6931472
    %v1148 = vlog2.pop %v1115
    %v1149 = vmul.f32 %v1148, 0.6931472
    %v1150 = vlog2.pop %v1116
    %v1151 = vmul.f32 %v1150, 0.6931472
    %v1152 = vlog2.pop %v1117
    %v1153 = vmul.f32 %v1152, 0.6931472
    %v1154 = vlog2.pop %v1118
    %v1155 = vmul.f32 %v1154, 0.6931472
    %v1156 = vlog2.pop %v1119
    %v1157 = vmul.f32 %v1156, 0.6931472
    %v1158 = vlog2.pop %v1120
    %v1159 = vmul.f32 %v1158, 0.6931472
    %v1160 = vlog2.pop %v1121
    %v1161 = vmul.f32 %v1160, 0.6931472
    %v1162 = vlog2.pop %v1122
    %v1163 = vmul.f32 %v1162, 0.6931472
    %v1164 = vlog2.pop %v1123
    %v1165 = vmul.f32 %v1164, 0.6931472
    %v1166 = vlog2.pop %v1124
    %v1167 = vmul.f32 %v1166, 0.6931472
    %v1168 = vlog2.pop %v1125
    %v1169 = vmul.f32 %v1168, 0.6931472
    %v1170 = vlog2.pop %v1126
    %v1171 = vmul.f32 %v1170, 0.6931472
    %v1172 = vlog2.pop %v1127
    %v1173 = vmul.f32 %v1172, 0.6931472
    %v1174 = vlog2.pop %v1128
    %v1175 = vmul.f32 %v1174, 0.6931472
    %v1176 = vlog2.pop %v1129
    %v1177 = vmul.f32 %v1176, 0.6931472
    %v1178 = vlog2.pop %v1130
    %v1179 = vmul.f32 %v1178, 0.6931472
    %v1180 = vlog2.pop %v1131
    %v1181 = vmul.f32 %v1180, 0.6931472
    %v1182 = vlog2.pop %v1132
    %v1183 = vmul.f32 %v1182, 0.6931472
    %v1184 = vlog2.pop %v1133
    %v1185 = vmul.f32 %v1184, 0.6931472
    %v1186 = vlog2.pop %v1134
    %v1187 = vmul.f32 %v1186, 0.6931472
    %v1188 = vlog2.pop %v1135
    %v1189 = vmul.f32 %v1188, 0.6931472
    %v1190 = vlog2.pop %v1136
    %v1191 = vmul.f32 %v1190, 0.6931472
    %v1192 = vlog2.pop %v1137
    %v1193 = vmul.f32 %v1192, 0.6931472
    %v1194 = vlog2.pop %v1138
    %v1195 = vmul.f32 %v1194, 0.6931472
    %v1196 = vlog2.pop %v1139
    %v1197 = vmul.f32 %v1196, 0.6931472
    %v1198 = vlog2.pop %v1140
    %v1199 = vmul.f32 %v1198, 0.6931472
    %v1200 = vlog2.pop %v1141
    %v1201 = vmul.f32 %v1200, 0.6931472
    %v1202 = vlog2.pop %v1142
    %v1203 = vmul.f32 %v1202, 0.6931472
    %v1204 = vlog2.pop %v1143
    %v1205 = vmul.f32 %v1204, 0.6931472
    %v1206 = vlog2.pop %v1144
    %v1207 = vmul.f32 %v1206, 0.6931472
    %v1208 = vlog2.pop %v1145
    %v1209 = vmul.f32 %v1208, 0.6931472
    %v1210 = vsub.f32 %v1082, %v1147
    %v1211 = vsub.f32 %v1083, %v1149
    %v1212 = vsub.f32 %v1084, %v1151
    %v1213 = vsub.f32 %v1085, %v1153
    %v1214 = vsub.f32 %v1086, %v1155
    %v1215 = vsub.f32 %v1087, %v1157
    %v1216 = vsub.f32 %v1088, %v1159
    %v1217 = vsub.f32 %v1089, %v1161
    %v1218 = vsub.f32 %v1090, %v1163
    %v1219 = vsub.f32 %v1091, %v1165
    %v1220 = vsub.f32 %v1092, %v1167
    %v1221 = vsub.f32 %v1093, %v1169
    %v1222 = vsub.f32 %v1094, %v1171
    %v1223 = vsub.f32 %v1095, %v1173
    %v1224 = vsub.f32 %v1096, %v1175
    %v1225 = vsub.f32 %v1097, %v1177
    %v1226 = vsub.f32 %v1098, %v1179
    %v1227 = vsub.f32 %v1099, %v1181
    %v1228 = vsub.f32 %v1100, %v1183
    %v1229 = vsub.f32 %v1101, %v1185
    %v1230 = vsub.f32 %v1102, %v1187
    %v1231 = vsub.f32 %v1103, %v1189
    %v1232 = vsub.f32 %v1104, %v1191
    %v1233 = vsub.f32 %v1105, %v1193
    %v1234 = vsub.f32 %v1106, %v1195
    %v1235 = vsub.f32 %v1107, %v1197
    %v1236 = vsub.f32 %v1108, %v1199
    %v1237 = vsub.f32 %v1109, %v1201
    %v1238 = vsub.f32 %v1110, %v1203
    %v1239 = vsub.f32 %v1111, %v1205
    %v1240 = vsub.f32 %v1112, %v1207
    %v1241 = vsub.f32 %v1113, %v1209
    %v1242 = vmul.f32 %v1210, 0.1
    %v1243 = vmul.f32 %v1211, 0.1
    %v1244 = vmul.f32 %v1212, 0.1
    %v1245 = vmul.f32 %v1213, 0.1
    %v1246 = vmul.f32 %v1214, 0.1
    %v1247 = vmul.f32 %v1215, 0.1
    %v1248 = vmul.f32 %v1216, 0.1
    %v1249 = vmul.f32 %v1217, 0.1
    %v1250 = vmul.f32 %v1218, 0.1
    %v1251 = vmul.f32 %v1219, 0.1
    %v1252 = vmul.f32 %v1220, 0.1
    %v1253 = vmul.f32 %v1221, 0.1
    %v1254 = vmul.f32 %v1222, 0.1
    %v1255 = vmul.f32 %v1223, 0.1
    %v1256 = vmul.f32 %v1224, 0.1
    %v1257 = vmul.f32 %v1225, 0.1
    %v1258 = vmul.f32 %v1226, 0.1
    %v1259 = vmul.f32 %v1227, 0.1
    %v1260 = vmul.f32 %v1228, 0.1
    %v1261 = vmul.f32 %v1229, 0.1
    %v1262 = vmul.f32 %v1230, 0.1
    %v1263 = vmul.f32 %v1231, 0.1
    %v1264 = vmul.f32 %v1232, 0.1
    %v1265 = vmul.f32 %v1233, 0.1
    %v1266 = vmul.f32 %v1234, 0.1
    %v1267 = vmul.f32 %v1235, 0.1
    %v1268 = vmul.f32 %v1236, 0.1
    %v1269 = vmul.f32 %v1237, 0.1
    %v1270 = vmul.f32 %v1238, 0.1
    %v1271 = vmul.f32 %v1239, 0.1
    %v1272 = vmul.f32 %v1240, 0.1
    %v1273 = vmul.f32 %v1241, 0.1
    %v1274 = vadd.f32 %v163, %v1242
    %v1275 = vadd.f32 %v164, %v1243
    %v1276 = vadd.f32 %v165, %v1244
    %v1277 = vadd.f32 %v166, %v1245
    %v1278 = vadd.f32 %v167, %v1246
    %v1279 = vadd.f32 %v168, %v1247
    %v1280 = vadd.f32 %v169, %v1248
    %v1281 = vadd.f32 %v170, %v1249
    %v1282 = vadd.f32 %v171, %v1250
    %v1283 = vadd.f32 %v172, %v1251
    %v1284 = vadd.f32 %v173, %v1252
    %v1285 = vadd.f32 %v174, %v1253
    %v1286 = vadd.f32 %v175, %v1254
    %v1287 = vadd.f32 %v176, %v1255
    %v1288 = vadd.f32 %v177, %v1256
    %v1289 = vadd.f32 %v178, %v1257
    %v1290 = vadd.f32 %v179, %v1258
    %v1291 = vadd.f32 %v180, %v1259
    %v1292 = vadd.f32 %v181, %v1260
    %v1293 = vadd.f32 %v182, %v1261
    %v1294 = vadd.f32 %v183, %v1262
    %v1295 = vadd.f32 %v184, %v1263
    %v1296 = vadd.f32 %v185, %v1264
    %v1297 = vadd.f32 %v186, %v1265
    %v1298 = vadd.f32 %v187, %v1266
    %v1299 = vadd.f32 %v188, %v1267
    %v1300 = vadd.f32 %v189, %v1268
    %v1301 = vadd.f32 %v190, %v1269
    %v1302 = vadd.f32 %v191, %v1270
    %v1303 = vadd.f32 %v192, %v1271
    %v1304 = vadd.f32 %v193, %v1272
    %v1305 = vadd.f32 %v194, %v1273
    %vm1306 = vcmask 7168
    %1307 = vst.msk [vmem:[%s5] sm:$0xff] %vm1306, %v1274
    %1308 = vst.msk [vmem:[%s5 + $0x8] sm:$0xff] %vm1306, %v1275
    %1309 = vst.msk [vmem:[%s5 + $0x10] sm:$0xff] %vm1306, %v1276
    %1310 = vst.msk [vmem:[%s5 + $0x18] sm:$0xff] %vm1306, %v1277
    %1311 = vst.msk [vmem:[%s5 + $0x20] sm:$0xff] %vm1306, %v1278
    %1312 = vst.msk [vmem:[%s5 + $0x28] sm:$0xff] %vm1306, %v1279
    %1313 = vst.msk [vmem:[%s5 + $0x30] sm:$0xff] %vm1306, %v1280
    %1314 = vst.msk [vmem:[%s5 + $0x38] sm:$0xff] %vm1306, %v1281
    %1315 = vst.msk [vmem:[%s5 + $0x40] sm:$0xff] %vm1306, %v1282
    %1316 = vst.msk [vmem:[%s5 + $0x48] sm:$0xff] %vm1306, %v1283
    %1317 = vst.msk [vmem:[%s5 + $0x50] sm:$0xff] %vm1306, %v1284
    %1318 = vst.msk [vmem:[%s5 + $0x58] sm:$0xff] %vm1306, %v1285
    %1319 = vst.msk [vmem:[%s5 + $0x60] sm:$0xff] %vm1306, %v1286
    %1320 = vst.msk [vmem:[%s5 + $0x68] sm:$0xff] %vm1306, %v1287
    %1321 = vst.msk [vmem:[%s5 + $0x70] sm:$0xff] %vm1306, %v1288
    %1322 = vst.msk [vmem:[%s5 + $0x78] sm:$0xff] %vm1306, %v1289
    %1323 = vst.msk [vmem:[%s5 + $0x80] sm:$0xff] %vm1306, %v1290
    %1324 = vst.msk [vmem:[%s5 + $0x88] sm:$0xff] %vm1306, %v1291
    %1325 = vst.msk [vmem:[%s5 + $0x90] sm:$0xff] %vm1306, %v1292
    %1326 = vst.msk [vmem:[%s5 + $0x98] sm:$0xff] %vm1306, %v1293
    %1327 = vst.msk [vmem:[%s5 + $0xa0] sm:$0xff] %vm1306, %v1294
    %1328 = vst.msk [vmem:[%s5 + $0xa8] sm:$0xff] %vm1306, %v1295
    %1329 = vst.msk [vmem:[%s5 + $0xb0] sm:$0xff] %vm1306, %v1296
    %1330 = vst.msk [vmem:[%s5 + $0xb8] sm:$0xff] %vm1306, %v1297
    %1331 = vst.msk [vmem:[%s5 + $0xc0] sm:$0xff] %vm1306, %v1298
    %1332 = vst.msk [vmem:[%s5 + $0xc8] sm:$0xff] %vm1306, %v1299
    %1333 = vst.msk [vmem:[%s5 + $0xd0] sm:$0xff] %vm1306, %v1300
    %1334 = vst.msk [vmem:[%s5 + $0xd8] sm:$0xff] %vm1306, %v1301
    %1335 = vst.msk [vmem:[%s5 + $0xe0] sm:$0xff] %vm1306, %v1302
    %1336 = vst.msk [vmem:[%s5 + $0xe8] sm:$0xff] %vm1306, %v1303
    %1337 = vst.msk [vmem:[%s5 + $0xf0] sm:$0xff] %vm1306, %v1304
    %1338 = vst.msk [vmem:[%s5 + $0xf8] sm:$0xff] %vm1306, %v1305
    %v1339 = vmul.f32 %v1242, 10.0
    %v1340 = vmul.f32 %v1243, 10.0
    %v1341 = vmul.f32 %v1244, 10.0
    %v1342 = vmul.f32 %v1245, 10.0
    %v1343 = vmul.f32 %v1246, 10.0
    %v1344 = vmul.f32 %v1247, 10.0
    %v1345 = vmul.f32 %v1248, 10.0
    %v1346 = vmul.f32 %v1249, 10.0
    %v1347 = vmul.f32 %v1250, 10.0
    %v1348 = vmul.f32 %v1251, 10.0
    %v1349 = vmul.f32 %v1252, 10.0
    %v1350 = vmul.f32 %v1253, 10.0
    %v1351 = vmul.f32 %v1254, 10.0
    %v1352 = vmul.f32 %v1255, 10.0
    %v1353 = vmul.f32 %v1256, 10.0
    %v1354 = vmul.f32 %v1257, 10.0
    %v1355 = vmul.f32 %v1258, 10.0
    %v1356 = vmul.f32 %v1259, 10.0
    %v1357 = vmul.f32 %v1260, 10.0
    %v1358 = vmul.f32 %v1261, 10.0
    %v1359 = vmul.f32 %v1262, 10.0
    %v1360 = vmul.f32 %v1263, 10.0
    %v1361 = vmul.f32 %v1264, 10.0
    %v1362 = vmul.f32 %v1265, 10.0
    %v1363 = vmul.f32 %v1266, 10.0
    %v1364 = vmul.f32 %v1267, 10.0
    %v1365 = vmul.f32 %v1268, 10.0
    %v1366 = vmul.f32 %v1269, 10.0
    %v1367 = vmul.f32 %v1270, 10.0
    %v1368 = vmul.f32 %v1271, 10.0
    %v1369 = vmul.f32 %v1272, 10.0
    %v1370 = vmul.f32 %v1273, 10.0
    %v1371 = vmul.f32 %v1339, 1.442695
    %v1372 = vpow.pop %v1371
    %v1373 = vmul.f32 %v1340, 1.442695
    %v1374 = vpow.pop %v1373
    %v1375 = vmul.f32 %v1341, 1.442695
    %v1376 = vpow.pop %v1375
    %v1377 = vmul.f32 %v1342, 1.442695
    %v1378 = vpow.pop %v1377
    %v1379 = vmul.f32 %v1343, 1.442695
    %v1380 = vpow.pop %v1379
    %v1381 = vmul.f32 %v1344, 1.442695
    %v1382 = vpow.pop %v1381
    %v1383 = vmul.f32 %v1345, 1.442695
    %v1384 = vpow.pop %v1383
    %v1385 = vmul.f32 %v1346, 1.442695
    %v1386 = vpow.pop %v1385
    %v1387 = vmul.f32 %v1347, 1.442695
    %v1388 = vpow.pop %v1387
    %v1389 = vmul.f32 %v1348, 1.442695
    %v1390 = vpow.pop %v1389
    %v1391 = vmul.f32 %v1349, 1.442695
    %v1392 = vpow.pop %v1391
    %v1393 = vmul.f32 %v1350, 1.442695
    %v1394 = vpow.pop %v1393
    %v1395 = vmul.f32 %v1351, 1.442695
    %v1396 = vpow.pop %v1395
    %v1397 = vmul.f32 %v1352, 1.442695
    %v1398 = vpow.pop %v1397
    %v1399 = vmul.f32 %v1353, 1.442695
    %v1400 = vpow.pop %v1399
    %v1401 = vmul.f32 %v1354, 1.442695
    %v1402 = vpow.pop %v1401
    %v1403 = vmul.f32 %v1355, 1.442695
    %v1404 = vpow.pop %v1403
    %v1405 = vmul.f32 %v1356, 1.442695
    %v1406 = vpow.pop %v1405
    %v1407 = vmul.f32 %v1357, 1.442695
    %v1408 = vpow.pop %v1407
    %v1409 = vmul.f32 %v1358, 1.442695
    %v1410 = vpow.pop %v1409
    %v1411 = vmul.f32 %v1359, 1.442695
    %v1412 = vpow.pop %v1411
    %v1413 = vmul.f32 %v1360, 1.442695
    %v1414 = vpow.pop %v1413
    %v1415 = vmul.f32 %v1361, 1.442695
    %v1416 = vpow.pop %v1415
    %v1417 = vmul.f32 %v1362, 1.442695
    %v1418 = vpow.pop %v1417
    %v1419 = vmul.f32 %v1363, 1.442695
    %v1420 = vpow.pop %v1419
    %v1421 = vmul.f32 %v1364, 1.442695
    %v1422 = vpow.pop %v1421
    %v1423 = vmul.f32 %v1365, 1.442695
    %v1424 = vpow.pop %v1423
    %v1425 = vmul.f32 %v1366, 1.442695
    %v1426 = vpow.pop %v1425
    %v1427 = vmul.f32 %v1367, 1.442695
    %v1428 = vpow.pop %v1427
    %v1429 = vmul.f32 %v1368, 1.442695
    %v1430 = vpow.pop %v1429
    %v1431 = vmul.f32 %v1369, 1.442695
    %v1432 = vpow.pop %v1431
    %v1433 = vmul.f32 %v1370, 1.442695
    %v1434 = vpow.pop %v1433
    %1436 = vset.pattern.permute.xlu0 0
    %1437 = vperm.xlu0 %1436, %v1372
    %v1438 = vpop.permute.xlu0 %1437
    %1441 = vset.pattern.permute.xlu0 0
    %1442 = vperm.xlu0 %1441, %v1374
    %v1443 = vpop.permute.xlu0 %1442
    %1446 = vset.pattern.permute.xlu0 0
    %1447 = vperm.xlu0 %1446, %v1376
    %v1448 = vpop.permute.xlu0 %1447
    %1451 = vset.pattern.permute.xlu0 0
    %1452 = vperm.xlu0 %1451, %v1378
    %v1453 = vpop.permute.xlu0 %1452
    %1456 = vset.pattern.permute.xlu0 0
    %1457 = vperm.xlu0 %1456, %v1380
    %v1458 = vpop.permute.xlu0 %1457
    %1461 = vset.pattern.permute.xlu0 0
    %1462 = vperm.xlu0 %1461, %v1382
    %v1463 = vpop.permute.xlu0 %1462
    %1466 = vset.pattern.permute.xlu0 0
    %1467 = vperm.xlu0 %1466, %v1384
    %v1468 = vpop.permute.xlu0 %1467
    %1471 = vset.pattern.permute.xlu0 0
    %1472 = vperm.xlu0 %1471, %v1386
    %v1473 = vpop.permute.xlu0 %1472
    %1476 = vset.pattern.permute.xlu0 0
    %1477 = vperm.xlu0 %1476, %v1388
    %v1478 = vpop.permute.xlu0 %1477
    %1481 = vset.pattern.permute.xlu0 0
    %1482 = vperm.xlu0 %1481, %v1390
    %v1483 = vpop.permute.xlu0 %1482
    %1486 = vset.pattern.permute.xlu0 0
    %1487 = vperm.xlu0 %1486, %v1392
    %v1488 = vpop.permute.xlu0 %1487
    %1491 = vset.pattern.permute.xlu0 0
    %1492 = vperm.xlu0 %1491, %v1394
    %v1493 = vpop.permute.xlu0 %1492
    %1496 = vset.pattern.permute.xlu0 0
    %1497 = vperm.xlu0 %1496, %v1396
    %v1498 = vpop.permute.xlu0 %1497
    %1501 = vset.pattern.permute.xlu0 0
    %1502 = vperm.xlu0 %1501, %v1398
    %v1503 = vpop.permute.xlu0 %1502
    %1506 = vset.pattern.permute.xlu0 0
    %1507 = vperm.xlu0 %1506, %v1400
    %v1508 = vpop.permute.xlu0 %1507
    %1511 = vset.pattern.permute.xlu0 0
    %1512 = vperm.xlu0 %1511, %v1402
    %v1513 = vpop.permute.xlu0 %1512
    %1516 = vset.pattern.permute.xlu0 0
    %1517 = vperm.xlu0 %1516, %v1404
    %v1518 = vpop.permute.xlu0 %1517
    %1521 = vset.pattern.permute.xlu0 0
    %1522 = vperm.xlu0 %1521, %v1406
    %v1523 = vpop.permute.xlu0 %1522
    %1526 = vset.pattern.permute.xlu0 0
    %1527 = vperm.xlu0 %1526, %v1408
    %v1528 = vpop.permute.xlu0 %1527
    %1531 = vset.pattern.permute.xlu0 0
    %1532 = vperm.xlu0 %1531, %v1410
    %v1533 = vpop.permute.xlu0 %1532
    %1536 = vset.pattern.permute.xlu0 0
    %1537 = vperm.xlu0 %1536, %v1412
    %v1538 = vpop.permute.xlu0 %1537
    %1541 = vset.pattern.permute.xlu0 0
    %1542 = vperm.xlu0 %1541, %v1414
    %v1543 = vpop.permute.xlu0 %1542
    %1546 = vset.pattern.permute.xlu0 0
    %1547 = vperm.xlu0 %1546, %v1416
    %v1548 = vpop.permute.xlu0 %1547
    %1551 = vset.pattern.permute.xlu0 0
    %1552 = vperm.xlu0 %1551, %v1418
    %v1553 = vpop.permute.xlu0 %1552
    %1556 = vset.pattern.permute.xlu0 0
    %1557 = vperm.xlu0 %1556, %v1420
    %v1558 = vpop.permute.xlu0 %1557
    %1561 = vset.pattern.permute.xlu0 0
    %1562 = vperm.xlu0 %1561, %v1422
    %v1563 = vpop.permute.xlu0 %1562
    %1566 = vset.pattern.permute.xlu0 0
    %1567 = vperm.xlu0 %1566, %v1424
    %v1568 = vpop.permute.xlu0 %1567
    %1571 = vset.pattern.permute.xlu0 0
    %1572 = vperm.xlu0 %1571, %v1426
    %v1573 = vpop.permute.xlu0 %1572
    %1576 = vset.pattern.permute.xlu0 0
    %1577 = vperm.xlu0 %1576, %v1428
    %v1578 = vpop.permute.xlu0 %1577
    %1581 = vset.pattern.permute.xlu0 0
    %1582 = vperm.xlu0 %1581, %v1430
    %v1583 = vpop.permute.xlu0 %1582
    %1586 = vset.pattern.permute.xlu0 0
    %1587 = vperm.xlu0 %1586, %v1432
    %v1588 = vpop.permute.xlu0 %1587
    %1591 = vset.pattern.permute.xlu0 0
    %1592 = vperm.xlu0 %1591, %v1434
    %v1593 = vpop.permute.xlu0 %1592
    %v1595 = vmul.f32 %v667, %v1438
    %v1596 = vmul.f32 %v669, %v1438
    %v1597 = vmul.f32 %v671, %v1438
    %v1598 = vmul.f32 %v673, %v1438
    %v1599 = vmul.f32 %v675, %v1443
    %v1600 = vmul.f32 %v677, %v1443
    %v1601 = vmul.f32 %v679, %v1443
    %v1602 = vmul.f32 %v681, %v1443
    %v1603 = vmul.f32 %v683, %v1448
    %v1604 = vmul.f32 %v685, %v1448
    %v1605 = vmul.f32 %v687, %v1448
    %v1606 = vmul.f32 %v689, %v1448
    %v1607 = vmul.f32 %v691, %v1453
    %v1608 = vmul.f32 %v693, %v1453
    %v1609 = vmul.f32 %v695, %v1453
    %v1610 = vmul.f32 %v697, %v1453
    %v1611 = vmul.f32 %v699, %v1458
    %v1612 = vmul.f32 %v701, %v1458
    %v1613 = vmul.f32 %v703, %v1458
    %v1614 = vmul.f32 %v705, %v1458
    %v1615 = vmul.f32 %v707, %v1463
    %v1616 = vmul.f32 %v709, %v1463
    %v1617 = vmul.f32 %v711, %v1463
    %v1618 = vmul.f32 %v713, %v1463
    %v1619 = vmul.f32 %v715, %v1468
    %v1620 = vmul.f32 %v717, %v1468
    %v1621 = vmul.f32 %v719, %v1468
    %v1622 = vmul.f32 %v721, %v1468
    %v1623 = vmul.f32 %v723, %v1473
    %v1624 = vmul.f32 %v725, %v1473
    %v1625 = vmul.f32 %v727, %v1473
    %v1626 = vmul.f32 %v729, %v1473
    %v1627 = vmul.f32 %v731, %v1478
    %v1628 = vmul.f32 %v733, %v1478
    %v1629 = vmul.f32 %v735, %v1478
    %v1630 = vmul.f32 %v737, %v1478
    %v1631 = vmul.f32 %v739, %v1483
    %v1632 = vmul.f32 %v741, %v1483
    %v1633 = vmul.f32 %v743, %v1483
    %v1634 = vmul.f32 %v745, %v1483
    %v1635 = vmul.f32 %v747, %v1488
    %v1636 = vmul.f32 %v749, %v1488
    %v1637 = vmul.f32 %v751, %v1488
    %v1638 = vmul.f32 %v753, %v1488
    %v1639 = vmul.f32 %v755, %v1493
    %v1640 = vmul.f32 %v757, %v1493
    %v1641 = vmul.f32 %v759, %v1493
    %v1642 = vmul.f32 %v761, %v1493
    %v1643 = vmul.f32 %v763, %v1498
    %v1644 = vmul.f32 %v765, %v1498
    %v1645 = vmul.f32 %v767, %v1498
    %v1646 = vmul.f32 %v769, %v1498
    %v1647 = vmul.f32 %v771, %v1503
    %v1648 = vmul.f32 %v773, %v1503
    %v1649 = vmul.f32 %v775, %v1503
    %v1650 = vmul.f32 %v777, %v1503
    %v1651 = vmul.f32 %v779, %v1508
    %v1652 = vmul.f32 %v781, %v1508
    %v1653 = vmul.f32 %v783, %v1508
    %v1654 = vmul.f32 %v785, %v1508
    %v1655 = vmul.f32 %v787, %v1513
    %v1656 = vmul.f32 %v789, %v1513
    %v1657 = vmul.f32 %v791, %v1513
    %v1658 = vmul.f32 %v793, %v1513
    %v1659 = vmul.f32 %v795, %v1518
    %v1660 = vmul.f32 %v797, %v1518
    %v1661 = vmul.f32 %v799, %v1518
    %v1662 = vmul.f32 %v801, %v1518
    %v1663 = vmul.f32 %v803, %v1523
    %v1664 = vmul.f32 %v805, %v1523
    %v1665 = vmul.f32 %v807, %v1523
    %v1666 = vmul.f32 %v809, %v1523
    %v1667 = vmul.f32 %v811, %v1528
    %v1668 = vmul.f32 %v813, %v1528
    %v1669 = vmul.f32 %v815, %v1528
    %v1670 = vmul.f32 %v817, %v1528
    %v1671 = vmul.f32 %v819, %v1533
    %v1672 = vmul.f32 %v821, %v1533
    %v1673 = vmul.f32 %v823, %v1533
    %v1674 = vmul.f32 %v825, %v1533
    %v1675 = vmul.f32 %v827, %v1538
    %v1676 = vmul.f32 %v829, %v1538
    %v1677 = vmul.f32 %v831, %v1538
    %v1678 = vmul.f32 %v833, %v1538
    %v1679 = vmul.f32 %v835, %v1543
    %v1680 = vmul.f32 %v837, %v1543
    %v1681 = vmul.f32 %v839, %v1543
    %v1682 = vmul.f32 %v841, %v1543
    %v1683 = vmul.f32 %v843, %v1548
    %v1684 = vmul.f32 %v845, %v1548
    %v1685 = vmul.f32 %v847, %v1548
    %v1686 = vmul.f32 %v849, %v1548
    %v1687 = vmul.f32 %v851, %v1553
    %v1688 = vmul.f32 %v853, %v1553
    %v1689 = vmul.f32 %v855, %v1553
    %v1690 = vmul.f32 %v857, %v1553
    %v1691 = vmul.f32 %v859, %v1558
    %v1692 = vmul.f32 %v861, %v1558
    %v1693 = vmul.f32 %v863, %v1558
    %v1694 = vmul.f32 %v865, %v1558
    %v1695 = vmul.f32 %v867, %v1563
    %v1696 = vmul.f32 %v869, %v1563
    %v1697 = vmul.f32 %v871, %v1563
    %v1698 = vmul.f32 %v873, %v1563
    %v1699 = vmul.f32 %v875, %v1568
    %v1700 = vmul.f32 %v877, %v1568
    %v1701 = vmul.f32 %v879, %v1568
    %v1702 = vmul.f32 %v881, %v1568
    %v1703 = vmul.f32 %v883, %v1573
    %v1704 = vmul.f32 %v885, %v1573
    %v1705 = vmul.f32 %v887, %v1573
    %v1706 = vmul.f32 %v889, %v1573
    %v1707 = vmul.f32 %v891, %v1578
    %v1708 = vmul.f32 %v893, %v1578
    %v1709 = vmul.f32 %v895, %v1578
    %v1710 = vmul.f32 %v897, %v1578
    %v1711 = vmul.f32 %v899, %v1583
    %v1712 = vmul.f32 %v901, %v1583
    %v1713 = vmul.f32 %v903, %v1583
    %v1714 = vmul.f32 %v905, %v1583
    %v1715 = vmul.f32 %v907, %v1588
    %v1716 = vmul.f32 %v909, %v1588
    %v1717 = vmul.f32 %v911, %v1588
    %v1718 = vmul.f32 %v913, %v1588
    %v1719 = vmul.f32 %v915, %v1593
    %v1720 = vmul.f32 %v917, %v1593
    %v1721 = vmul.f32 %v919, %v1593
    %v1722 = vmul.f32 %v921, %v1593
    %v1723 = vld [vmem:[#allocation2] sm:$0xf]
    %v1724 = vadd.f32 %v1595, %v1599
    %v1725 = vadd.f32 %v1724, %v1603
    %v1726 = vadd.f32 %v1725, %v1607
    %v1727 = vadd.f32 %v1726, %v1611
    %v1728 = vadd.f32 %v1727, %v1615
    %v1729 = vadd.f32 %v1728, %v1619
    %v1730 = vadd.f32 %v1729, %v1623
    %v1731 = vadd.f32 %v1730, %v1627
    %v1732 = vadd.f32 %v1731, %v1631
    %v1733 = vadd.f32 %v1732, %v1635
    %v1734 = vadd.f32 %v1733, %v1639
    %v1735 = vadd.f32 %v1734, %v1643
    %v1736 = vadd.f32 %v1735, %v1647
    %v1737 = vadd.f32 %v1736, %v1651
    %v1738 = vadd.f32 %v1737, %v1655
    %v1739 = vadd.f32 %v1738, %v1659
    %v1740 = vadd.f32 %v1739, %v1663
    %v1741 = vadd.f32 %v1740, %v1667
    %v1742 = vadd.f32 %v1741, %v1671
    %v1743 = vadd.f32 %v1742, %v1675
    %v1744 = vadd.f32 %v1743, %v1679
    %v1745 = vadd.f32 %v1744, %v1683
    %v1746 = vadd.f32 %v1745, %v1687
    %v1747 = vadd.f32 %v1746, %v1691
    %v1748 = vadd.f32 %v1747, %v1695
    %v1749 = vadd.f32 %v1748, %v1699
    %v1750 = vadd.f32 %v1749, %v1703
    %v1751 = vadd.f32 %v1750, %v1707
    %v1752 = vadd.f32 %v1751, %v1711
    %v1753 = vadd.f32 %v1752, %v1715
    %v1754 = vadd.f32 %v1753, %v1719
    %v1755 = vrot.slane %v1754, 4
    %v1756 = vadd.f32 %v1754, %v1755
    %v1757 = vrot.slane %v1756, 2
    %v1758 = vadd.f32 %v1756, %v1757
    %v1759 = vrot.slane %v1758, 1
    %v1760 = vadd.f32 %v1758, %v1759
    %v1761 = vadd.f32 %v1596, %v1600
    %v1762 = vadd.f32 %v1761, %v1604
    %v1763 = vadd.f32 %v1762, %v1608
    %v1764 = vadd.f32 %v1763, %v1612
    %v1765 = vadd.f32 %v1764, %v1616
    %v1766 = vadd.f32 %v1765, %v1620
    %v1767 = vadd.f32 %v1766, %v1624
    %v1768 = vadd.f32 %v1767, %v1628
    %v1769 = vadd.f32 %v1768, %v1632
    %v1770 = vadd.f32 %v1769, %v1636
    %v1771 = vadd.f32 %v1770, %v1640
    %v1772 = vadd.f32 %v1771, %v1644
    %v1773 = vadd.f32 %v1772, %v1648
    %v1774 = vadd.f32 %v1773, %v1652
    %v1775 = vadd.f32 %v1774, %v1656
    %v1776 = vadd.f32 %v1775, %v1660
    %v1777 = vadd.f32 %v1776, %v1664
    %v1778 = vadd.f32 %v1777, %v1668
    %v1779 = vadd.f32 %v1778, %v1672
    %v1780 = vadd.f32 %v1779, %v1676
    %v1781 = vadd.f32 %v1780, %v1680
    %v1782 = vadd.f32 %v1781, %v1684
    %v1783 = vadd.f32 %v1782, %v1688
    %v1784 = vadd.f32 %v1783, %v1692
    %v1785 = vadd.f32 %v1784, %v1696
    %v1786 = vadd.f32 %v1785, %v1700
    %v1787 = vadd.f32 %v1786, %v1704
    %v1788 = vadd.f32 %v1787, %v1708
    %v1789 = vadd.f32 %v1788, %v1712
    %v1790 = vadd.f32 %v1789, %v1716
    %v1791 = vadd.f32 %v1790, %v1720
    %v1792 = vrot.slane %v1791, 4
    %v1793 = vadd.f32 %v1791, %v1792
    %v1794 = vrot.slane %v1793, 2
    %v1795 = vadd.f32 %v1793, %v1794
    %v1796 = vrot.slane %v1795, 1
    %v1797 = vadd.f32 %v1795, %v1796
    %v1798 = vadd.f32 %v1597, %v1601
    %v1799 = vadd.f32 %v1798, %v1605
    %v1800 = vadd.f32 %v1799, %v1609
    %v1801 = vadd.f32 %v1800, %v1613
    %v1802 = vadd.f32 %v1801, %v1617
    %v1803 = vadd.f32 %v1802, %v1621
    %v1804 = vadd.f32 %v1803, %v1625
    %v1805 = vadd.f32 %v1804, %v1629
    %v1806 = vadd.f32 %v1805, %v1633
    %v1807 = vadd.f32 %v1806, %v1637
    %v1808 = vadd.f32 %v1807, %v1641
    %v1809 = vadd.f32 %v1808, %v1645
    %v1810 = vadd.f32 %v1809, %v1649
    %v1811 = vadd.f32 %v1810, %v1653
    %v1812 = vadd.f32 %v1811, %v1657
    %v1813 = vadd.f32 %v1812, %v1661
    %v1814 = vadd.f32 %v1813, %v1665
    %v1815 = vadd.f32 %v1814, %v1669
    %v1816 = vadd.f32 %v1815, %v1673
    %v1817 = vadd.f32 %v1816, %v1677
    %v1818 = vadd.f32 %v1817, %v1681
    %v1819 = vadd.f32 %v1818, %v1685
    %v1820 = vadd.f32 %v1819, %v1689
    %v1821 = vadd.f32 %v1820, %v1693
    %v1822 = vadd.f32 %v1821, %v1697
    %v1823 = vadd.f32 %v1822, %v1701
    %v1824 = vadd.f32 %v1823, %v1705
    %v1825 = vadd.f32 %v1824, %v1709
    %v1826 = vadd.f32 %v1825, %v1713
    %v1827 = vadd.f32 %v1826, %v1717
    %v1828 = vadd.f32 %v1827, %v1721
    %v1829 = vrot.slane %v1828, 4
    %v1830 = vadd.f32 %v1828, %v1829
    %v1831 = vrot.slane %v1830, 2
    %v1832 = vadd.f32 %v1830, %v1831
    %v1833 = vrot.slane %v1832, 1
    %v1834 = vadd.f32 %v1832, %v1833
    %v1835 = vadd.f32 %v1598, %v1602
    %v1836 = vadd.f32 %v1835, %v1606
    %v1837 = vadd.f32 %v1836, %v1610
    %v1838 = vadd.f32 %v1837, %v1614
    %v1839 = vadd.f32 %v1838, %v1618
    %v1840 = vadd.f32 %v1839, %v1622
    %v1841 = vadd.f32 %v1840, %v1626
    %v1842 = vadd.f32 %v1841, %v1630
    %v1843 = vadd.f32 %v1842, %v1634
    %v1844 = vadd.f32 %v1843, %v1638
    %v1845 = vadd.f32 %v1844, %v1642
    %v1846 = vadd.f32 %v1845, %v1646
    %v1847 = vadd.f32 %v1846, %v1650
    %v1848 = vadd.f32 %v1847, %v1654
    %v1849 = vadd.f32 %v1848, %v1658
    %v1850 = vadd.f32 %v1849, %v1662
    %v1851 = vadd.f32 %v1850, %v1666
    %v1852 = vadd.f32 %v1851, %v1670
    %v1853 = vadd.f32 %v1852, %v1674
    %v1854 = vadd.f32 %v1853, %v1678
    %v1855 = vadd.f32 %v1854, %v1682
    %v1856 = vadd.f32 %v1855, %v1686
    %v1857 = vadd.f32 %v1856, %v1690
    %v1858 = vadd.f32 %v1857, %v1694
    %v1859 = vadd.f32 %v1858, %v1698
    %v1860 = vadd.f32 %v1859, %v1702
    %v1861 = vadd.f32 %v1860, %v1706
    %v1862 = vadd.f32 %v1861, %v1710
    %v1863 = vadd.f32 %v1862, %v1714
    %v1864 = vadd.f32 %v1863, %v1718
    %v1865 = vadd.f32 %v1864, %v1722
    %v1866 = vrot.slane %v1865, 4
    %v1867 = vadd.f32 %v1865, %v1866
    %v1868 = vrot.slane %v1867, 2
    %v1869 = vadd.f32 %v1867, %v1868
    %v1870 = vrot.slane %v1869, 1
    %v1871 = vadd.f32 %v1869, %v1870
    %v1876 = vcombine.low %v1760, %v1797
    %v1877 = vcombine.low %v1834, %v1871
    %v1879 = vunpack.c.l.s4 1966171168
    %v1880 = vunpack.c.0.s8 %v1879
    %v1881 = vlaneseq
    %v1882 = vshrl.u32 %v1881, 7
    %v1883 = vsub.s32 %v1880, %v1882
    %v1884 = vrot.slane %v1876, %v1883
    %v1886 = vunpack.c.l.s4 1966171168
    %v1887 = vunpack.c.0.s8 %v1886
    %v1888 = vlaneseq
    %v1889 = vshrl.u32 %v1888, 7
    %v1890 = vsub.s32 %v1887, %v1889
    %v1891 = vrot.slane %v1877, %v1890
    %v1892 = vcombine.low %v1884, %v1891
    %v1894 = vunpack.c.l.s4 1966171168
    %v1895 = vunpack.c.0.s8 %v1894
    %v1896 = vlaneseq
    %v1897 = vshrl.u32 %v1896, 7
    %v1898 = vsub.s32 %v1895, %v1897
    %v1899 = vrot.slane %v1892, %v1898
    %v1901 = vadd.f32 %v1723, %v1899
    %v1902 = vlaneseq
    %vm1903 = vcmp.ge.s32.totalorder %v1902, 0
    %vm1904 = vcmp.lt.s32.totalorder %v1902, 512
    %vm1905 = vmand %vm1903, %vm1904
    %1906 = vst.msk [vmem:[#allocation2] sm:$0xf] %vm1905, %v1901
    %v1907 = vld [vmem:[#allocation3] sm:$0x1]
    %v1908 = vand.u32 2147483647, %v1242
    %v1909 = vand.u32 2147483647, %v1243
    %v1910 = vand.u32 2147483647, %v1244
    %v1911 = vand.u32 2147483647, %v1245
    %v1912 = vand.u32 2147483647, %v1246
    %v1913 = vand.u32 2147483647, %v1247
    %v1914 = vand.u32 2147483647, %v1248
    %v1915 = vand.u32 2147483647, %v1249
    %v1916 = vand.u32 2147483647, %v1250
    %v1917 = vand.u32 2147483647, %v1251
    %v1918 = vand.u32 2147483647, %v1252
    %v1919 = vand.u32 2147483647, %v1253
    %v1920 = vand.u32 2147483647, %v1254
    %v1921 = vand.u32 2147483647, %v1255
    %v1922 = vand.u32 2147483647, %v1256
    %v1923 = vand.u32 2147483647, %v1257
    %v1924 = vand.u32 2147483647, %v1258
    %v1925 = vand.u32 2147483647, %v1259
    %v1926 = vand.u32 2147483647, %v1260
    %v1927 = vand.u32 2147483647, %v1261
    %v1928 = vand.u32 2147483647, %v1262
    %v1929 = vand.u32 2147483647, %v1263
    %v1930 = vand.u32 2147483647, %v1264
    %v1931 = vand.u32 2147483647, %v1265
    %v1932 = vand.u32 2147483647, %v1266
    %v1933 = vand.u32 2147483647, %v1267
    %v1934 = vand.u32 2147483647, %v1268
    %v1935 = vand.u32 2147483647, %v1269
    %v1936 = vand.u32 2147483647, %v1270
    %v1937 = vand.u32 2147483647, %v1271
    %v1938 = vand.u32 2147483647, %v1272
    %v1939 = vand.u32 2147483647, %v1273
    %v1940 = vsel %vm1306, %v1908, 0.0
    %v1941 = vsel %vm1306, %v1909, 0.0
    %v1942 = vadd.f32 %v1940, %v1941
    %v1943 = vsel %vm1306, %v1910, 0.0
    %v1944 = vadd.f32 %v1942, %v1943
    %v1945 = vsel %vm1306, %v1911, 0.0
    %v1946 = vadd.f32 %v1944, %v1945
    %v1947 = vsel %vm1306, %v1912, 0.0
    %v1948 = vadd.f32 %v1946, %v1947
    %v1949 = vsel %vm1306, %v1913, 0.0
    %v1950 = vadd.f32 %v1948, %v1949
    %v1951 = vsel %vm1306, %v1914, 0.0
    %v1952 = vadd.f32 %v1950, %v1951
    %v1953 = vsel %vm1306, %v1915, 0.0
    %v1954 = vadd.f32 %v1952, %v1953
    %v1955 = vsel %vm1306, %v1916, 0.0
    %v1956 = vadd.f32 %v1954, %v1955
    %v1957 = vsel %vm1306, %v1917, 0.0
    %v1958 = vadd.f32 %v1956, %v1957
    %v1959 = vsel %vm1306, %v1918, 0.0
    %v1960 = vadd.f32 %v1958, %v1959
    %v1961 = vsel %vm1306, %v1919, 0.0
    %v1962 = vadd.f32 %v1960, %v1961
    %v1963 = vsel %vm1306, %v1920, 0.0
    %v1964 = vadd.f32 %v1962, %v1963
    %v1965 = vsel %vm1306, %v1921, 0.0
    %v1966 = vadd.f32 %v1964, %v1965
    %v1967 = vsel %vm1306, %v1922, 0.0
    %v1968 = vadd.f32 %v1966, %v1967
    %v1969 = vsel %vm1306, %v1923, 0.0
    %v1970 = vadd.f32 %v1968, %v1969
    %v1971 = vsel %vm1306, %v1924, 0.0
    %v1972 = vadd.f32 %v1970, %v1971
    %v1973 = vsel %vm1306, %v1925, 0.0
    %v1974 = vadd.f32 %v1972, %v1973
    %v1975 = vsel %vm1306, %v1926, 0.0
    %v1976 = vadd.f32 %v1974, %v1975
    %v1977 = vsel %vm1306, %v1927, 0.0
    %v1978 = vadd.f32 %v1976, %v1977
    %v1979 = vsel %vm1306, %v1928, 0.0
    %v1980 = vadd.f32 %v1978, %v1979
    %v1981 = vsel %vm1306, %v1929, 0.0
    %v1982 = vadd.f32 %v1980, %v1981
    %v1983 = vsel %vm1306, %v1930, 0.0
    %v1984 = vadd.f32 %v1982, %v1983
    %v1985 = vsel %vm1306, %v1931, 0.0
    %v1986 = vadd.f32 %v1984, %v1985
    %v1987 = vsel %vm1306, %v1932, 0.0
    %v1988 = vadd.f32 %v1986, %v1987
    %v1989 = vsel %vm1306, %v1933, 0.0
    %v1990 = vadd.f32 %v1988, %v1989
    %v1991 = vsel %vm1306, %v1934, 0.0
    %v1992 = vadd.f32 %v1990, %v1991
    %v1993 = vsel %vm1306, %v1935, 0.0
    %v1994 = vadd.f32 %v1992, %v1993
    %v1995 = vsel %vm1306, %v1936, 0.0
    %v1996 = vadd.f32 %v1994, %v1995
    %v1997 = vsel %vm1306, %v1937, 0.0
    %v1998 = vadd.f32 %v1996, %v1997
    %v1999 = vsel %vm1306, %v1938, 0.0
    %v2000 = vadd.f32 %v1998, %v1999
    %v2001 = vsel %vm1306, %v1939, 0.0
    %v2002 = vadd.f32 %v2000, %v2001
    %v2003 = vrot.slane %v2002, 4
    %v2004 = vadd.f32 %v2002, %v2003
    %v2005 = vrot.slane %v2004, 2
    %v2006 = vadd.f32 %v2004, %v2005
    %v2007 = vrot.slane %v2006, 1
    %v2008 = vadd.f32 %v2006, %v2007
    %v2009 = vadd.f32 %v1907, %v2008
    %vm2010 = vcmask 0
    %2011 = vst.msk [vmem:[#allocation3] sm:$0x1] %vm2010, %v2009
    // Predicated region
    $region26: #{body.4} parent=1 // pred_check
      %p2012 = pneg %p24
    $region27: #{body.4} parent=1 // pred_check_branch
      %2014 = sbr.rel (%p2012) target = $region29
    $region28: #{body.4} parent=1 // pred_region
      %v2015 = vld [vmem:[%s2] sm:$0xf]
      %v2016 = vld [vmem:[#allocation2] sm:$0xf]
      %v2017 = vadd.f32 %v2016, 1e-08
      %v2018 = vlog2.pop %v2017
      %v2019 = vmul.f32 %v2018, 0.6931472
      %v2020 = vsub.f32 %v2015, %v2019
      %v2021 = vmul.f32 %v2020, 0.1
      %v2022 = vld [vmem:[%s4] sm:$0xf]
      %v2023 = vadd.f32 %v2021, %v2022
      %2024 = vst.msk [vmem:[%s6] sm:$0xf] %vm1905, %v2023
      %v2025 = vld [vmem:[#allocation3] sm:$0x1]
      %2026 = vst.msk [vmem:[#allocation4] sm:$0x1] %vm2010, %v2025
    $region29: #{body.4} parent=1 // pred_fallthru
      _
    // Predicated region
    $region30: #{body.4} parent=1 // pred_check
      _
    $region31: #{body.4} parent=1 // pred_check_branch
      %2028 = sbr.rel (0) target = $region33
    $region32: #{body.4} parent=1 // pred_region
      _
    $region33: #{body.4} parent=1 // pred_fallthru
      _
    // Predicated region
    $region34: #{body.4} parent=1 // pred_check
      _
    $region35: #{body.4} parent=1 // pred_check_branch
      %2030 = sbr.rel (0) target = $region37
    $region36: #{body.4} parent=1 // pred_region
      _
    $region37: #{body.4} parent=1 // pred_fallthru
      _
    // Predicated region
    $region38: #{body.4} parent=1 // pred_check
      _
    $region39: #{body.4} parent=1 // pred_check_branch
      %2032 = sbr.rel (0) target = $region41
    $region40: #{body.4} parent=1 // pred_region
      %s2034 = ssub.s32 16, 16
      %2035 = vsyncadd [#allocation5], %s2034
      %s2037 = sshll.u32 [#allocation4], 4
      %s2038 = int_to_ptr.vmem [resolvable:$true] %s2037
      %2040 = dma.vmem_to_hbm [thread:$0]  %s2038, 16, %s7, [#allocation5]
    $region41: #{body.4} parent=1 // pred_fallthru
      _
    // Predicated region
    $region42: #{body.4} parent=1 // pred_check
      _
    $region43: #{body.4} parent=1 // pred_check_branch
      %2042 = sbr.rel (0) target = $region45
    $region44: #{body.4} parent=1 // pred_region
      _
    $region45: #{body.4} parent=1 // pred_fallthru
      _
    // Predicated region
    $region46: #{body.4} parent=1 // pred_check
      _
    $region47: #{body.4} parent=1 // pred_check_branch
      %2044 = sbr.rel (0) target = $region49
    $region48: #{body.4} parent=1 // pred_region
      _
    $region49: #{body.4} parent=1 // pred_fallthru
      _
    // Predicated region
    $region50: #{body.4} parent=1 // pred_check
      _
    $region51: #{body.4} parent=1 // pred_check_branch
      %2046 = sbr.rel (0) target = $region53
    $region52: #{body.4} parent=1 // pred_region
      %2047 = dma.done [#allocation5], 16
    $region53: #{body.4} parent=1 // pred_fallthru
      _
    %2048 = vsyncpa [#allocation5], 1

// kernel: _gwd_item.3
$region0: #{_gwd_item.3}
  #allocation0 [shape = 'u32[]', space=smem, size = 0x4, offset = 0x4, fixed_abs, tag = 'smem constant byte address 0x4 - core index']
  #allocation1 [shape = 'u32[144,128]{1,0:T(1,128)}', space=vmem, size = 0x12000, scoped, tag = 'internal scratch']
  #allocation2 [shape = 'f32[1,1]{1,0:T(1,128)}', space=vmem, size = 0x200, scoped, tag = 'scratch operand']
  %s0 = inlined_call_operand.vmem [shape: f32[256,512], index: 0, kind: input, shape index: {}]
  %s1 = inlined_call_operand.vmem [shape: f32[256,1], index: 1, kind: input, shape index: {}]
  %s2 = inlined_call_operand.vmem [shape: f32[1,512], index: 2, kind: input, shape index: {}]
  %s3 = inlined_call_operand.hbm [shape: f32[1,1], index: 3, kind: output, shape index: {}]
  %s4 = sld [smem:[#allocation0]]
  $region30: #{_gwd_item.3} parent=0
    _
  %s6 = ssub.s32 1, %s4
  %s7 = scalar_select 0, %s6, %s4
  $region1: #{_gwd_item.3} parent=0
    #allocation3 [shape = 'u8[512]{0}', space=vmem, size = 0x400, scoped, tag = 'output window, operand 0, single buffered']
    #allocation4 [shape = 's32[1]{0}', space=sflag, size = 0x4, scoped, tag = 'scoped memory for _gwd_item.3']
    %8 = vsyncpa [#allocation4], 0
    // Predicated region
    $region2: #{_gwd_item.3} parent=1 // pred_check
      _
    $region3: #{_gwd_item.3} parent=1 // pred_check_branch
      %10 = sbr.rel (0) target = $region5
    $region4: #{_gwd_item.3} parent=1 // pred_region
      _
    $region5: #{_gwd_item.3} parent=1 // pred_fallthru
      _
    // Predicated region
    $region6: #{_gwd_item.3} parent=1 // pred_check
      _
    $region7: #{_gwd_item.3} parent=1 // pred_check_branch
      %12 = sbr.rel (0) target = $region9
    $region8: #{_gwd_item.3} parent=1 // pred_region
      _
    $region9: #{_gwd_item.3} parent=1 // pred_fallthru
      _
    // Predicated region
    $region10: #{_gwd_item.3} parent=1 // pred_check
      _
    $region11: #{_gwd_item.3} parent=1 // pred_check_branch
      %14 = sbr.rel (0) target = $region13
    $region12: #{_gwd_item.3} parent=1 // pred_region
      _
    $region13: #{_gwd_item.3} parent=1 // pred_fallthru
      _
    %p15 = scmp.eq.s32.totalorder 0, 0
    // Predicated region
    $region14: #{_gwd_item.3} parent=1 // pred_check
      %p16 = pneg %p15
    $region15: #{_gwd_item.3} parent=1 // pred_check_branch
      %18 = sbr.rel (%p16) target = $region17
    $region16: #{_gwd_item.3} parent=1 // pred_region
      %vm19 = vcmask 0
      %20 = vst.msk [vmem:[#allocation2] sm:$0x1] %vm19, 0.0
    $region17: #{_gwd_item.3} parent=1 // pred_fallthru
      _
    %v21 = vld [vmem:[%s0] sm:$0xff]
    %v22 = vld [vmem:[%s0 + $0x8] sm:$0xff]
    %v23 = vld [vmem:[%s0 + $0x10] sm:$0xff]
    %v24 = vld [vmem:[%s0 + $0x18] sm:$0xff]
    %v25 = vld [vmem:[%s0 + $0x20] sm:$0xff]
    %v26 = vld [vmem:[%s0 + $0x28] sm:$0xff]
    %v27 = vld [vmem:[%s0 + $0x30] sm:$0xff]
    %v28 = vld [vmem:[%s0 + $0x38] sm:$0xff]
    %v29 = vld [vmem:[%s0 + $0x40] sm:$0xff]
    %v30 = vld [vmem:[%s0 + $0x48] sm:$0xff]
    %v31 = vld [vmem:[%s0 + $0x50] sm:$0xff]
    %v32 = vld [vmem:[%s0 + $0x58] sm:$0xff]
    %v33 = vld [vmem:[%s0 + $0x60] sm:$0xff]
    %v34 = vld [vmem:[%s0 + $0x68] sm:$0xff]
    %v35 = vld [vmem:[%s0 + $0x70] sm:$0xff]
    %v36 = vld [vmem:[%s0 + $0x78] sm:$0xff]
    %v37 = vld [vmem:[%s0 + $0x80] sm:$0xff]
    %v38 = vld [vmem:[%s0 + $0x88] sm:$0xff]
    %v39 = vld [vmem:[%s0 + $0x90] sm:$0xff]
    %v40 = vld [vmem:[%s0 + $0x98] sm:$0xff]
    %v41 = vld [vmem:[%s0 + $0xa0] sm:$0xff]
    %v42 = vld [vmem:[%s0 + $0xa8] sm:$0xff]
    %v43 = vld [vmem:[%s0 + $0xb0] sm:$0xff]
    %v44 = vld [vmem:[%s0 + $0xb8] sm:$0xff]
    %v45 = vld [vmem:[%s0 + $0xc0] sm:$0xff]
    %v46 = vld [vmem:[%s0 + $0xc8] sm:$0xff]
    %v47 = vld [vmem:[%s0 + $0xd0] sm:$0xff]
    %v48 = vld [vmem:[%s0 + $0xd8] sm:$0xff]
    %v49 = vld [vmem:[%s0 + $0xe0] sm:$0xff]
    %v50 = vld [vmem:[%s0 + $0xe8] sm:$0xff]
    %v51 = vld [vmem:[%s0 + $0xf0] sm:$0xff]
    %v52 = vld [vmem:[%s0 + $0xf8] sm:$0xff]
    %v53 = vld [vmem:[%s0 + $0x100] sm:$0xff]
    %v54 = vld [vmem:[%s0 + $0x108] sm:$0xff]
    %v55 = vld [vmem:[%s0 + $0x110] sm:$0xff]
    %v56 = vld [vmem:[%s0 + $0x118] sm:$0xff]
    %v57 = vld [vmem:[%s0 + $0x120] sm:$0xff]
    %v58 = vld [vmem:[%s0 + $0x128] sm:$0xff]
    %v59 = vld [vmem:[%s0 + $0x130] sm:$0xff]
    %v60 = vld [vmem:[%s0 + $0x138] sm:$0xff]
    %v61 = vld [vmem:[%s0 + $0x140] sm:$0xff]
    %v62 = vld [vmem:[%s0 + $0x148] sm:$0xff]
    %v63 = vld [vmem:[%s0 + $0x150] sm:$0xff]
    %v64 = vld [vmem:[%s0 + $0x158] sm:$0xff]
    %v65 = vld [vmem:[%s0 + $0x160] sm:$0xff]
    %v66 = vld [vmem:[%s0 + $0x168] sm:$0xff]
    %v67 = vld [vmem:[%s0 + $0x170] sm:$0xff]
    %v68 = vld [vmem:[%s0 + $0x178] sm:$0xff]
    %v69 = vld [vmem:[%s0 + $0x180] sm:$0xff]
    %v70 = vld [vmem:[%s0 + $0x188] sm:$0xff]
    %v71 = vld [vmem:[%s0 + $0x190] sm:$0xff]
    %v72 = vld [vmem:[%s0 + $0x198] sm:$0xff]
    %v73 = vld [vmem:[%s0 + $0x1a0] sm:$0xff]
    %v74 = vld [vmem:[%s0 + $0x1a8] sm:$0xff]
    %v75 = vld [vmem:[%s0 + $0x1b0] sm:$0xff]
    %v76 = vld [vmem:[%s0 + $0x1b8] sm:$0xff]
    %v77 = vld [vmem:[%s0 + $0x1c0] sm:$0xff]
    %v78 = vld [vmem:[%s0 + $0x1c8] sm:$0xff]
    %v79 = vld [vmem:[%s0 + $0x1d0] sm:$0xff]
    %v80 = vld [vmem:[%s0 + $0x1d8] sm:$0xff]
    %v81 = vld [vmem:[%s0 + $0x1e0] sm:$0xff]
    %v82 = vld [vmem:[%s0 + $0x1e8] sm:$0xff]
    %v83 = vld [vmem:[%s0 + $0x1f0] sm:$0xff]
    %v84 = vld [vmem:[%s0 + $0x1f8] sm:$0xff]
    %v85 = vld [vmem:[%s0 + $0x200] sm:$0xff]
    %v86 = vld [vmem:[%s0 + $0x208] sm:$0xff]
    %v87 = vld [vmem:[%s0 + $0x210] sm:$0xff]
    %v88 = vld [vmem:[%s0 + $0x218] sm:$0xff]
    %v89 = vld [vmem:[%s0 + $0x220] sm:$0xff]
    %v90 = vld [vmem:[%s0 + $0x228] sm:$0xff]
    %v91 = vld [vmem:[%s0 + $0x230] sm:$0xff]
    %v92 = vld [vmem:[%s0 + $0x238] sm:$0xff]
    %v93 = vld [vmem:[%s0 + $0x240] sm:$0xff]
    %v94 = vld [vmem:[%s0 + $0x248] sm:$0xff]
    %v95 = vld [vmem:[%s0 + $0x250] sm:$0xff]
    %v96 = vld [vmem:[%s0 + $0x258] sm:$0xff]
    %v97 = vld [vmem:[%s0 + $0x260] sm:$0xff]
    %v98 = vld [vmem:[%s0 + $0x268] sm:$0xff]
    %v99 = vld [vmem:[%s0 + $0x270] sm:$0xff]
    %v100 = vld [vmem:[%s0 + $0x278] sm:$0xff]
    %v101 = vld [vmem:[%s0 + $0x280] sm:$0xff]
    %v102 = vld [vmem:[%s0 + $0x288] sm:$0xff]
    %v103 = vld [vmem:[%s0 + $0x290] sm:$0xff]
    %v104 = vld [vmem:[%s0 + $0x298] sm:$0xff]
    %v105 = vld [vmem:[%s0 + $0x2a0] sm:$0xff]
    %v106 = vld [vmem:[%s0 + $0x2a8] sm:$0xff]
    %v107 = vld [vmem:[%s0 + $0x2b0] sm:$0xff]
    %v108 = vld [vmem:[%s0 + $0x2b8] sm:$0xff]
    %v109 = vld [vmem:[%s0 + $0x2c0] sm:$0xff]
    %v110 = vld [vmem:[%s0 + $0x2c8] sm:$0xff]
    %v111 = vld [vmem:[%s0 + $0x2d0] sm:$0xff]
    %v112 = vld [vmem:[%s0 + $0x2d8] sm:$0xff]
    %v113 = vld [vmem:[%s0 + $0x2e0] sm:$0xff]
    %v114 = vld [vmem:[%s0 + $0x2e8] sm:$0xff]
    %v115 = vld [vmem:[%s0 + $0x2f0] sm:$0xff]
    %v116 = vld [vmem:[%s0 + $0x2f8] sm:$0xff]
    %v117 = vld [vmem:[%s0 + $0x300] sm:$0xff]
    %v118 = vld [vmem:[%s0 + $0x308] sm:$0xff]
    %v119 = vld [vmem:[%s0 + $0x310] sm:$0xff]
    %v120 = vld [vmem:[%s0 + $0x318] sm:$0xff]
    %v121 = vld [vmem:[%s0 + $0x320] sm:$0xff]
    %v122 = vld [vmem:[%s0 + $0x328] sm:$0xff]
    %v123 = vld [vmem:[%s0 + $0x330] sm:$0xff]
    %v124 = vld [vmem:[%s0 + $0x338] sm:$0xff]
    %v125 = vld [vmem:[%s0 + $0x340] sm:$0xff]
    %v126 = vld [vmem:[%s0 + $0x348] sm:$0xff]
    %v127 = vld [vmem:[%s0 + $0x350] sm:$0xff]
    %v128 = vld [vmem:[%s0 + $0x358] sm:$0xff]
    %v129 = vld [vmem:[%s0 + $0x360] sm:$0xff]
    %v130 = vld [vmem:[%s0 + $0x368] sm:$0xff]
    %v131 = vld [vmem:[%s0 + $0x370] sm:$0xff]
    %v132 = vld [vmem:[%s0 + $0x378] sm:$0xff]
    %v133 = vld [vmem:[%s0 + $0x380] sm:$0xff]
    %v134 = vld [vmem:[%s0 + $0x388] sm:$0xff]
    %v135 = vld [vmem:[%s0 + $0x390] sm:$0xff]
    %v136 = vld [vmem:[%s0 + $0x398] sm:$0xff]
    %v137 = vld [vmem:[%s0 + $0x3a0] sm:$0xff]
    %v138 = vld [vmem:[%s0 + $0x3a8] sm:$0xff]
    %v139 = vld [vmem:[%s0 + $0x3b0] sm:$0xff]
    %v140 = vld [vmem:[%s0 + $0x3b8] sm:$0xff]
    %v141 = vld [vmem:[%s0 + $0x3c0] sm:$0xff]
    %v142 = vld [vmem:[%s0 + $0x3c8] sm:$0xff]
    %v143 = vld [vmem:[%s0 + $0x3d0] sm:$0xff]
    %v144 = vld [vmem:[%s0 + $0x3d8] sm:$0xff]
    %v145 = vld [vmem:[%s0 + $0x3e0] sm:$0xff]
    %v146 = vld [vmem:[%s0 + $0x3e8] sm:$0xff]
    %v147 = vld [vmem:[%s0 + $0x3f0] sm:$0xff]
    %v148 = vld [vmem:[%s0 + $0x3f8] sm:$0xff]
    %v149 = vld [vmem:[%s1] sm:$0xff]
    %v150 = vld [vmem:[%s1 + $0x8] sm:$0xff]
    %v151 = vld [vmem:[%s1 + $0x10] sm:$0xff]
    %v152 = vld [vmem:[%s1 + $0x18] sm:$0xff]
    %v153 = vld [vmem:[%s1 + $0x20] sm:$0xff]
    %v154 = vld [vmem:[%s1 + $0x28] sm:$0xff]
    %v155 = vld [vmem:[%s1 + $0x30] sm:$0xff]
    %v156 = vld [vmem:[%s1 + $0x38] sm:$0xff]
    %v157 = vld [vmem:[%s1 + $0x40] sm:$0xff]
    %v158 = vld [vmem:[%s1 + $0x48] sm:$0xff]
    %v159 = vld [vmem:[%s1 + $0x50] sm:$0xff]
    %v160 = vld [vmem:[%s1 + $0x58] sm:$0xff]
    %v161 = vld [vmem:[%s1 + $0x60] sm:$0xff]
    %v162 = vld [vmem:[%s1 + $0x68] sm:$0xff]
    %v163 = vld [vmem:[%s1 + $0x70] sm:$0xff]
    %v164 = vld [vmem:[%s1 + $0x78] sm:$0xff]
    %v165 = vld [vmem:[%s1 + $0x80] sm:$0xff]
    %v166 = vld [vmem:[%s1 + $0x88] sm:$0xff]
    %v167 = vld [vmem:[%s1 + $0x90] sm:$0xff]
    %v168 = vld [vmem:[%s1 + $0x98] sm:$0xff]
    %v169 = vld [vmem:[%s1 + $0xa0] sm:$0xff]
    %v170 = vld [vmem:[%s1 + $0xa8] sm:$0xff]
    %v171 = vld [vmem:[%s1 + $0xb0] sm:$0xff]
    %v172 = vld [vmem:[%s1 + $0xb8] sm:$0xff]
    %v173 = vld [vmem:[%s1 + $0xc0] sm:$0xff]
    %v174 = vld [vmem:[%s1 + $0xc8] sm:$0xff]
    %v175 = vld [vmem:[%s1 + $0xd0] sm:$0xff]
    %v176 = vld [vmem:[%s1 + $0xd8] sm:$0xff]
    %v177 = vld [vmem:[%s1 + $0xe0] sm:$0xff]
    %v178 = vld [vmem:[%s1 + $0xe8] sm:$0xff]
    %v179 = vld [vmem:[%s1 + $0xf0] sm:$0xff]
    %v180 = vld [vmem:[%s1 + $0xf8] sm:$0xff]
    %v181 = vmul.f32 %v149, 10.0
    %v182 = vmul.f32 %v150, 10.0
    %v183 = vmul.f32 %v151, 10.0
    %v184 = vmul.f32 %v152, 10.0
    %v185 = vmul.f32 %v153, 10.0
    %v186 = vmul.f32 %v154, 10.0
    %v187 = vmul.f32 %v155, 10.0
    %v188 = vmul.f32 %v156, 10.0
    %v189 = vmul.f32 %v157, 10.0
    %v190 = vmul.f32 %v158, 10.0
    %v191 = vmul.f32 %v159, 10.0
    %v192 = vmul.f32 %v160, 10.0
    %v193 = vmul.f32 %v161, 10.0
    %v194 = vmul.f32 %v162, 10.0
    %v195 = vmul.f32 %v163, 10.0
    %v196 = vmul.f32 %v164, 10.0
    %v197 = vmul.f32 %v165, 10.0
    %v198 = vmul.f32 %v166, 10.0
    %v199 = vmul.f32 %v167, 10.0
    %v200 = vmul.f32 %v168, 10.0
    %v201 = vmul.f32 %v169, 10.0
    %v202 = vmul.f32 %v170, 10.0
    %v203 = vmul.f32 %v171, 10.0
    %v204 = vmul.f32 %v172, 10.0
    %v205 = vmul.f32 %v173, 10.0
    %v206 = vmul.f32 %v174, 10.0
    %v207 = vmul.f32 %v175, 10.0
    %v208 = vmul.f32 %v176, 10.0
    %v209 = vmul.f32 %v177, 10.0
    %v210 = vmul.f32 %v178, 10.0
    %v211 = vmul.f32 %v179, 10.0
    %v212 = vmul.f32 %v180, 10.0
    %214 = vset.pattern.permute.xlu0 0
    %215 = vperm.xlu0 %214, %v181
    %v216 = vpop.permute.xlu0 %215
    %219 = vset.pattern.permute.xlu0 0
    %220 = vperm.xlu0 %219, %v182
    %v221 = vpop.permute.xlu0 %220
    %224 = vset.pattern.permute.xlu0 0
    %225 = vperm.xlu0 %224, %v183
    %v226 = vpop.permute.xlu0 %225
    %229 = vset.pattern.permute.xlu0 0
    %230 = vperm.xlu0 %229, %v184
    %v231 = vpop.permute.xlu0 %230
    %234 = vset.pattern.permute.xlu0 0
    %235 = vperm.xlu0 %234, %v185
    %v236 = vpop.permute.xlu0 %235
    %239 = vset.pattern.permute.xlu0 0
    %240 = vperm.xlu0 %239, %v186
    %v241 = vpop.permute.xlu0 %240
    %244 = vset.pattern.permute.xlu0 0
    %245 = vperm.xlu0 %244, %v187
    %v246 = vpop.permute.xlu0 %245
    %249 = vset.pattern.permute.xlu0 0
    %250 = vperm.xlu0 %249, %v188
    %v251 = vpop.permute.xlu0 %250
    %254 = vset.pattern.permute.xlu0 0
    %255 = vperm.xlu0 %254, %v189
    %v256 = vpop.permute.xlu0 %255
    %259 = vset.pattern.permute.xlu0 0
    %260 = vperm.xlu0 %259, %v190
    %v261 = vpop.permute.xlu0 %260
    %264 = vset.pattern.permute.xlu0 0
    %265 = vperm.xlu0 %264, %v191
    %v266 = vpop.permute.xlu0 %265
    %269 = vset.pattern.permute.xlu0 0
    %270 = vperm.xlu0 %269, %v192
    %v271 = vpop.permute.xlu0 %270
    %274 = vset.pattern.permute.xlu0 0
    %275 = vperm.xlu0 %274, %v193
    %v276 = vpop.permute.xlu0 %275
    %279 = vset.pattern.permute.xlu0 0
    %280 = vperm.xlu0 %279, %v194
    %v281 = vpop.permute.xlu0 %280
    %284 = vset.pattern.permute.xlu0 0
    %285 = vperm.xlu0 %284, %v195
    %v286 = vpop.permute.xlu0 %285
    %289 = vset.pattern.permute.xlu0 0
    %290 = vperm.xlu0 %289, %v196
    %v291 = vpop.permute.xlu0 %290
    %294 = vset.pattern.permute.xlu0 0
    %295 = vperm.xlu0 %294, %v197
    %v296 = vpop.permute.xlu0 %295
    %299 = vset.pattern.permute.xlu0 0
    %300 = vperm.xlu0 %299, %v198
    %v301 = vpop.permute.xlu0 %300
    %304 = vset.pattern.permute.xlu0 0
    %305 = vperm.xlu0 %304, %v199
    %v306 = vpop.permute.xlu0 %305
    %309 = vset.pattern.permute.xlu0 0
    %310 = vperm.xlu0 %309, %v200
    %v311 = vpop.permute.xlu0 %310
    %314 = vset.pattern.permute.xlu0 0
    %315 = vperm.xlu0 %314, %v201
    %v316 = vpop.permute.xlu0 %315
    %319 = vset.pattern.permute.xlu0 0
    %320 = vperm.xlu0 %319, %v202
    %v321 = vpop.permute.xlu0 %320
    %324 = vset.pattern.permute.xlu0 0
    %325 = vperm.xlu0 %324, %v203
    %v326 = vpop.permute.xlu0 %325
    %329 = vset.pattern.permute.xlu0 0
    %330 = vperm.xlu0 %329, %v204
    %v331 = vpop.permute.xlu0 %330
    %334 = vset.pattern.permute.xlu0 0
    %335 = vperm.xlu0 %334, %v205
    %v336 = vpop.permute.xlu0 %335
    %339 = vset.pattern.permute.xlu0 0
    %340 = vperm.xlu0 %339, %v206
    %v341 = vpop.permute.xlu0 %340
    %344 = vset.pattern.permute.xlu0 0
    %345 = vperm.xlu0 %344, %v207
    %v346 = vpop.permute.xlu0 %345
    %349 = vset.pattern.permute.xlu0 0
    %350 = vperm.xlu0 %349, %v208
    %v351 = vpop.permute.xlu0 %350
    %354 = vset.pattern.permute.xlu0 0
    %355 = vperm.xlu0 %354, %v209
    %v356 = vpop.permute.xlu0 %355
    %359 = vset.pattern.permute.xlu0 0
    %360 = vperm.xlu0 %359, %v210
    %v361 = vpop.permute.xlu0 %360
    %364 = vset.pattern.permute.xlu0 0
    %365 = vperm.xlu0 %364, %v211
    %v366 = vpop.permute.xlu0 %365
    %369 = vset.pattern.permute.xlu0 0
    %370 = vperm.xlu0 %369, %v212
    %v371 = vpop.permute.xlu0 %370
    %v373 = vadd.f32 %v21, %v216
    %v374 = vadd.f32 %v22, %v216
    %v375 = vadd.f32 %v23, %v216
    %v376 = vadd.f32 %v24, %v216
    %v377 = vadd.f32 %v25, %v221
    %v378 = vadd.f32 %v26, %v221
    %v379 = vadd.f32 %v27, %v221
    %v380 = vadd.f32 %v28, %v221
    %v381 = vadd.f32 %v29, %v226
    %v382 = vadd.f32 %v30, %v226
    %v383 = vadd.f32 %v31, %v226
    %v384 = vadd.f32 %v32, %v226
    %v385 = vadd.f32 %v33, %v231
    %v386 = vadd.f32 %v34, %v231
    %v387 = vadd.f32 %v35, %v231
    %v388 = vadd.f32 %v36, %v231
    %v389 = vadd.f32 %v37, %v236
    %v390 = vadd.f32 %v38, %v236
    %v391 = vadd.f32 %v39, %v236
    %v392 = vadd.f32 %v40, %v236
    %v393 = vadd.f32 %v41, %v241
    %v394 = vadd.f32 %v42, %v241
    %v395 = vadd.f32 %v43, %v241
    %v396 = vadd.f32 %v44, %v241
    %v397 = vadd.f32 %v45, %v246
    %v398 = vadd.f32 %v46, %v246
    %v399 = vadd.f32 %v47, %v246
    %v400 = vadd.f32 %v48, %v246
    %v401 = vadd.f32 %v49, %v251
    %v402 = vadd.f32 %v50, %v251
    %v403 = vadd.f32 %v51, %v251
    %v404 = vadd.f32 %v52, %v251
    %v405 = vadd.f32 %v53, %v256
    %v406 = vadd.f32 %v54, %v256
    %v407 = vadd.f32 %v55, %v256
    %v408 = vadd.f32 %v56, %v256
    %v409 = vadd.f32 %v57, %v261
    %v410 = vadd.f32 %v58, %v261
    %v411 = vadd.f32 %v59, %v261
    %v412 = vadd.f32 %v60, %v261
    %v413 = vadd.f32 %v61, %v266
    %v414 = vadd.f32 %v62, %v266
    %v415 = vadd.f32 %v63, %v266
    %v416 = vadd.f32 %v64, %v266
    %v417 = vadd.f32 %v65, %v271
    %v418 = vadd.f32 %v66, %v271
    %v419 = vadd.f32 %v67, %v271
    %v420 = vadd.f32 %v68, %v271
    %v421 = vadd.f32 %v69, %v276
    %v422 = vadd.f32 %v70, %v276
    %v423 = vadd.f32 %v71, %v276
    %v424 = vadd.f32 %v72, %v276
    %v425 = vadd.f32 %v73, %v281
    %v426 = vadd.f32 %v74, %v281
    %v427 = vadd.f32 %v75, %v281
    %v428 = vadd.f32 %v76, %v281
    %v429 = vadd.f32 %v77, %v286
    %v430 = vadd.f32 %v78, %v286
    %v431 = vadd.f32 %v79, %v286
    %v432 = vadd.f32 %v80, %v286
    %v433 = vadd.f32 %v81, %v291
    %v434 = vadd.f32 %v82, %v291
    %v435 = vadd.f32 %v83, %v291
    %v436 = vadd.f32 %v84, %v291
    %v437 = vadd.f32 %v85, %v296
    %v438 = vadd.f32 %v86, %v296
    %v439 = vadd.f32 %v87, %v296
    %v440 = vadd.f32 %v88, %v296
    %v441 = vadd.f32 %v89, %v301
    %v442 = vadd.f32 %v90, %v301
    %v443 = vadd.f32 %v91, %v301
    %v444 = vadd.f32 %v92, %v301
    %v445 = vadd.f32 %v93, %v306
    %v446 = vadd.f32 %v94, %v306
    %v447 = vadd.f32 %v95, %v306
    %v448 = vadd.f32 %v96, %v306
    %v449 = vadd.f32 %v97, %v311
    %v450 = vadd.f32 %v98, %v311
    %v451 = vadd.f32 %v99, %v311
    %v452 = vadd.f32 %v100, %v311
    %v453 = vadd.f32 %v101, %v316
    %v454 = vadd.f32 %v102, %v316
    %v455 = vadd.f32 %v103, %v316
    %v456 = vadd.f32 %v104, %v316
    %v457 = vadd.f32 %v105, %v321
    %v458 = vadd.f32 %v106, %v321
    %v459 = vadd.f32 %v107, %v321
    %v460 = vadd.f32 %v108, %v321
    %v461 = vadd.f32 %v109, %v326
    %v462 = vadd.f32 %v110, %v326
    %v463 = vadd.f32 %v111, %v326
    %v464 = vadd.f32 %v112, %v326
    %v465 = vadd.f32 %v113, %v331
    %v466 = vadd.f32 %v114, %v331
    %v467 = vadd.f32 %v115, %v331
    %v468 = vadd.f32 %v116, %v331
    %v469 = vadd.f32 %v117, %v336
    %v470 = vadd.f32 %v118, %v336
    %v471 = vadd.f32 %v119, %v336
    %v472 = vadd.f32 %v120, %v336
    %v473 = vadd.f32 %v121, %v341
    %v474 = vadd.f32 %v122, %v341
    %v475 = vadd.f32 %v123, %v341
    %v476 = vadd.f32 %v124, %v341
    %v477 = vadd.f32 %v125, %v346
    %v478 = vadd.f32 %v126, %v346
    %v479 = vadd.f32 %v127, %v346
    %v480 = vadd.f32 %v128, %v346
    %v481 = vadd.f32 %v129, %v351
    %v482 = vadd.f32 %v130, %v351
    %v483 = vadd.f32 %v131, %v351
    %v484 = vadd.f32 %v132, %v351
    %v485 = vadd.f32 %v133, %v356
    %v486 = vadd.f32 %v134, %v356
    %v487 = vadd.f32 %v135, %v356
    %v488 = vadd.f32 %v136, %v356
    %v489 = vadd.f32 %v137, %v361
    %v490 = vadd.f32 %v138, %v361
    %v491 = vadd.f32 %v139, %v361
    %v492 = vadd.f32 %v140, %v361
    %v493 = vadd.f32 %v141, %v366
    %v494 = vadd.f32 %v142, %v366
    %v495 = vadd.f32 %v143, %v366
    %v496 = vadd.f32 %v144, %v366
    %v497 = vadd.f32 %v145, %v371
    %v498 = vadd.f32 %v146, %v371
    %v499 = vadd.f32 %v147, %v371
    %v500 = vadd.f32 %v148, %v371
    %v501 = vld [vmem:[%s2] sm:$0xf]
    %v502 = vmul.f32 %v501, 10.0
    %v504 = vlaneseq
    %v505 = vshrl.u32 %v504, 7
    %v506 = vsub.s32 0, %v505
    %v507 = vrot.slane %v502, %v506
    %v508 = vlaneseq
    %v509 = vshrl.u32 %v508, 7
    %v510 = vsub.s32 1, %v509
    %v511 = vrot.slane %v502, %v510
    %v512 = vlaneseq
    %v513 = vshrl.u32 %v512, 7
    %v514 = vsub.s32 2, %v513
    %v515 = vrot.slane %v502, %v514
    %v516 = vlaneseq
    %v517 = vshrl.u32 %v516, 7
    %v518 = vsub.s32 3, %v517
    %v519 = vrot.slane %v502, %v518
    %v524 = vadd.f32 %v373, %v507
    %v525 = vadd.f32 %v374, %v511
    %v526 = vadd.f32 %v375, %v515
    %v527 = vadd.f32 %v376, %v519
    %v528 = vadd.f32 %v377, %v507
    %v529 = vadd.f32 %v378, %v511
    %v530 = vadd.f32 %v379, %v515
    %v531 = vadd.f32 %v380, %v519
    %v532 = vadd.f32 %v381, %v507
    %v533 = vadd.f32 %v382, %v511
    %v534 = vadd.f32 %v383, %v515
    %v535 = vadd.f32 %v384, %v519
    %v536 = vadd.f32 %v385, %v507
    %v537 = vadd.f32 %v386, %v511
    %v538 = vadd.f32 %v387, %v515
    %v539 = vadd.f32 %v388, %v519
    %v540 = vadd.f32 %v389, %v507
    %v541 = vadd.f32 %v390, %v511
    %v542 = vadd.f32 %v391, %v515
    %v543 = vadd.f32 %v392, %v519
    %v544 = vadd.f32 %v393, %v507
    %v545 = vadd.f32 %v394, %v511
    %v546 = vadd.f32 %v395, %v515
    %v547 = vadd.f32 %v396, %v519
    %v548 = vadd.f32 %v397, %v507
    %v549 = vadd.f32 %v398, %v511
    %v550 = vadd.f32 %v399, %v515
    %v551 = vadd.f32 %v400, %v519
    %v552 = vadd.f32 %v401, %v507
    %v553 = vadd.f32 %v402, %v511
    %v554 = vadd.f32 %v403, %v515
    %v555 = vadd.f32 %v404, %v519
    %v556 = vadd.f32 %v405, %v507
    %v557 = vadd.f32 %v406, %v511
    %v558 = vadd.f32 %v407, %v515
    %v559 = vadd.f32 %v408, %v519
    %v560 = vadd.f32 %v409, %v507
    %v561 = vadd.f32 %v410, %v511
    %v562 = vadd.f32 %v411, %v515
    %v563 = vadd.f32 %v412, %v519
    %v564 = vadd.f32 %v413, %v507
    %v565 = vadd.f32 %v414, %v511
    %v566 = vadd.f32 %v415, %v515
    %v567 = vadd.f32 %v416, %v519
    %v568 = vadd.f32 %v417, %v507
    %v569 = vadd.f32 %v418, %v511
    %v570 = vadd.f32 %v419, %v515
    %v571 = vadd.f32 %v420, %v519
    %v572 = vadd.f32 %v421, %v507
    %v573 = vadd.f32 %v422, %v511
    %v574 = vadd.f32 %v423, %v515
    %v575 = vadd.f32 %v424, %v519
    %v576 = vadd.f32 %v425, %v507
    %v577 = vadd.f32 %v426, %v511
    %v578 = vadd.f32 %v427, %v515
    %v579 = vadd.f32 %v428, %v519
    %v580 = vadd.f32 %v429, %v507
    %v581 = vadd.f32 %v430, %v511
    %v582 = vadd.f32 %v431, %v515
    %v583 = vadd.f32 %v432, %v519
    %v584 = vadd.f32 %v433, %v507
    %v585 = vadd.f32 %v434, %v511
    %v586 = vadd.f32 %v435, %v515
    %v587 = vadd.f32 %v436, %v519
    %v588 = vadd.f32 %v437, %v507
    %v589 = vadd.f32 %v438, %v511
    %v590 = vadd.f32 %v439, %v515
    %v591 = vadd.f32 %v440, %v519
    %v592 = vadd.f32 %v441, %v507
    %v593 = vadd.f32 %v442, %v511
    %v594 = vadd.f32 %v443, %v515
    %v595 = vadd.f32 %v444, %v519
    %v596 = vadd.f32 %v445, %v507
    %v597 = vadd.f32 %v446, %v511
    %v598 = vadd.f32 %v447, %v515
    %v599 = vadd.f32 %v448, %v519
    %v600 = vadd.f32 %v449, %v507
    %v601 = vadd.f32 %v450, %v511
    %v602 = vadd.f32 %v451, %v515
    %v603 = vadd.f32 %v452, %v519
    %v604 = vadd.f32 %v453, %v507
    %v605 = vadd.f32 %v454, %v511
    %v606 = vadd.f32 %v455, %v515
    %v607 = vadd.f32 %v456, %v519
    %v608 = vadd.f32 %v457, %v507
    %v609 = vadd.f32 %v458, %v511
    %v610 = vadd.f32 %v459, %v515
    %v611 = vadd.f32 %v460, %v519
    %v612 = vadd.f32 %v461, %v507
    %v613 = vadd.f32 %v462, %v511
    %v614 = vadd.f32 %v463, %v515
    %v615 = vadd.f32 %v464, %v519
    %v616 = vadd.f32 %v465, %v507
    %v617 = vadd.f32 %v466, %v511
    %v618 = vadd.f32 %v467, %v515
    %v619 = vadd.f32 %v468, %v519
    %v620 = vadd.f32 %v469, %v507
    %v621 = vadd.f32 %v470, %v511
    %v622 = vadd.f32 %v471, %v515
    %v623 = vadd.f32 %v472, %v519
    %v624 = vadd.f32 %v473, %v507
    %v625 = vadd.f32 %v474, %v511
    %v626 = vadd.f32 %v475, %v515
    %v627 = vadd.f32 %v476, %v519
    %v628 = vadd.f32 %v477, %v507
    %v629 = vadd.f32 %v478, %v511
    %v630 = vadd.f32 %v479, %v515
    %v631 = vadd.f32 %v480, %v519
    %v632 = vadd.f32 %v481, %v507
    %v633 = vadd.f32 %v482, %v511
    %v634 = vadd.f32 %v483, %v515
    %v635 = vadd.f32 %v484, %v519
    %v636 = vadd.f32 %v485, %v507
    %v637 = vadd.f32 %v486, %v511
    %v638 = vadd.f32 %v487, %v515
    %v639 = vadd.f32 %v488, %v519
    %v640 = vadd.f32 %v489, %v507
    %v641 = vadd.f32 %v490, %v511
    %v642 = vadd.f32 %v491, %v515
    %v643 = vadd.f32 %v492, %v519
    %v644 = vadd.f32 %v493, %v507
    %v645 = vadd.f32 %v494, %v511
    %v646 = vadd.f32 %v495, %v515
    %v647 = vadd.f32 %v496, %v519
    %v648 = vadd.f32 %v497, %v507
    %v649 = vadd.f32 %v498, %v511
    %v650 = vadd.f32 %v499, %v515
    %v651 = vadd.f32 %v500, %v519
    %v652 = vmul.f32 %v524, 1.442695
    %v653 = vpow.pop %v652
    %v654 = vmul.f32 %v525, 1.442695
    %v655 = vpow.pop %v654
    %v656 = vmul.f32 %v526, 1.442695
    %v657 = vpow.pop %v656
    %v658 = vmul.f32 %v527, 1.442695
    %v659 = vpow.pop %v658
    %v660 = vmul.f32 %v528, 1.442695
    %v661 = vpow.pop %v660
    %v662 = vmul.f32 %v529, 1.442695
    %v663 = vpow.pop %v662
    %v664 = vmul.f32 %v530, 1.442695
    %v665 = vpow.pop %v664
    %v666 = vmul.f32 %v531, 1.442695
    %v667 = vpow.pop %v666
    %v668 = vmul.f32 %v532, 1.442695
    %v669 = vpow.pop %v668
    %v670 = vmul.f32 %v533, 1.442695
    %v671 = vpow.pop %v670
    %v672 = vmul.f32 %v534, 1.442695
    %v673 = vpow.pop %v672
    %v674 = vmul.f32 %v535, 1.442695
    %v675 = vpow.pop %v674
    %v676 = vmul.f32 %v536, 1.442695
    %v677 = vpow.pop %v676
    %v678 = vmul.f32 %v537, 1.442695
    %v679 = vpow.pop %v678
    %v680 = vmul.f32 %v538, 1.442695
    %v681 = vpow.pop %v680
    %v682 = vmul.f32 %v539, 1.442695
    %v683 = vpow.pop %v682
    %v684 = vmul.f32 %v540, 1.442695
    %v685 = vpow.pop %v684
    %v686 = vmul.f32 %v541, 1.442695
    %v687 = vpow.pop %v686
    %v688 = vmul.f32 %v542, 1.442695
    %v689 = vpow.pop %v688
    %v690 = vmul.f32 %v543, 1.442695
    %v691 = vpow.pop %v690
    %v692 = vmul.f32 %v544, 1.442695
    %v693 = vpow.pop %v692
    %v694 = vmul.f32 %v545, 1.442695
    %v695 = vpow.pop %v694
    %v696 = vmul.f32 %v546, 1.442695
    %v697 = vpow.pop %v696
    %v698 = vmul.f32 %v547, 1.442695
    %v699 = vpow.pop %v698
    %v700 = vmul.f32 %v548, 1.442695
    %v701 = vpow.pop %v700
    %v702 = vmul.f32 %v549, 1.442695
    %v703 = vpow.pop %v702
    %v704 = vmul.f32 %v550, 1.442695
    %v705 = vpow.pop %v704
    %v706 = vmul.f32 %v551, 1.442695
    %v707 = vpow.pop %v706
    %v708 = vmul.f32 %v552, 1.442695
    %v709 = vpow.pop %v708
    %v710 = vmul.f32 %v553, 1.442695
    %v711 = vpow.pop %v710
    %v712 = vmul.f32 %v554, 1.442695
    %v713 = vpow.pop %v712
    %v714 = vmul.f32 %v555, 1.442695
    %v715 = vpow.pop %v714
    %v716 = vmul.f32 %v556, 1.442695
    %v717 = vpow.pop %v716
    %v718 = vmul.f32 %v557, 1.442695
    %v719 = vpow.pop %v718
    %v720 = vmul.f32 %v558, 1.442695
    %v721 = vpow.pop %v720
    %v722 = vmul.f32 %v559, 1.442695
    %v723 = vpow.pop %v722
    %v724 = vmul.f32 %v560, 1.442695
    %v725 = vpow.pop %v724
    %v726 = vmul.f32 %v561, 1.442695
    %v727 = vpow.pop %v726
    %v728 = vmul.f32 %v562, 1.442695
    %v729 = vpow.pop %v728
    %v730 = vmul.f32 %v563, 1.442695
    %v731 = vpow.pop %v730
    %v732 = vmul.f32 %v564, 1.442695
    %v733 = vpow.pop %v732
    %v734 = vmul.f32 %v565, 1.442695
    %v735 = vpow.pop %v734
    %v736 = vmul.f32 %v566, 1.442695
    %v737 = vpow.pop %v736
    %v738 = vmul.f32 %v567, 1.442695
    %v739 = vpow.pop %v738
    %v740 = vmul.f32 %v568, 1.442695
    %v741 = vpow.pop %v740
    %v742 = vmul.f32 %v569, 1.442695
    %v743 = vpow.pop %v742
    %v744 = vmul.f32 %v570, 1.442695
    %v745 = vpow.pop %v744
    %v746 = vmul.f32 %v571, 1.442695
    %v747 = vpow.pop %v746
    %v748 = vmul.f32 %v572, 1.442695
    %v749 = vpow.pop %v748
    %v750 = vmul.f32 %v573, 1.442695
    %v751 = vpow.pop %v750
    %v752 = vmul.f32 %v574, 1.442695
    %v753 = vpow.pop %v752
    %v754 = vmul.f32 %v575, 1.442695
    %v755 = vpow.pop %v754
    %v756 = vmul.f32 %v576, 1.442695
    %v757 = vpow.pop %v756
    %v758 = vmul.f32 %v577, 1.442695
    %v759 = vpow.pop %v758
    %v760 = vmul.f32 %v578, 1.442695
    %v761 = vpow.pop %v760
    %v762 = vmul.f32 %v579, 1.442695
    %v763 = vpow.pop %v762
    %v764 = vmul.f32 %v580, 1.442695
    %v765 = vpow.pop %v764
    %v766 = vmul.f32 %v581, 1.442695
    %v767 = vpow.pop %v766
    %v768 = vmul.f32 %v582, 1.442695
    %v769 = vpow.pop %v768
    %v770 = vmul.f32 %v583, 1.442695
    %v771 = vpow.pop %v770
    %v772 = vmul.f32 %v584, 1.442695
    %v773 = vpow.pop %v772
    %v774 = vmul.f32 %v585, 1.442695
    %v775 = vpow.pop %v774
    %v776 = vmul.f32 %v586, 1.442695
    %v777 = vpow.pop %v776
    %v778 = vmul.f32 %v587, 1.442695
    %v779 = vpow.pop %v778
    %v780 = vmul.f32 %v588, 1.442695
    %v781 = vpow.pop %v780
    %v782 = vmul.f32 %v589, 1.442695
    %v783 = vpow.pop %v782
    %v784 = vmul.f32 %v590, 1.442695
    %v785 = vpow.pop %v784
    %v786 = vmul.f32 %v591, 1.442695
    %v787 = vpow.pop %v786
    %v788 = vmul.f32 %v592, 1.442695
    %v789 = vpow.pop %v788
    %v790 = vmul.f32 %v593, 1.442695
    %v791 = vpow.pop %v790
    %v792 = vmul.f32 %v594, 1.442695
    %v793 = vpow.pop %v792
    %v794 = vmul.f32 %v595, 1.442695
    %v795 = vpow.pop %v794
    %v796 = vmul.f32 %v596, 1.442695
    %v797 = vpow.pop %v796
    %v798 = vmul.f32 %v597, 1.442695
    %v799 = vpow.pop %v798
    %v800 = vmul.f32 %v598, 1.442695
    %v801 = vpow.pop %v800
    %v802 = vmul.f32 %v599, 1.442695
    %v803 = vpow.pop %v802
    %v804 = vmul.f32 %v600, 1.442695
    %v805 = vpow.pop %v804
    %v806 = vmul.f32 %v601, 1.442695
    %v807 = vpow.pop %v806
    %v808 = vmul.f32 %v602, 1.442695
    %v809 = vpow.pop %v808
    %v810 = vmul.f32 %v603, 1.442695
    %v811 = vpow.pop %v810
    %v812 = vmul.f32 %v604, 1.442695
    %v813 = vpow.pop %v812
    %v814 = vmul.f32 %v605, 1.442695
    %v815 = vpow.pop %v814
    %v816 = vmul.f32 %v606, 1.442695
    %v817 = vpow.pop %v816
    %v818 = vmul.f32 %v607, 1.442695
    %v819 = vpow.pop %v818
    %v820 = vmul.f32 %v608, 1.442695
    %v821 = vpow.pop %v820
    %v822 = vmul.f32 %v609, 1.442695
    %v823 = vpow.pop %v822
    %v824 = vmul.f32 %v610, 1.442695
    %v825 = vpow.pop %v824
    %v826 = vmul.f32 %v611, 1.442695
    %v827 = vpow.pop %v826
    %v828 = vmul.f32 %v612, 1.442695
    %v829 = vpow.pop %v828
    %v830 = vmul.f32 %v613, 1.442695
    %v831 = vpow.pop %v830
    %v832 = vmul.f32 %v614, 1.442695
    %v833 = vpow.pop %v832
    %v834 = vmul.f32 %v615, 1.442695
    %v835 = vpow.pop %v834
    %v836 = vmul.f32 %v616, 1.442695
    %v837 = vpow.pop %v836
    %v838 = vmul.f32 %v617, 1.442695
    %v839 = vpow.pop %v838
    %v840 = vmul.f32 %v618, 1.442695
    %v841 = vpow.pop %v840
    %v842 = vmul.f32 %v619, 1.442695
    %v843 = vpow.pop %v842
    %v844 = vmul.f32 %v620, 1.442695
    %v845 = vpow.pop %v844
    %v846 = vmul.f32 %v621, 1.442695
    %v847 = vpow.pop %v846
    %v848 = vmul.f32 %v622, 1.442695
    %v849 = vpow.pop %v848
    %v850 = vmul.f32 %v623, 1.442695
    %v851 = vpow.pop %v850
    %v852 = vmul.f32 %v624, 1.442695
    %v853 = vpow.pop %v852
    %v854 = vmul.f32 %v625, 1.442695
    %v855 = vpow.pop %v854
    %v856 = vmul.f32 %v626, 1.442695
    %v857 = vpow.pop %v856
    %v858 = vmul.f32 %v627, 1.442695
    %v859 = vpow.pop %v858
    %v860 = vmul.f32 %v628, 1.442695
    %v861 = vpow.pop %v860
    %v862 = vmul.f32 %v629, 1.442695
    %v863 = vpow.pop %v862
    %v864 = vmul.f32 %v630, 1.442695
    %v865 = vpow.pop %v864
    %v866 = vmul.f32 %v631, 1.442695
    %v867 = vpow.pop %v866
    %v868 = vmul.f32 %v632, 1.442695
    %v869 = vpow.pop %v868
    %v870 = vmul.f32 %v633, 1.442695
    %v871 = vpow.pop %v870
    %v872 = vmul.f32 %v634, 1.442695
    %v873 = vpow.pop %v872
    %v874 = vmul.f32 %v635, 1.442695
    %v875 = vpow.pop %v874
    %v876 = vmul.f32 %v636, 1.442695
    %v877 = vpow.pop %v876
    %v878 = vmul.f32 %v637, 1.442695
    %v879 = vpow.pop %v878
    %v880 = vmul.f32 %v638, 1.442695
    %v881 = vpow.pop %v880
    %v882 = vmul.f32 %v639, 1.442695
    %v883 = vpow.pop %v882
    %v884 = vmul.f32 %v640, 1.442695
    %v885 = vpow.pop %v884
    %v886 = vmul.f32 %v641, 1.442695
    %v887 = vpow.pop %v886
    %v888 = vmul.f32 %v642, 1.442695
    %v889 = vpow.pop %v888
    %v890 = vmul.f32 %v643, 1.442695
    %v891 = vpow.pop %v890
    %v892 = vmul.f32 %v644, 1.442695
    %v893 = vpow.pop %v892
    %v894 = vmul.f32 %v645, 1.442695
    %v895 = vpow.pop %v894
    %v896 = vmul.f32 %v646, 1.442695
    %v897 = vpow.pop %v896
    %v898 = vmul.f32 %v647, 1.442695
    %v899 = vpow.pop %v898
    %v900 = vmul.f32 %v648, 1.442695
    %v901 = vpow.pop %v900
    %v902 = vmul.f32 %v649, 1.442695
    %v903 = vpow.pop %v902
    %v904 = vmul.f32 %v650, 1.442695
    %v905 = vpow.pop %v904
    %v906 = vmul.f32 %v651, 1.442695
    %v907 = vpow.pop %v906
    %v908 = vmul.f32 %v653, -0.1
    %v909 = vmul.f32 %v655, -0.1
    %v910 = vmul.f32 %v657, -0.1
    %v911 = vmul.f32 %v659, -0.1
    %v912 = vmul.f32 %v661, -0.1
    %v913 = vmul.f32 %v663, -0.1
    %v914 = vmul.f32 %v665, -0.1
    %v915 = vmul.f32 %v667, -0.1
    %v916 = vmul.f32 %v669, -0.1
    %v917 = vmul.f32 %v671, -0.1
    %v918 = vmul.f32 %v673, -0.1
    %v919 = vmul.f32 %v675, -0.1
    %v920 = vmul.f32 %v677, -0.1
    %v921 = vmul.f32 %v679, -0.1
    %v922 = vmul.f32 %v681, -0.1
    %v923 = vmul.f32 %v683, -0.1
    %v924 = vmul.f32 %v685, -0.1
    %v925 = vmul.f32 %v687, -0.1
    %v926 = vmul.f32 %v689, -0.1
    %v927 = vmul.f32 %v691, -0.1
    %v928 = vmul.f32 %v693, -0.1
    %v929 = vmul.f32 %v695, -0.1
    %v930 = vmul.f32 %v697, -0.1
    %v931 = vmul.f32 %v699, -0.1
    %v932 = vmul.f32 %v701, -0.1
    %v933 = vmul.f32 %v703, -0.1
    %v934 = vmul.f32 %v705, -0.1
    %v935 = vmul.f32 %v707, -0.1
    %v936 = vmul.f32 %v709, -0.1
    %v937 = vmul.f32 %v711, -0.1
    %v938 = vmul.f32 %v713, -0.1
    %v939 = vmul.f32 %v715, -0.1
    %v940 = vmul.f32 %v717, -0.1
    %v941 = vmul.f32 %v719, -0.1
    %v942 = vmul.f32 %v721, -0.1
    %v943 = vmul.f32 %v723, -0.1
    %v944 = vmul.f32 %v725, -0.1
    %v945 = vmul.f32 %v727, -0.1
    %v946 = vmul.f32 %v729, -0.1
    %v947 = vmul.f32 %v731, -0.1
    %v948 = vmul.f32 %v733, -0.1
    %v949 = vmul.f32 %v735, -0.1
    %v950 = vmul.f32 %v737, -0.1
    %v951 = vmul.f32 %v739, -0.1
    %v952 = vmul.f32 %v741, -0.1
    %v953 = vmul.f32 %v743, -0.1
    %v954 = vmul.f32 %v745, -0.1
    %v955 = vmul.f32 %v747, -0.1
    %v956 = vmul.f32 %v749, -0.1
    %v957 = vmul.f32 %v751, -0.1
    %v958 = vmul.f32 %v753, -0.1
    %v959 = vmul.f32 %v755, -0.1
    %v960 = vmul.f32 %v757, -0.1
    %v961 = vmul.f32 %v759, -0.1
    %v962 = vmul.f32 %v761, -0.1
    %v963 = vmul.f32 %v763, -0.1
    %v964 = vmul.f32 %v765, -0.1
    %v965 = vmul.f32 %v767, -0.1
    %v966 = vmul.f32 %v769, -0.1
    %v967 = vmul.f32 %v771, -0.1
    %v968 = vmul.f32 %v773, -0.1
    %v969 = vmul.f32 %v775, -0.1
    %v970 = vmul.f32 %v777, -0.1
    %v971 = vmul.f32 %v779, -0.1
    %v972 = vmul.f32 %v781, -0.1
    %v973 = vmul.f32 %v783, -0.1
    %v974 = vmul.f32 %v785, -0.1
    %v975 = vmul.f32 %v787, -0.1
    %v976 = vmul.f32 %v789, -0.1
    %v977 = vmul.f32 %v791, -0.1
    %v978 = vmul.f32 %v793, -0.1
    %v979 = vmul.f32 %v795, -0.1
    %v980 = vmul.f32 %v797, -0.1
    %v981 = vmul.f32 %v799, -0.1
    %v982 = vmul.f32 %v801, -0.1
    %v983 = vmul.f32 %v803, -0.1
    %v984 = vmul.f32 %v805, -0.1
    %v985 = vmul.f32 %v807, -0.1
    %v986 = vmul.f32 %v809, -0.1
    %v987 = vmul.f32 %v811, -0.1
    %v988 = vmul.f32 %v813, -0.1
    %v989 = vmul.f32 %v815, -0.1
    %v990 = vmul.f32 %v817, -0.1
    %v991 = vmul.f32 %v819, -0.1
    %v992 = vmul.f32 %v821, -0.1
    %v993 = vmul.f32 %v823, -0.1
    %v994 = vmul.f32 %v825, -0.1
    %v995 = vmul.f32 %v827, -0.1
    %v996 = vmul.f32 %v829, -0.1
    %v997 = vmul.f32 %v831, -0.1
    %v998 = vmul.f32 %v833, -0.1
    %v999 = vmul.f32 %v835, -0.1
    %v1000 = vmul.f32 %v837, -0.1
    %v1001 = vmul.f32 %v839, -0.1
    %v1002 = vmul.f32 %v841, -0.1
    %v1003 = vmul.f32 %v843, -0.1
    %v1004 = vmul.f32 %v845, -0.1
    %v1005 = vmul.f32 %v847, -0.1
    %v1006 = vmul.f32 %v849, -0.1
    %v1007 = vmul.f32 %v851, -0.1
    %v1008 = vmul.f32 %v853, -0.1
    %v1009 = vmul.f32 %v855, -0.1
    %v1010 = vmul.f32 %v857, -0.1
    %v1011 = vmul.f32 %v859, -0.1
    %v1012 = vmul.f32 %v861, -0.1
    %v1013 = vmul.f32 %v863, -0.1
    %v1014 = vmul.f32 %v865, -0.1
    %v1015 = vmul.f32 %v867, -0.1
    %v1016 = vmul.f32 %v869, -0.1
    %v1017 = vmul.f32 %v871, -0.1
    %v1018 = vmul.f32 %v873, -0.1
    %v1019 = vmul.f32 %v875, -0.1
    %v1020 = vmul.f32 %v877, -0.1
    %v1021 = vmul.f32 %v879, -0.1
    %v1022 = vmul.f32 %v881, -0.1
    %v1023 = vmul.f32 %v883, -0.1
    %v1024 = vmul.f32 %v885, -0.1
    %v1025 = vmul.f32 %v887, -0.1
    %v1026 = vmul.f32 %v889, -0.1
    %v1027 = vmul.f32 %v891, -0.1
    %v1028 = vmul.f32 %v893, -0.1
    %v1029 = vmul.f32 %v895, -0.1
    %v1030 = vmul.f32 %v897, -0.1
    %v1031 = vmul.f32 %v899, -0.1
    %v1032 = vmul.f32 %v901, -0.1
    %v1033 = vmul.f32 %v903, -0.1
    %v1034 = vmul.f32 %v905, -0.1
    %v1035 = vmul.f32 %v907, -0.1
    %v1036 = vmul.f32 %v908, %v21
    %v1037 = vmul.f32 %v909, %v22
    %v1038 = vmul.f32 %v910, %v23
    %v1039 = vmul.f32 %v911, %v24
    %v1040 = vmul.f32 %v912, %v25
    %v1041 = vmul.f32 %v913, %v26
    %v1042 = vmul.f32 %v914, %v27
    %v1043 = vmul.f32 %v915, %v28
    %v1044 = vmul.f32 %v916, %v29
    %v1045 = vmul.f32 %v917, %v30
    %v1046 = vmul.f32 %v918, %v31
    %v1047 = vmul.f32 %v919, %v32
    %v1048 = vmul.f32 %v920, %v33
    %v1049 = vmul.f32 %v921, %v34
    %v1050 = vmul.f32 %v922, %v35
    %v1051 = vmul.f32 %v923, %v36
    %v1052 = vmul.f32 %v924, %v37
    %v1053 = vmul.f32 %v925, %v38
    %v1054 = vmul.f32 %v926, %v39
    %v1055 = vmul.f32 %v927, %v40
    %v1056 = vmul.f32 %v928, %v41
    %v1057 = vmul.f32 %v929, %v42
    %v1058 = vmul.f32 %v930, %v43
    %v1059 = vmul.f32 %v931, %v44
    %v1060 = vmul.f32 %v932, %v45
    %v1061 = vmul.f32 %v933, %v46
    %v1062 = vmul.f32 %v934, %v47
    %v1063 = vmul.f32 %v935, %v48
    %v1064 = vmul.f32 %v936, %v49
    %v1065 = vmul.f32 %v937, %v50
    %v1066 = vmul.f32 %v938, %v51
    %v1067 = vmul.f32 %v939, %v52
    %v1068 = vmul.f32 %v940, %v53
    %v1069 = vmul.f32 %v941, %v54
    %v1070 = vmul.f32 %v942, %v55
    %v1071 = vmul.f32 %v943, %v56
    %v1072 = vmul.f32 %v944, %v57
    %v1073 = vmul.f32 %v945, %v58
    %v1074 = vmul.f32 %v946, %v59
    %v1075 = vmul.f32 %v947, %v60
    %v1076 = vmul.f32 %v948, %v61
    %v1077 = vmul.f32 %v949, %v62
    %v1078 = vmul.f32 %v950, %v63
    %v1079 = vmul.f32 %v951, %v64
    %v1080 = vmul.f32 %v952, %v65
    %v1081 = vmul.f32 %v953, %v66
    %v1082 = vmul.f32 %v954, %v67
    %v1083 = vmul.f32 %v955, %v68
    %v1084 = vmul.f32 %v956, %v69
    %v1085 = vmul.f32 %v957, %v70
    %v1086 = vmul.f32 %v958, %v71
    %v1087 = vmul.f32 %v959, %v72
    %v1088 = vmul.f32 %v960, %v73
    %v1089 = vmul.f32 %v961, %v74
    %v1090 = vmul.f32 %v962, %v75
    %v1091 = vmul.f32 %v963, %v76
    %v1092 = vmul.f32 %v964, %v77
    %v1093 = vmul.f32 %v965, %v78
    %v1094 = vmul.f32 %v966, %v79
    %v1095 = vmul.f32 %v967, %v80
    %v1096 = vmul.f32 %v968, %v81
    %v1097 = vmul.f32 %v969, %v82
    %v1098 = vmul.f32 %v970, %v83
    %v1099 = vmul.f32 %v971, %v84
    %v1100 = vmul.f32 %v972, %v85
    %v1101 = vmul.f32 %v973, %v86
    %v1102 = vmul.f32 %v974, %v87
    %v1103 = vmul.f32 %v975, %v88
    %v1104 = vmul.f32 %v976, %v89
    %v1105 = vmul.f32 %v977, %v90
    %v1106 = vmul.f32 %v978, %v91
    %v1107 = vmul.f32 %v979, %v92
    %v1108 = vmul.f32 %v980, %v93
    %v1109 = vmul.f32 %v981, %v94
    %v1110 = vmul.f32 %v982, %v95
    %v1111 = vmul.f32 %v983, %v96
    %v1112 = vmul.f32 %v984, %v97
    %v1113 = vmul.f32 %v985, %v98
    %v1114 = vmul.f32 %v986, %v99
    %v1115 = vmul.f32 %v987, %v100
    %v1116 = vmul.f32 %v988, %v101
    %v1117 = vmul.f32 %v989, %v102
    %v1118 = vmul.f32 %v990, %v103
    %v1119 = vmul.f32 %v991, %v104
    %v1120 = vmul.f32 %v992, %v105
    %v1121 = vmul.f32 %v993, %v106
    %v1122 = vmul.f32 %v994, %v107
    %v1123 = vmul.f32 %v995, %v108
    %v1124 = vmul.f32 %v996, %v109
    %v1125 = vmul.f32 %v997, %v110
    %v1126 = vmul.f32 %v998, %v111
    %v1127 = vmul.f32 %v999, %v112
    %v1128 = vmul.f32 %v1000, %v113
    %v1129 = vmul.f32 %v1001, %v114
    %v1130 = vmul.f32 %v1002, %v115
    %v1131 = vmul.f32 %v1003, %v116
    %v1132 = vmul.f32 %v1004, %v117
    %v1133 = vmul.f32 %v1005, %v118
    %v1134 = vmul.f32 %v1006, %v119
    %v1135 = vmul.f32 %v1007, %v120
    %v1136 = vmul.f32 %v1008, %v121
    %v1137 = vmul.f32 %v1009, %v122
    %v1138 = vmul.f32 %v1010, %v123
    %v1139 = vmul.f32 %v1011, %v124
    %v1140 = vmul.f32 %v1012, %v125
    %v1141 = vmul.f32 %v1013, %v126
    %v1142 = vmul.f32 %v1014, %v127
    %v1143 = vmul.f32 %v1015, %v128
    %v1144 = vmul.f32 %v1016, %v129
    %v1145 = vmul.f32 %v1017, %v130
    %v1146 = vmul.f32 %v1018, %v131
    %v1147 = vmul.f32 %v1019, %v132
    %v1148 = vmul.f32 %v1020, %v133
    %v1149 = vmul.f32 %v1021, %v134
    %v1150 = vmul.f32 %v1022, %v135
    %v1151 = vmul.f32 %v1023, %v136
    %v1152 = vmul.f32 %v1024, %v137
    %v1153 = vmul.f32 %v1025, %v138
    %v1154 = vmul.f32 %v1026, %v139
    %v1155 = vmul.f32 %v1027, %v140
    %v1156 = vmul.f32 %v1028, %v141
    %v1157 = vmul.f32 %v1029, %v142
    %v1158 = vmul.f32 %v1030, %v143
    %v1159 = vmul.f32 %v1031, %v144
    %v1160 = vmul.f32 %v1032, %v145
    %v1161 = vmul.f32 %v1033, %v146
    %v1162 = vmul.f32 %v1034, %v147
    %v1163 = vmul.f32 %v1035, %v148
    %v1164 = vadd.f32 %v1036, %v1037
    %v1165 = vadd.f32 %v1164, %v1038
    %v1166 = vadd.f32 %v1165, %v1039
    %1167 = vadd.xlane.f32.xlu0 %v1166
    %v1168 = vpop.xlane.xlu0 %1167
    %v1169 = vadd.f32 %v1040, %v1041
    %v1170 = vadd.f32 %v1169, %v1042
    %v1171 = vadd.f32 %v1170, %v1043
    %1172 = vadd.xlane.f32.xlu0 %v1171
    %v1173 = vpop.xlane.xlu0 %1172
    %v1174 = vadd.f32 %v1044, %v1045
    %v1175 = vadd.f32 %v1174, %v1046
    %v1176 = vadd.f32 %v1175, %v1047
    %1177 = vadd.xlane.f32.xlu0 %v1176
    %v1178 = vpop.xlane.xlu0 %1177
    %v1179 = vadd.f32 %v1048, %v1049
    %v1180 = vadd.f32 %v1179, %v1050
    %v1181 = vadd.f32 %v1180, %v1051
    %1182 = vadd.xlane.f32.xlu0 %v1181
    %v1183 = vpop.xlane.xlu0 %1182
    %v1184 = vadd.f32 %v1052, %v1053
    %v1185 = vadd.f32 %v1184, %v1054
    %v1186 = vadd.f32 %v1185, %v1055
    %1187 = vadd.xlane.f32.xlu0 %v1186
    %v1188 = vpop.xlane.xlu0 %1187
    %v1189 = vadd.f32 %v1056, %v1057
    %v1190 = vadd.f32 %v1189, %v1058
    %v1191 = vadd.f32 %v1190, %v1059
    %1192 = vadd.xlane.f32.xlu0 %v1191
    %v1193 = vpop.xlane.xlu0 %1192
    %v1194 = vadd.f32 %v1060, %v1061
    %v1195 = vadd.f32 %v1194, %v1062
    %v1196 = vadd.f32 %v1195, %v1063
    %1197 = vadd.xlane.f32.xlu0 %v1196
    %v1198 = vpop.xlane.xlu0 %1197
    %v1199 = vadd.f32 %v1064, %v1065
    %v1200 = vadd.f32 %v1199, %v1066
    %v1201 = vadd.f32 %v1200, %v1067
    %1202 = vadd.xlane.f32.xlu0 %v1201
    %v1203 = vpop.xlane.xlu0 %1202
    %v1204 = vadd.f32 %v1068, %v1069
    %v1205 = vadd.f32 %v1204, %v1070
    %v1206 = vadd.f32 %v1205, %v1071
    %1207 = vadd.xlane.f32.xlu0 %v1206
    %v1208 = vpop.xlane.xlu0 %1207
    %v1209 = vadd.f32 %v1072, %v1073
    %v1210 = vadd.f32 %v1209, %v1074
    %v1211 = vadd.f32 %v1210, %v1075
    %1212 = vadd.xlane.f32.xlu0 %v1211
    %v1213 = vpop.xlane.xlu0 %1212
    %v1214 = vadd.f32 %v1076, %v1077
    %v1215 = vadd.f32 %v1214, %v1078
    %v1216 = vadd.f32 %v1215, %v1079
    %1217 = vadd.xlane.f32.xlu0 %v1216
    %v1218 = vpop.xlane.xlu0 %1217
    %v1219 = vadd.f32 %v1080, %v1081
    %v1220 = vadd.f32 %v1219, %v1082
    %v1221 = vadd.f32 %v1220, %v1083
    %1222 = vadd.xlane.f32.xlu0 %v1221
    %v1223 = vpop.xlane.xlu0 %1222
    %v1224 = vadd.f32 %v1084, %v1085
    %v1225 = vadd.f32 %v1224, %v1086
    %v1226 = vadd.f32 %v1225, %v1087
    %1227 = vadd.xlane.f32.xlu0 %v1226
    %v1228 = vpop.xlane.xlu0 %1227
    %v1229 = vadd.f32 %v1088, %v1089
    %v1230 = vadd.f32 %v1229, %v1090
    %v1231 = vadd.f32 %v1230, %v1091
    %1232 = vadd.xlane.f32.xlu0 %v1231
    %v1233 = vpop.xlane.xlu0 %1232
    %v1234 = vadd.f32 %v1092, %v1093
    %v1235 = vadd.f32 %v1234, %v1094
    %v1236 = vadd.f32 %v1235, %v1095
    %1237 = vadd.xlane.f32.xlu0 %v1236
    %v1238 = vpop.xlane.xlu0 %1237
    %v1239 = vadd.f32 %v1096, %v1097
    %v1240 = vadd.f32 %v1239, %v1098
    %v1241 = vadd.f32 %v1240, %v1099
    %1242 = vadd.xlane.f32.xlu0 %v1241
    %v1243 = vpop.xlane.xlu0 %1242
    %v1244 = vadd.f32 %v1100, %v1101
    %v1245 = vadd.f32 %v1244, %v1102
    %v1246 = vadd.f32 %v1245, %v1103
    %1247 = vadd.xlane.f32.xlu0 %v1246
    %v1248 = vpop.xlane.xlu0 %1247
    %v1249 = vadd.f32 %v1104, %v1105
    %v1250 = vadd.f32 %v1249, %v1106
    %v1251 = vadd.f32 %v1250, %v1107
    %1252 = vadd.xlane.f32.xlu0 %v1251
    %v1253 = vpop.xlane.xlu0 %1252
    %v1254 = vadd.f32 %v1108, %v1109
    %v1255 = vadd.f32 %v1254, %v1110
    %v1256 = vadd.f32 %v1255, %v1111
    %1257 = vadd.xlane.f32.xlu0 %v1256
    %v1258 = vpop.xlane.xlu0 %1257
    %v1259 = vadd.f32 %v1112, %v1113
    %v1260 = vadd.f32 %v1259, %v1114
    %v1261 = vadd.f32 %v1260, %v1115
    %1262 = vadd.xlane.f32.xlu0 %v1261
    %v1263 = vpop.xlane.xlu0 %1262
    %v1264 = vadd.f32 %v1116, %v1117
    %v1265 = vadd.f32 %v1264, %v1118
    %v1266 = vadd.f32 %v1265, %v1119
    %1267 = vadd.xlane.f32.xlu0 %v1266
    %v1268 = vpop.xlane.xlu0 %1267
    %v1269 = vadd.f32 %v1120, %v1121
    %v1270 = vadd.f32 %v1269, %v1122
    %v1271 = vadd.f32 %v1270, %v1123
    %1272 = vadd.xlane.f32.xlu0 %v1271
    %v1273 = vpop.xlane.xlu0 %1272
    %v1274 = vadd.f32 %v1124, %v1125
    %v1275 = vadd.f32 %v1274, %v1126
    %v1276 = vadd.f32 %v1275, %v1127
    %1277 = vadd.xlane.f32.xlu0 %v1276
    %v1278 = vpop.xlane.xlu0 %1277
    %v1279 = vadd.f32 %v1128, %v1129
    %v1280 = vadd.f32 %v1279, %v1130
    %v1281 = vadd.f32 %v1280, %v1131
    %1282 = vadd.xlane.f32.xlu0 %v1281
    %v1283 = vpop.xlane.xlu0 %1282
    %v1284 = vadd.f32 %v1132, %v1133
    %v1285 = vadd.f32 %v1284, %v1134
    %v1286 = vadd.f32 %v1285, %v1135
    %1287 = vadd.xlane.f32.xlu0 %v1286
    %v1288 = vpop.xlane.xlu0 %1287
    %v1289 = vadd.f32 %v1136, %v1137
    %v1290 = vadd.f32 %v1289, %v1138
    %v1291 = vadd.f32 %v1290, %v1139
    %1292 = vadd.xlane.f32.xlu0 %v1291
    %v1293 = vpop.xlane.xlu0 %1292
    %v1294 = vadd.f32 %v1140, %v1141
    %v1295 = vadd.f32 %v1294, %v1142
    %v1296 = vadd.f32 %v1295, %v1143
    %1297 = vadd.xlane.f32.xlu0 %v1296
    %v1298 = vpop.xlane.xlu0 %1297
    %v1299 = vadd.f32 %v1144, %v1145
    %v1300 = vadd.f32 %v1299, %v1146
    %v1301 = vadd.f32 %v1300, %v1147
    %1302 = vadd.xlane.f32.xlu0 %v1301
    %v1303 = vpop.xlane.xlu0 %1302
    %v1304 = vadd.f32 %v1148, %v1149
    %v1305 = vadd.f32 %v1304, %v1150
    %v1306 = vadd.f32 %v1305, %v1151
    %1307 = vadd.xlane.f32.xlu0 %v1306
    %v1308 = vpop.xlane.xlu0 %1307
    %v1309 = vadd.f32 %v1152, %v1153
    %v1310 = vadd.f32 %v1309, %v1154
    %v1311 = vadd.f32 %v1310, %v1155
    %1312 = vadd.xlane.f32.xlu0 %v1311
    %v1313 = vpop.xlane.xlu0 %1312
    %v1314 = vadd.f32 %v1156, %v1157
    %v1315 = vadd.f32 %v1314, %v1158
    %v1316 = vadd.f32 %v1315, %v1159
    %1317 = vadd.xlane.f32.xlu0 %v1316
    %v1318 = vpop.xlane.xlu0 %1317
    %v1319 = vadd.f32 %v1160, %v1161
    %v1320 = vadd.f32 %v1319, %v1162
    %v1321 = vadd.f32 %v1320, %v1163
    %1322 = vadd.xlane.f32.xlu0 %v1321
    %v1323 = vpop.xlane.xlu0 %1322
    %v1324 = vld [vmem:[#allocation2] sm:$0x1]
    %v1325 = vadd.f32 %v1168, %v1173
    %v1326 = vadd.f32 %v1325, %v1178
    %v1327 = vadd.f32 %v1326, %v1183
    %v1328 = vadd.f32 %v1327, %v1188
    %v1329 = vadd.f32 %v1328, %v1193
    %v1330 = vadd.f32 %v1329, %v1198
    %v1331 = vadd.f32 %v1330, %v1203
    %v1332 = vadd.f32 %v1331, %v1208
    %v1333 = vadd.f32 %v1332, %v1213
    %v1334 = vadd.f32 %v1333, %v1218
    %v1335 = vadd.f32 %v1334, %v1223
    %v1336 = vadd.f32 %v1335, %v1228
    %v1337 = vadd.f32 %v1336, %v1233
    %v1338 = vadd.f32 %v1337, %v1238
    %v1339 = vadd.f32 %v1338, %v1243
    %v1340 = vadd.f32 %v1339, %v1248
    %v1341 = vadd.f32 %v1340, %v1253
    %v1342 = vadd.f32 %v1341, %v1258
    %v1343 = vadd.f32 %v1342, %v1263
    %v1344 = vadd.f32 %v1343, %v1268
    %v1345 = vadd.f32 %v1344, %v1273
    %v1346 = vadd.f32 %v1345, %v1278
    %v1347 = vadd.f32 %v1346, %v1283
    %v1348 = vadd.f32 %v1347, %v1288
    %v1349 = vadd.f32 %v1348, %v1293
    %v1350 = vadd.f32 %v1349, %v1298
    %v1351 = vadd.f32 %v1350, %v1303
    %v1352 = vadd.f32 %v1351, %v1308
    %v1353 = vadd.f32 %v1352, %v1313
    %v1354 = vadd.f32 %v1353, %v1318
    %v1355 = vadd.f32 %v1354, %v1323
    %v1356 = vrot.slane %v1355, 4
    %v1357 = vadd.f32 %v1355, %v1356
    %v1358 = vrot.slane %v1357, 2
    %v1359 = vadd.f32 %v1357, %v1358
    %v1360 = vrot.slane %v1359, 1
    %v1361 = vadd.f32 %v1359, %v1360
    %v1362 = vadd.f32 %v1324, %v1361
    %vm1363 = vcmask 0
    %1364 = vst.msk [vmem:[#allocation2] sm:$0x1] %vm1363, %v1362
    // Predicated region
    $region18: #{_gwd_item.3} parent=1 // pred_check
      %p1365 = pneg %p15
    $region19: #{_gwd_item.3} parent=1 // pred_check_branch
      %1367 = sbr.rel (%p1365) target = $region21
    $region20: #{_gwd_item.3} parent=1 // pred_region
      %v1368 = vld [vmem:[#allocation2] sm:$0x1]
      %1369 = vst.msk [vmem:[#allocation3] sm:$0x1] %vm1363, %v1368
    $region21: #{_gwd_item.3} parent=1 // pred_fallthru
      _
    // Predicated region
    $region22: #{_gwd_item.3} parent=1 // pred_check
      _
    $region23: #{_gwd_item.3} parent=1 // pred_check_branch
      %1371 = sbr.rel (0) target = $region25
    $region24: #{_gwd_item.3} parent=1 // pred_region
      %s1373 = ssub.s32 16, 16
      %1374 = vsyncadd [#allocation4], %s1373
      %s1376 = sshll.u32 [#allocation3], 4
      %s1377 = int_to_ptr.vmem [resolvable:$true] %s1376
      %1379 = dma.vmem_to_hbm [thread:$0]  %s1377, 16, %s3, [#allocation4]
    $region25: #{_gwd_item.3} parent=1 // pred_fallthru
      _
    // Predicated region
    $region26: #{_gwd_item.3} parent=1 // pred_check
      _
    $region27: #{_gwd_item.3} parent=1 // pred_check_branch
      %1381 = sbr.rel (0) target = $region29
    $region28: #{_gwd_item.3} parent=1 // pred_region
      %1382 = dma.done [#allocation4], 16
    $region29: #{_gwd_item.3} parent=1 // pred_fallthru
      _
    %1383 = vsyncpa [#allocation4], 1

</llo_original>
